<compile_context>
chip_gen: v6e
topology: v6e:2x2x1
jax: 0.10.0
libtpu: 0.0.40
codegen_flags: <defaults>
</compile_context>

<pallas_src>
import jax
import jax.numpy as jnp
from jax.experimental import pallas as pl
from jax.experimental.pallas import tpu as pltpu


def fame_gcn_kernel(a_ref, at_ref, supa_ref, supt_ref, bias_ref, out_ref):
    """One row tile:  out = sum_k A[k] @ (wb2[k]*[S1|0])
                           + sum_k A_t[k] @ (wb[k]*[0|S2]) + [b3|b1].

    Everything runs on the MXU with f32 accumulation; no merged (TM, N)
    temporaries and no per-tile projection work.
    """
    u = jnp.dot(a_ref[0], supa_ref[0], preferred_element_type=jnp.float32)
    for k in range(1, a_ref.shape[0]):
        u = u + jnp.dot(a_ref[k], supa_ref[k],
                        preferred_element_type=jnp.float32)
    for k in range(at_ref.shape[0]):
        u = u + jnp.dot(at_ref[k], supt_ref[k],
                        preferred_element_type=jnp.float32)
    out_ref[...] = (u + bias_ref[...]).astype(out_ref.dtype)   # single dense store


def fame_gcn_forward(feature, A, A_t, weight_b2, weight_b,
                     w_gc3, b_gc3, w_gc1, b_gc1,
                     *, block_rows=None):
    """Fused FAME_GCN forward. Returns (N, 2*nout) = concat([U1, U2], axis=1)."""
    n, f = feature.shape
    nout = w_gc3.shape[1]
    nout2 = 2 * nout
    ka = A.shape[0]
    kt = A_t.shape[0]

    feature = feature.astype(jnp.float32)

    # ---- Tiny wrapper-side prep (hoisted out of the grid body) ----
    s1 = feature @ w_gc3.astype(jnp.float32)                   # (n, nout)
    s2 = feature @ w_gc1.astype(jnp.float32)                   # (n, nout)
    zeros = jnp.zeros_like(s1)
    sup_l = jnp.concatenate([s1, zeros], axis=1)               # [S1 | 0 ]  (n, 2*nout)
    sup_r = jnp.concatenate([zeros, s2], axis=1)               # [0  | S2]  (n, 2*nout)
    # Fold learned merge weights into per-k scaled supports (tiny arrays) so
    # the adjacency merge becomes per-k MXU matmuls inside the kernel.
    sup_a = (weight_b2.reshape(ka, 1, 1).astype(jnp.float32)
             * sup_l[None]).astype(jnp.bfloat16)               # (ka, n, 2*nout)
    sup_t = (weight_b.reshape(kt, 1, 1).astype(jnp.float32)
             * sup_r[None]).astype(jnp.bfloat16)               # (kt, n, 2*nout)
    b_cat = jnp.concatenate([b_gc3.reshape(1, nout),
                             b_gc1.reshape(1, nout)], axis=1).astype(jnp.float32)

    # Stream adjacencies in bf16 (f32 accumulation): ~2x fewer HBM bytes.
    # TODO(synk): store A / A_t in bf16 up front in a real pipeline so this
    # one-time cast is not paid on every forward call.
    A_b = A.astype(jnp.bfloat16)
    A_tb = A_t.astype(jnp.bfloat16)

    # ---- Generation-aware row-tile sizing with full VMEM accounting ----
    try:
        vmem_cap = int(pltpu.get_tpu_info().vmem_capacity_bytes)
    except Exception:  # pragma: no cover - conservative (v7x-sized) fallback
        vmem_cap = 64 << 20

    # tm-independent residents (Pallas double-buffers even constant-index blocks):
    resident = 2 * ((ka + kt) * n * nout2 * 2 + nout2 * 4)
    # tm-dependent bytes per row: double-buffered bf16 adjacency tiles,
    # double-buffered f32 output tile, f32 accumulator temporary.
    per_row = 2 * (ka + kt) * n * 2 + 2 * nout2 * 4 + nout2 * 4

    if n <= 16:
        tm = n                                   # single full-dim block
    elif block_rows is not None:
        tm = min(n, max(16, (block_rows // 16) * 16))
    else:
        budget = int(vmem_cap * 0.7) - resident - (4 << 20)
        tm = max(16, (max(budget, 0) // per_row // 16) * 16)
        # Keep >= 4 row tiles (2 per v7x TensorCore, pipeline overlap) when the
        # graph is big enough; >= 2 tiles otherwise.
        if n >= 64:
            tm = min(tm, max(16, (n // 4) // 16 * 16))
        elif n >= 32:
            tm = min(tm, max(16, (n // 2) // 16 * 16))
        tm = min(tm, n)
    num_tiles = pl.cdiv(n, tm)

    vmem_need = resident + tm * per_row + (4 << 20)            # + runtime margin
    vmem_limit = int(min(vmem_cap - (8 << 20), max(32 << 20, vmem_need)))

    # Advisory cost estimate for XLA's scheduler.
    flops = 2 * (ka + kt) * n * n * nout2
    bytes_acc = ((ka + kt) * n * n * 2                         # bf16 adjacency stream
                 + (ka + kt) * n * nout2 * 2                   # resident supports
                 + n * nout2 * 4 + nout2 * 4)                  # output + bias
    cost = pl.CostEstimate(flops=int(flops), transcendentals=0,
                           bytes_accessed=int(bytes_acc))

    out = pl.pallas_call(
        fame_gcn_kernel,
        out_shape=jax.ShapeDtypeStruct((n, nout2), jnp.float32),
        grid=(num_tiles,),
        in_specs=[
            pl.BlockSpec((ka, tm, n), lambda i: (0, i, 0)),     # A tile   (bf16)
            pl.BlockSpec((kt, tm, n), lambda i: (0, i, 0)),     # A_t tile (bf16)
            pl.BlockSpec((ka, n, nout2), lambda i: (0, 0, 0)),  # wb2[k]*[S1|0] (resident)
            pl.BlockSpec((kt, n, nout2), lambda i: (0, 0, 0)),  # wb[k] *[0|S2] (resident)
            pl.BlockSpec((1, nout2), lambda i: (0, 0)),         # [b3|b1]  (resident)
        ],
        out_specs=pl.BlockSpec((tm, nout2), lambda i: (i, 0)),
        compiler_params=pltpu.CompilerParams(
            dimension_semantics=("parallel",),
            vmem_limit_bytes=vmem_limit,
        ),
        cost_estimate=cost,
    )(A_b, A_tb, sup_a, sup_t, b_cat)
    return out


if __name__ == "__main__":
    # Small shapes consistent with the module: N nodes, nfeat features, out hidden.
    N, NFEAT, NOUT = 256, 16, 8

    key = jax.random.PRNGKey(0)
    keys = jax.random.split(key, 9)

    # Parameters (mimicking the PyTorch init distributions).
    stdv = 1.0 / (NOUT ** 0.5)
    w_gc3 = jax.random.uniform(keys[0], (NFEAT, NOUT), jnp.float32, -stdv, stdv)
    b_gc3 = jax.random.uniform(keys[1], (1, NOUT), jnp.float32, -stdv, stdv)
    w_gc1 = jax.random.uniform(keys[2], (NFEAT, NOUT), jnp.float32, -stdv, stdv)
    b_gc1 = jax.random.uniform(keys[3], (1, NOUT), jnp.float32, -stdv, stdv)
    weight_b = jax.random.uniform(keys[4], (9, 1), jnp.float32, 0.0, 0.1)
    weight_b2 = jax.random.uniform(keys[5], (3, 1), jnp.float32, 0.0, 0.1)

    # Inputs: node features, stack of 3 adjacencies (A), stack of 9 (A_t).
    feature = jax.random.normal(keys[6], (N, NFEAT), jnp.float32)
    A = jax.random.uniform(keys[7], (3, N, N), jnp.float32)
    A_t = jax.random.uniform(keys[8], (9, N, N), jnp.float32)

    # Auto tiling: N=256 -> 4 row tiles (exercises the pipelined, parallel grid).
    out = fame_gcn_forward(feature, A, A_t, weight_b2, weight_b,
                           w_gc3, b_gc3, w_gc1, b_gc1)
    out = jax.block_until_ready(out)

    # Pure-JAX f32 reference (kernel streams bf16 adjacencies -> loose tol).
    final_a = jnp.einsum('k,kij->ij', weight_b2[:, 0], A)
    final_a2 = jnp.einsum('k,kij->ij', weight_b[:, 0], A_t)
    u1_ref = final_a @ (feature @ w_gc3) + b_gc3[0]
    u2_ref = final_a2 @ (feature @ w_gc1) + b_gc1[0]
    ref = jnp.concatenate([u1_ref, u2_ref], axis=1)

    assert out.shape == (N, 2 * NOUT)
    max_err = float(jnp.max(jnp.abs(out - ref)))
    assert jnp.allclose(out, ref, atol=5e-2, rtol=5e-2), max_err

    print("KERNEL_OK")
</pallas_src>

<mosaic_0001>
module attributes {stable_mosaic.version = 11 : i64} {
  func.func @fame_gcn_kernel(%arg0: i32, %arg1: memref<3x64x256xbf16, #tpu.memory_space<vmem>>, %arg2: memref<9x64x256xbf16, #tpu.memory_space<vmem>>, %arg3: memref<3x256x16xbf16, #tpu.memory_space<vmem>>, %arg4: memref<9x256x16xbf16, #tpu.memory_space<vmem>>, %arg5: memref<1x16xf32, #tpu.memory_space<vmem>>, %arg6: memref<64x16xf32, #tpu.memory_space<vmem>>) attributes {dimension_semantics = [#tpu.dimension_semantics<parallel>], iteration_bounds = array<i64: 4>, scalar_prefetch = 0 : i64, scratch_operands = 0 : i64, tpu.core_type = #tpu.core_type<tc>, window_params = [{transform_indices = @transform_0, window_bounds = array<i64: 3, 64, 256>}, {transform_indices = @transform_1, window_bounds = array<i64: 9, 64, 256>}, {pipeline_mode = #tpu.pipeline_mode<synchronous>, transform_indices = @transform_2, window_bounds = array<i64: 3, 256, 16>}, {pipeline_mode = #tpu.pipeline_mode<synchronous>, transform_indices = @transform_3, window_bounds = array<i64: 9, 256, 16>}, {pipeline_mode = #tpu.pipeline_mode<synchronous>, transform_indices = @transform_4, window_bounds = array<i64: 1, 16>}, {transform_indices = @transform_5, window_bounds = array<i64: 64, 16>}]} {
    %c0 = arith.constant 0 : index
    %c0_0 = arith.constant 0 : index
    %c0_1 = arith.constant 0 : index
    %0 = vector.load %arg1[%c0, %c0_0, %c0_1] : memref<3x64x256xbf16, #tpu.memory_space<vmem>>, vector<1x64x256xbf16>
    %1 = vector.shape_cast %0 : vector<1x64x256xbf16> to vector<64x256xbf16>
    %c0_2 = arith.constant 0 : index
    %c0_3 = arith.constant 0 : index
    %c0_4 = arith.constant 0 : index
    %2 = vector.load %arg3[%c0_2, %c0_3, %c0_4] : memref<3x256x16xbf16, #tpu.memory_space<vmem>>, vector<1x256x16xbf16>
    %3 = vector.shape_cast %2 : vector<1x256x16xbf16> to vector<256x16xbf16>
    %cst = arith.constant dense<0.000000e+00> : vector<64x16xf32>
    %4 = tpu.matmul %1, %3, %cst {dimension_numbers = #tpu.dot_dimension_numbers<[1], [0], [0], [1], [0, 0, 1, 1], [], []>} : vector<64x256xbf16>, vector<256x16xbf16>, vector<64x16xf32> -> vector<64x16xf32>
    %c1 = arith.constant 1 : index
    %c0_5 = arith.constant 0 : index
    %c0_6 = arith.constant 0 : index
    %5 = vector.load %arg1[%c1, %c0_5, %c0_6] : memref<3x64x256xbf16, #tpu.memory_space<vmem>>, vector<1x64x256xbf16>
    %6 = vector.shape_cast %5 : vector<1x64x256xbf16> to vector<64x256xbf16>
    %c1_7 = arith.constant 1 : index
    %c0_8 = arith.constant 0 : index
    %c0_9 = arith.constant 0 : index
    %7 = vector.load %arg3[%c1_7, %c0_8, %c0_9] : memref<3x256x16xbf16, #tpu.memory_space<vmem>>, vector<1x256x16xbf16>
    %8 = vector.shape_cast %7 : vector<1x256x16xbf16> to vector<256x16xbf16>
    %cst_10 = arith.constant dense<0.000000e+00> : vector<64x16xf32>
    %9 = tpu.matmul %6, %8, %cst_10 {dimension_numbers = #tpu.dot_dimension_numbers<[1], [0], [0], [1], [0, 0, 1, 1], [], []>} : vector<64x256xbf16>, vector<256x16xbf16>, vector<64x16xf32> -> vector<64x16xf32>
    %10 = arith.addf %4, %9 : vector<64x16xf32>
    %c2 = arith.constant 2 : index
    %c0_11 = arith.constant 0 : index
    %c0_12 = arith.constant 0 : index
    %11 = vector.load %arg1[%c2, %c0_11, %c0_12] : memref<3x64x256xbf16, #tpu.memory_space<vmem>>, vector<1x64x256xbf16>
    %12 = vector.shape_cast %11 : vector<1x64x256xbf16> to vector<64x256xbf16>
    %c2_13 = arith.constant 2 : index
    %c0_14 = arith.constant 0 : index
    %c0_15 = arith.constant 0 : index
    %13 = vector.load %arg3[%c2_13, %c0_14, %c0_15] : memref<3x256x16xbf16, #tpu.memory_space<vmem>>, vector<1x256x16xbf16>
    %14 = vector.shape_cast %13 : vector<1x256x16xbf16> to vector<256x16xbf16>
    %cst_16 = arith.constant dense<0.000000e+00> : vector<64x16xf32>
    %15 = tpu.matmul %12, %14, %cst_16 {dimension_numbers = #tpu.dot_dimension_numbers<[1], [0], [0], [1], [0, 0, 1, 1], [], []>} : vector<64x256xbf16>, vector<256x16xbf16>, vector<64x16xf32> -> vector<64x16xf32>
    %16 = arith.addf %10, %15 : vector<64x16xf32>
    %c0_17 = arith.constant 0 : index
    %c0_18 = arith.constant 0 : index
    %c0_19 = arith.constant 0 : index
    %17 = vector.load %arg2[%c0_17, %c0_18, %c0_19] : memref<9x64x256xbf16, #tpu.memory_space<vmem>>, vector<1x64x256xbf16>
    %18 = vector.shape_cast %17 : vector<1x64x256xbf16> to vector<64x256xbf16>
    %c0_20 = arith.constant 0 : index
    %c0_21 = arith.constant 0 : index
    %c0_22 = arith.constant 0 : index
    %19 = vector.load %arg4[%c0_20, %c0_21, %c0_22] : memref<9x256x16xbf16, #tpu.memory_space<vmem>>, vector<1x256x16xbf16>
    %20 = vector.shape_cast %19 : vector<1x256x16xbf16> to vector<256x16xbf16>
    %cst_23 = arith.constant dense<0.000000e+00> : vector<64x16xf32>
    %21 = tpu.matmul %18, %20, %cst_23 {dimension_numbers = #tpu.dot_dimension_numbers<[1], [0], [0], [1], [0, 0, 1, 1], [], []>} : vector<64x256xbf16>, vector<256x16xbf16>, vector<64x16xf32> -> vector<64x16xf32>
    %22 = arith.addf %16, %21 : vector<64x16xf32>
    %c1_24 = arith.constant 1 : index
    %c0_25 = arith.constant 0 : index
    %c0_26 = arith.constant 0 : index
    %23 = vector.load %arg2[%c1_24, %c0_25, %c0_26] : memref<9x64x256xbf16, #tpu.memory_space<vmem>>, vector<1x64x256xbf16>
    %24 = vector.shape_cast %23 : vector<1x64x256xbf16> to vector<64x256xbf16>
    %c1_27 = arith.constant 1 : index
    %c0_28 = arith.constant 0 : index
    %c0_29 = arith.constant 0 : index
    %25 = vector.load %arg4[%c1_27, %c0_28, %c0_29] : memref<9x256x16xbf16, #tpu.memory_space<vmem>>, vector<1x256x16xbf16>
    %26 = vector.shape_cast %25 : vector<1x256x16xbf16> to vector<256x16xbf16>
    %cst_30 = arith.constant dense<0.000000e+00> : vector<64x16xf32>
    %27 = tpu.matmul %24, %26, %cst_30 {dimension_numbers = #tpu.dot_dimension_numbers<[1], [0], [0], [1], [0, 0, 1, 1], [], []>} : vector<64x256xbf16>, vector<256x16xbf16>, vector<64x16xf32> -> vector<64x16xf32>
    %28 = arith.addf %22, %27 : vector<64x16xf32>
    %c2_31 = arith.constant 2 : index
    %c0_32 = arith.constant 0 : index
    %c0_33 = arith.constant 0 : index
    %29 = vector.load %arg2[%c2_31, %c0_32, %c0_33] : memref<9x64x256xbf16, #tpu.memory_space<vmem>>, vector<1x64x256xbf16>
    %30 = vector.shape_cast %29 : vector<1x64x256xbf16> to vector<64x256xbf16>
    %c2_34 = arith.constant 2 : index
    %c0_35 = arith.constant 0 : index
    %c0_36 = arith.constant 0 : index
    %31 = vector.load %arg4[%c2_34, %c0_35, %c0_36] : memref<9x256x16xbf16, #tpu.memory_space<vmem>>, vector<1x256x16xbf16>
    %32 = vector.shape_cast %31 : vector<1x256x16xbf16> to vector<256x16xbf16>
    %cst_37 = arith.constant dense<0.000000e+00> : vector<64x16xf32>
    %33 = tpu.matmul %30, %32, %cst_37 {dimension_numbers = #tpu.dot_dimension_numbers<[1], [0], [0], [1], [0, 0, 1, 1], [], []>} : vector<64x256xbf16>, vector<256x16xbf16>, vector<64x16xf32> -> vector<64x16xf32>
    %34 = arith.addf %28, %33 : vector<64x16xf32>
    %c3 = arith.constant 3 : index
    %c0_38 = arith.constant 0 : index
    %c0_39 = arith.constant 0 : index
    %35 = vector.load %arg2[%c3, %c0_38, %c0_39] : memref<9x64x256xbf16, #tpu.memory_space<vmem>>, vector<1x64x256xbf16>
    %36 = vector.shape_cast %35 : vector<1x64x256xbf16> to vector<64x256xbf16>
    %c3_40 = arith.constant 3 : index
    %c0_41 = arith.constant 0 : index
    %c0_42 = arith.constant 0 : index
    %37 = vector.load %arg4[%c3_40, %c0_41, %c0_42] : memref<9x256x16xbf16, #tpu.memory_space<vmem>>, vector<1x256x16xbf16>
    %38 = vector.shape_cast %37 : vector<1x256x16xbf16> to vector<256x16xbf16>
    %cst_43 = arith.constant dense<0.000000e+00> : vector<64x16xf32>
    %39 = tpu.matmul %36, %38, %cst_43 {dimension_numbers = #tpu.dot_dimension_numbers<[1], [0], [0], [1], [0, 0, 1, 1], [], []>} : vector<64x256xbf16>, vector<256x16xbf16>, vector<64x16xf32> -> vector<64x16xf32>
    %40 = arith.addf %34, %39 : vector<64x16xf32>
    %c4 = arith.constant 4 : index
    %c0_44 = arith.constant 0 : index
    %c0_45 = arith.constant 0 : index
    %41 = vector.load %arg2[%c4, %c0_44, %c0_45] : memref<9x64x256xbf16, #tpu.memory_space<vmem>>, vector<1x64x256xbf16>
    %42 = vector.shape_cast %41 : vector<1x64x256xbf16> to vector<64x256xbf16>
    %c4_46 = arith.constant 4 : index
    %c0_47 = arith.constant 0 : index
    %c0_48 = arith.constant 0 : index
    %43 = vector.load %arg4[%c4_46, %c0_47, %c0_48] : memref<9x256x16xbf16, #tpu.memory_space<vmem>>, vector<1x256x16xbf16>
    %44 = vector.shape_cast %43 : vector<1x256x16xbf16> to vector<256x16xbf16>
    %cst_49 = arith.constant dense<0.000000e+00> : vector<64x16xf32>
    %45 = tpu.matmul %42, %44, %cst_49 {dimension_numbers = #tpu.dot_dimension_numbers<[1], [0], [0], [1], [0, 0, 1, 1], [], []>} : vector<64x256xbf16>, vector<256x16xbf16>, vector<64x16xf32> -> vector<64x16xf32>
    %46 = arith.addf %40, %45 : vector<64x16xf32>
    %c5 = arith.constant 5 : index
    %c0_50 = arith.constant 0 : index
    %c0_51 = arith.constant 0 : index
    %47 = vector.load %arg2[%c5, %c0_50, %c0_51] : memref<9x64x256xbf16, #tpu.memory_space<vmem>>, vector<1x64x256xbf16>
    %48 = vector.shape_cast %47 : vector<1x64x256xbf16> to vector<64x256xbf16>
    %c5_52 = arith.constant 5 : index
    %c0_53 = arith.constant 0 : index
    %c0_54 = arith.constant 0 : index
    %49 = vector.load %arg4[%c5_52, %c0_53, %c0_54] : memref<9x256x16xbf16, #tpu.memory_space<vmem>>, vector<1x256x16xbf16>
    %50 = vector.shape_cast %49 : vector<1x256x16xbf16> to vector<256x16xbf16>
    %cst_55 = arith.constant dense<0.000000e+00> : vector<64x16xf32>
    %51 = tpu.matmul %48, %50, %cst_55 {dimension_numbers = #tpu.dot_dimension_numbers<[1], [0], [0], [1], [0, 0, 1, 1], [], []>} : vector<64x256xbf16>, vector<256x16xbf16>, vector<64x16xf32> -> vector<64x16xf32>
    %52 = arith.addf %46, %51 : vector<64x16xf32>
    %c6 = arith.constant 6 : index
    %c0_56 = arith.constant 0 : index
    %c0_57 = arith.constant 0 : index
    %53 = vector.load %arg2[%c6, %c0_56, %c0_57] : memref<9x64x256xbf16, #tpu.memory_space<vmem>>, vector<1x64x256xbf16>
    %54 = vector.shape_cast %53 : vector<1x64x256xbf16> to vector<64x256xbf16>
    %c6_58 = arith.constant 6 : index
    %c0_59 = arith.constant 0 : index
    %c0_60 = arith.constant 0 : index
    %55 = vector.load %arg4[%c6_58, %c0_59, %c0_60] : memref<9x256x16xbf16, #tpu.memory_space<vmem>>, vector<1x256x16xbf16>
    %56 = vector.shape_cast %55 : vector<1x256x16xbf16> to vector<256x16xbf16>
    %cst_61 = arith.constant dense<0.000000e+00> : vector<64x16xf32>
    %57 = tpu.matmul %54, %56, %cst_61 {dimension_numbers = #tpu.dot_dimension_numbers<[1], [0], [0], [1], [0, 0, 1, 1], [], []>} : vector<64x256xbf16>, vector<256x16xbf16>, vector<64x16xf32> -> vector<64x16xf32>
    %58 = arith.addf %52, %57 : vector<64x16xf32>
    %c7 = arith.constant 7 : index
    %c0_62 = arith.constant 0 : index
    %c0_63 = arith.constant 0 : index
    %59 = vector.load %arg2[%c7, %c0_62, %c0_63] : memref<9x64x256xbf16, #tpu.memory_space<vmem>>, vector<1x64x256xbf16>
    %60 = vector.shape_cast %59 : vector<1x64x256xbf16> to vector<64x256xbf16>
    %c7_64 = arith.constant 7 : index
    %c0_65 = arith.constant 0 : index
    %c0_66 = arith.constant 0 : index
    %61 = vector.load %arg4[%c7_64, %c0_65, %c0_66] : memref<9x256x16xbf16, #tpu.memory_space<vmem>>, vector<1x256x16xbf16>
    %62 = vector.shape_cast %61 : vector<1x256x16xbf16> to vector<256x16xbf16>
    %cst_67 = arith.constant dense<0.000000e+00> : vector<64x16xf32>
    %63 = tpu.matmul %60, %62, %cst_67 {dimension_numbers = #tpu.dot_dimension_numbers<[1], [0], [0], [1], [0, 0, 1, 1], [], []>} : vector<64x256xbf16>, vector<256x16xbf16>, vector<64x16xf32> -> vector<64x16xf32>
    %64 = arith.addf %58, %63 : vector<64x16xf32>
    %c8 = arith.constant 8 : index
    %c0_68 = arith.constant 0 : index
    %c0_69 = arith.constant 0 : index
    %65 = vector.load %arg2[%c8, %c0_68, %c0_69] : memref<9x64x256xbf16, #tpu.memory_space<vmem>>, vector<1x64x256xbf16>
    %66 = vector.shape_cast %65 : vector<1x64x256xbf16> to vector<64x256xbf16>
    %c8_70 = arith.constant 8 : index
    %c0_71 = arith.constant 0 : index
    %c0_72 = arith.constant 0 : index
    %67 = vector.load %arg4[%c8_70, %c0_71, %c0_72] : memref<9x256x16xbf16, #tpu.memory_space<vmem>>, vector<1x256x16xbf16>
    %68 = vector.shape_cast %67 : vector<1x256x16xbf16> to vector<256x16xbf16>
    %cst_73 = arith.constant dense<0.000000e+00> : vector<64x16xf32>
    %69 = tpu.matmul %66, %68, %cst_73 {dimension_numbers = #tpu.dot_dimension_numbers<[1], [0], [0], [1], [0, 0, 1, 1], [], []>} : vector<64x256xbf16>, vector<256x16xbf16>, vector<64x16xf32> -> vector<64x16xf32>
    %70 = arith.addf %64, %69 : vector<64x16xf32>
    %c0_74 = arith.constant 0 : index
    %c0_75 = arith.constant 0 : index
    %71 = vector.load %arg5[%c0_74, %c0_75] : memref<1x16xf32, #tpu.memory_space<vmem>>, vector<1x16xf32>
    %72 = vector.broadcast %71 : vector<1x16xf32> to vector<64x16xf32>
    %73 = arith.addf %70, %72 : vector<64x16xf32>
    %c0_76 = arith.constant 0 : index
    %c0_77 = arith.constant 0 : index
    %74 = vector.load %arg6[%c0_76, %c0_77] : memref<64x16xf32, #tpu.memory_space<vmem>>, vector<64x16xf32>
    tpu.vector_store %arg6[%c0_76, %c0_77], %73 {strides = array<i32>} : memref<64x16xf32, #tpu.memory_space<vmem>>, vector<64x16xf32>,
    return
  }
  func.func @transform_0(%arg0: i32) -> (i32, i32, i32) {
    %c0_i32 = arith.constant 0 : i32
    %c0_i32_0 = arith.constant 0 : i32
    %c0_i32_1 = arith.constant 0 : i32
    return %c0_i32, %arg0, %c0_i32_0 : i32, i32, i32
  }
  func.func @transform_1(%arg0: i32) -> (i32, i32, i32) {
    %c0_i32 = arith.constant 0 : i32
    %c0_i32_0 = arith.constant 0 : i32
    %c0_i32_1 = arith.constant 0 : i32
    return %c0_i32, %arg0, %c0_i32_0 : i32, i32, i32
  }
  func.func @transform_2(%arg0: i32) -> (i32, i32, i32) {
    %c0_i32 = arith.constant 0 : i32
    %c0_i32_0 = arith.constant 0 : i32
    %c0_i32_1 = arith.constant 0 : i32
    %c0_i32_2 = arith.constant 0 : i32
    return %c0_i32, %c0_i32_0, %c0_i32_1 : i32, i32, i32
  }
  func.func @transform_3(%arg0: i32) -> (i32, i32, i32) {
    %c0_i32 = arith.constant 0 : i32
    %c0_i32_0 = arith.constant 0 : i32
    %c0_i32_1 = arith.constant 0 : i32
    %c0_i32_2 = arith.constant 0 : i32
    return %c0_i32, %c0_i32_0, %c0_i32_1 : i32, i32, i32
  }
  func.func @transform_4(%arg0: i32) -> (i32, i32) {
    %c0_i32 = arith.constant 0 : i32
    %c0_i32_0 = arith.constant 0 : i32
    %c0_i32_1 = arith.constant 0 : i32
    return %c0_i32, %c0_i32_0 : i32, i32
  }
  func.func @transform_5(%arg0: i32) -> (i32, i32) {
    %c0_i32 = arith.constant 0 : i32
    %c0_i32_0 = arith.constant 0 : i32
    return %arg0, %c0_i32 : i32, i32
  }
}

</mosaic_0001>

<llo_original>
// kernel: tpu_custom_call.1
$region0: #{tpu_custom_call.1}
  #allocation0 [shape = 'u32[]', space=smem, size = 0x4, offset = 0x4, fixed_abs, tag = 'smem constant byte address 0x4 - core index']
  #allocation1 [shape = 'u32[144,128]{1,0:T(1,128)}', space=vmem, size = 0x12000, scoped, tag = 'internal scratch']
  #allocation7 [shape = 's32[]', space=sflag, size = 0x4, offset = 0, fixed_abs, tag = 'sflag constant byte address 0x0 - dummy sync flag']
  %s0 = inlined_call_operand.vmem [shape: bf16[3,256,256], index: 0, kind: input, shape index: {}]
  %s1 = inlined_call_operand.hbm [shape: bf16[9,256,256], index: 1, kind: input, shape index: {}]
  %s2 = inlined_call_operand.vmem [shape: bf16[3,256,16], index: 2, kind: input, shape index: {}]
  %s3 = inlined_call_operand.vmem [shape: bf16[9,256,16], index: 3, kind: input, shape index: {}]
  %s4 = inlined_call_operand.hbm [shape: f32[1,16], index: 4, kind: input, shape index: {}]
  %s5 = inlined_call_operand.vmem [shape: f32[256,16], index: 5, kind: output, shape index: {}]
  %s6 = sld [smem:[#allocation0]]
  $region99: #{tpu_custom_call.1} parent=0
    _
  %s8 = ssub.s32 1, %s6
  %s9 = scalar_select 0, %s8, %s6
  $region1: #{tpu_custom_call.1} parent=0
    #allocation2 [shape = 'u8[196608]{0}', space=vmem, size = 0x30000, scoped, tag = 'input window, operand 0']
    #allocation3 [shape = 'u8[589824]{0}', space=vmem, size = 0x90000, scoped, tag = 'input window, operand 1']
    #allocation4 [shape = 's32[2]{0}', space=sflag, size = 0x8, scoped, tag = 'scoped memory for tpu_custom_call.1']
    #allocation5 [shape = 'u8[512]{0}', space=vmem, size = 0x400, scoped, tag = 'input window, operand 4, single buffered']
    #allocation6 [shape = 's32[1]{0}', space=sflag, size = 0x4, scoped, tag = 'scoped memory for tpu_custom_call.1']
    %10 = vsyncpa [#allocation4], 0
    %s11 = scalar_lea.sflag [#allocation4], 1
    %12 = vsyncpa %s11, 0
    %13 = vsyncpa [#allocation6], 0
    loop: start=0, step=1, limit=6
    $region2: #{tpu_custom_call.1} parent=1 // loop_pre_header
      _
    $region3: #{tpu_custom_call.1} parent=1 // loop_header
      %s15 = sphi 0, %s19
      %p16 = scmp.ge.s32.totalorder %s15, 6
      %s25 = sphi 0, %s27
      %s28 = sphi 0, %s25
      %s29 = sphi 0, %s28
      %s45 = sphi 0, %s29
      %s51 = sphi 0, %s53
      %s54 = sphi 0, %s51
      %s55 = sphi 0, %s54
      %s71 = sphi 0, %s55
      %s75 = sphi 0, %s75
      %s77 = sphi 0, %s75
      %s78 = sphi 0, %s77
      %s92 = sphi 0, %s78
      %s96 = sphi 0, %s96
      %s98 = sphi 0, %s96
      %s99 = sphi 0, %s98
      %s113 = sphi 0, %s99
      %s117 = sphi 0, %s117
      %s119 = sphi 0, %s117
      %s120 = sphi 0, %s119
      %s134 = sphi 0, %s120
      %s140 = sphi 0, %s142
      %s143 = sphi 0, %s140
      %s144 = sphi 0, %s143
      %s160 = sphi 0, %s144
    $region4: #{tpu_custom_call.1} parent=1 // loop_header_branch
      %18 = sbr.rel (%p16) target = $region8
    $region5: #{tpu_custom_call.1} parent=1 // loop_body
      %s20 = ssub.s32 %s15, 1
      %s21 = ssub.s32 %s15, 2
      %s22 = sadd.s32 %s15, 1
      %s23 = ssub.s32 %s15, %s22
      %p24 = scmp.eq.s32.totalorder %s23, 0
      %s26 = sadd.s32 %s25, 1
      %s27 = scalar_select %p24, %s25, %s26
      %p30 = pneg %p24
      %p31 = scmp.eq.s32.totalorder %s15, 3
      %p32 = por %p30, %p31
      %p33 = scmp.ne.s32.totalorder %s25, %s28
      %p34 = scmp.eq.s32.totalorder %s15, 0
      %p35 = por %p33, %p34
      %p36 = scmp.ne.s32.totalorder %s25, %s28
      %p37 = scmp.eq.s32.totalorder %s20, 3
      %p38 = por %p36, %p37
      %p39 = scmp.ne.s32.totalorder %s28, %s29
      %p40 = scmp.eq.s32.totalorder %s20, 0
      %p41 = por %p39, %p40
      %p42 = scmp.ne.s32.totalorder %s28, %s29
      %p43 = scmp.eq.s32.totalorder %s21, 3
      %p44 = por %p42, %p43
      %p46 = scmp.ne.s32.totalorder %s29, %s45
      %p47 = scmp.eq.s32.totalorder %s21, 0
      %p48 = por %p46, %p47
      %s49 = ssub.s32 %s15, %s22
      %p50 = scmp.eq.s32.totalorder %s49, 0
      %s52 = sadd.s32 %s51, 1
      %s53 = scalar_select %p50, %s51, %s52
      %p56 = pneg %p50
      %p57 = scmp.eq.s32.totalorder %s15, 3
      %p58 = por %p56, %p57
      %p59 = scmp.ne.s32.totalorder %s51, %s54
      %p60 = scmp.eq.s32.totalorder %s15, 0
      %p61 = por %p59, %p60
      %p62 = scmp.ne.s32.totalorder %s51, %s54
      %p63 = scmp.eq.s32.totalorder %s20, 3
      %p64 = por %p62, %p63
      %p65 = scmp.ne.s32.totalorder %s54, %s55
      %p66 = scmp.eq.s32.totalorder %s20, 0
      %p67 = por %p65, %p66
      %p68 = scmp.ne.s32.totalorder %s54, %s55
      %p69 = scmp.eq.s32.totalorder %s21, 3
      %p70 = por %p68, %p69
      %p72 = scmp.ne.s32.totalorder %s55, %s71
      %p73 = scmp.eq.s32.totalorder %s21, 0
      %p74 = por %p72, %p73
      %s76 = sadd.s32 %s75, 1
      %p79 = scmp.eq.s32.totalorder %s15, 3
      %p80 = scmp.ne.s32.totalorder %s75, %s77
      %p81 = scmp.eq.s32.totalorder %s15, 0
      %p82 = por %p80, %p81
      %p83 = scmp.ne.s32.totalorder %s75, %s77
      %p84 = scmp.eq.s32.totalorder %s20, 3
      %p85 = por %p83, %p84
      %p86 = scmp.ne.s32.totalorder %s77, %s78
      %p87 = scmp.eq.s32.totalorder %s20, 0
      %p88 = por %p86, %p87
      %p89 = scmp.ne.s32.totalorder %s77, %s78
      %p90 = scmp.eq.s32.totalorder %s21, 3
      %p91 = por %p89, %p90
      %p93 = scmp.ne.s32.totalorder %s78, %s92
      %p94 = scmp.eq.s32.totalorder %s21, 0
      %p95 = por %p93, %p94
      %s97 = sadd.s32 %s96, 1
      %p100 = scmp.eq.s32.totalorder %s15, 3
      %p101 = scmp.ne.s32.totalorder %s96, %s98
      %p102 = scmp.eq.s32.totalorder %s15, 0
      %p103 = por %p101, %p102
      %p104 = scmp.ne.s32.totalorder %s96, %s98
      %p105 = scmp.eq.s32.totalorder %s20, 3
      %p106 = por %p104, %p105
      %p107 = scmp.ne.s32.totalorder %s98, %s99
      %p108 = scmp.eq.s32.totalorder %s20, 0
      %p109 = por %p107, %p108
      %p110 = scmp.ne.s32.totalorder %s98, %s99
      %p111 = scmp.eq.s32.totalorder %s21, 3
      %p112 = por %p110, %p111
      %p114 = scmp.ne.s32.totalorder %s99, %s113
      %p115 = scmp.eq.s32.totalorder %s21, 0
      %p116 = por %p114, %p115
      %s118 = sadd.s32 %s117, 1
      %p121 = scmp.eq.s32.totalorder %s15, 3
      %p122 = scmp.ne.s32.totalorder %s117, %s119
      %p123 = scmp.eq.s32.totalorder %s15, 0
      %p124 = por %p122, %p123
      %p125 = scmp.ne.s32.totalorder %s117, %s119
      %p126 = scmp.eq.s32.totalorder %s20, 3
      %p127 = por %p125, %p126
      %p128 = scmp.ne.s32.totalorder %s119, %s120
      %p129 = scmp.eq.s32.totalorder %s20, 0
      %p130 = por %p128, %p129
      %p131 = scmp.ne.s32.totalorder %s119, %s120
      %p132 = scmp.eq.s32.totalorder %s21, 3
      %p133 = por %p131, %p132
      %p135 = scmp.ne.s32.totalorder %s120, %s134
      %p136 = scmp.eq.s32.totalorder %s21, 0
      %p137 = por %p135, %p136
      %s138 = ssub.s32 %s15, %s22
      %p139 = scmp.eq.s32.totalorder %s138, 0
      %s141 = sadd.s32 %s140, 1
      %s142 = scalar_select %p139, %s140, %s141
      %p145 = pneg %p139
      %p146 = scmp.eq.s32.totalorder %s15, 3
      %p147 = por %p145, %p146
      %p148 = scmp.ne.s32.totalorder %s140, %s143
      %p149 = scmp.eq.s32.totalorder %s15, 0
      %p150 = por %p148, %p149
      %p151 = scmp.ne.s32.totalorder %s140, %s143
      %p152 = scmp.eq.s32.totalorder %s20, 3
      %p153 = por %p151, %p152
      %p154 = scmp.ne.s32.totalorder %s143, %s144
      %p155 = scmp.eq.s32.totalorder %s20, 0
      %p156 = por %p154, %p155
      %p157 = scmp.ne.s32.totalorder %s143, %s144
      %p158 = scmp.eq.s32.totalorder %s21, 3
      %p159 = por %p157, %p158
      %p161 = scmp.ne.s32.totalorder %s144, %s160
      %p162 = scmp.eq.s32.totalorder %s21, 0
      %p163 = por %p161, %p162
      %p164 = scmp.le.s32.totalorder 1, %s15
      %p165 = scmp.lt.s32.totalorder %s15, 5
      %p166 = pnand %p164, %p165
      %p167 = pneg %p166
      // Predicated region
      $region9: #{tpu_custom_call.1} parent=5 // pred_check
        _
      $region10: #{tpu_custom_call.1} parent=5 // pred_check_branch
        %169 = sbr.rel (%p166) target = $region12
      $region11: #{tpu_custom_call.1} parent=5 // pred_region
        %s170 = ssub.s32 %s15, 1
        // Predicated region
        $region13: #{tpu_custom_call.1} parent=11 // pred_check
          %p171 = pneg %p88
        $region14: #{tpu_custom_call.1} parent=11 // pred_check_branch
          %173 = sbr.rel (%p171) target = $region16
        $region15: #{tpu_custom_call.1} parent=11 // pred_region
          _
        $region16: #{tpu_custom_call.1} parent=11 // pred_fallthru
          _
        // Predicated region
        $region17: #{tpu_custom_call.1} parent=11 // pred_check
          %p174 = pneg %p109
        $region18: #{tpu_custom_call.1} parent=11 // pred_check_branch
          %176 = sbr.rel (%p174) target = $region20
        $region19: #{tpu_custom_call.1} parent=11 // pred_region
          _
        $region20: #{tpu_custom_call.1} parent=11 // pred_fallthru
          _
        // Predicated region
        $region21: #{tpu_custom_call.1} parent=11 // pred_check
          %p177 = pneg %p130
        $region22: #{tpu_custom_call.1} parent=11 // pred_check_branch
          %179 = sbr.rel (%p177) target = $region24
        $region23: #{tpu_custom_call.1} parent=11 // pred_region
          %s181 = ssub.s32 16, 16
          %182 = vsyncadd [#allocation6], %s181
          %s184 = sshll.u32 [#allocation5], 4
          %s185 = int_to_ptr.vmem [resolvable:$true] %s184
          %187 = dma.hbm_to_vmem [thread:$0]  %s4, 16, %s185, [#allocation6]
        $region24: #{tpu_custom_call.1} parent=11 // pred_fallthru
          _
      $region12: #{tpu_custom_call.1} parent=5 // pred_fallthru
        _
      %p188 = scmp.lt.s32.totalorder %s15, 4
      // Predicated region
      $region25: #{tpu_custom_call.1} parent=5 // pred_check
        %p189 = pneg %p188
      $region26: #{tpu_custom_call.1} parent=5 // pred_check_branch
        %191 = sbr.rel (%p189) target = $region28
      $region27: #{tpu_custom_call.1} parent=5 // pred_region
        // Predicated region
        $region29: #{tpu_custom_call.1} parent=27 // pred_check
          %p192 = pneg %p35
        $region30: #{tpu_custom_call.1} parent=27 // pred_check_branch
          %194 = sbr.rel (%p192) target = $region32
        $region31: #{tpu_custom_call.1} parent=27 // pred_region
          %s195 = sand.u32 %s25, 1
          %s196 = sand.u32 %s25, 1
          %s197 = smul.addr %s196, 192
          %s198 = scalar_lea.vmem [#allocation2], %s197
          %s199 = smul.u32 8, %s15
          %s200 = smul.addr %s199, 2
          %s201 = smul.addr %s200, 4
          %s202 = scalar_lea.vmem %s0, %s201
          // Predicated region
          $region33: #{tpu_custom_call.1} parent=31 // pred_check
            _
          $region34: #{tpu_custom_call.1} parent=31 // pred_check_branch
            %204 = sbr.rel (0) target = $region36
          $region35: #{tpu_custom_call.1} parent=31 // pred_region
            // Predicated region
            $region37: #{tpu_custom_call.1} parent=35 // pred_check
              _
            $region38: #{tpu_custom_call.1} parent=35 // pred_check_branch
              %206 = sbr.rel (0) target = $region40
            $region39: #{tpu_custom_call.1} parent=35 // pred_region
              // Predicated region
              $region52: #{tpu_custom_call.1} parent=39 // pred_check
                _
              $region53: #{tpu_custom_call.1} parent=39 // pred_check_branch
                %268 = sbr.rel (0) target = $region55
              $region54: #{tpu_custom_call.1} parent=39 // pred_region
                loop: start=0, step=1, limit=1
                $region56: #{tpu_custom_call.1} parent=54 // loop_pre_header
                  _
                $region57: #{tpu_custom_call.1} parent=54 // loop_header
                  %s270 = sphi 0, %s274
                  %p271 = scmp.ge.s32.totalorder %s270, 1
                  %s275 = sphi %s202, %s202
                  %s276 = sphi %s198, %s198
                $region58: #{tpu_custom_call.1} parent=54 // loop_header_branch
                  %273 = sbr.rel (%p271) target = $region62
                $region59: #{tpu_custom_call.1} parent=54 // loop_body
                  %v277 = vld [vmem:[%s275] sm:$0xff]
                  %278 = vst [vmem:[%s276] sm:$0xff] %v277
                  %v279 = vld [vmem:[%s275 + $0x8] sm:$0xff]
                  %280 = vst [vmem:[%s276 + $0x8] sm:$0xff] %v279
                  %v281 = vld [vmem:[%s275 + $0x10] sm:$0xff]
                  %282 = vst [vmem:[%s276 + $0x10] sm:$0xff] %v281
                  %v283 = vld [vmem:[%s275 + $0x18] sm:$0xff]
                  %284 = vst [vmem:[%s276 + $0x18] sm:$0xff] %v283
                  %v285 = vld [vmem:[%s275 + $0x20] sm:$0xff]
                  %286 = vst [vmem:[%s276 + $0x20] sm:$0xff] %v285
                  %v287 = vld [vmem:[%s275 + $0x28] sm:$0xff]
                  %288 = vst [vmem:[%s276 + $0x28] sm:$0xff] %v287
                  %v289 = vld [vmem:[%s275 + $0x30] sm:$0xff]
                  %290 = vst [vmem:[%s276 + $0x30] sm:$0xff] %v289
                  %v291 = vld [vmem:[%s275 + $0x38] sm:$0xff]
                  %292 = vst [vmem:[%s276 + $0x38] sm:$0xff] %v291
                  %v293 = vld [vmem:[%s275 + $0x100] sm:$0xff]
                  %294 = vst [vmem:[%s276 + $0x40] sm:$0xff] %v293
                  %v295 = vld [vmem:[%s275 + $0x108] sm:$0xff]
                  %296 = vst [vmem:[%s276 + $0x48] sm:$0xff] %v295
                  %v297 = vld [vmem:[%s275 + $0x110] sm:$0xff]
                  %298 = vst [vmem:[%s276 + $0x50] sm:$0xff] %v297
                  %v299 = vld [vmem:[%s275 + $0x118] sm:$0xff]
                  %300 = vst [vmem:[%s276 + $0x58] sm:$0xff] %v299
                  %v301 = vld [vmem:[%s275 + $0x120] sm:$0xff]
                  %302 = vst [vmem:[%s276 + $0x60] sm:$0xff] %v301
                  %v303 = vld [vmem:[%s275 + $0x128] sm:$0xff]
                  %304 = vst [vmem:[%s276 + $0x68] sm:$0xff] %v303
                  %v305 = vld [vmem:[%s275 + $0x130] sm:$0xff]
                  %306 = vst [vmem:[%s276 + $0x70] sm:$0xff] %v305
                  %v307 = vld [vmem:[%s275 + $0x138] sm:$0xff]
                  %308 = vst [vmem:[%s276 + $0x78] sm:$0xff] %v307
                  %v309 = vld [vmem:[%s275 + $0x200] sm:$0xff]
                  %310 = vst [vmem:[%s276 + $0x80] sm:$0xff] %v309
                  %v311 = vld [vmem:[%s275 + $0x208] sm:$0xff]
                  %312 = vst [vmem:[%s276 + $0x88] sm:$0xff] %v311
                  %v313 = vld [vmem:[%s275 + $0x210] sm:$0xff]
                  %314 = vst [vmem:[%s276 + $0x90] sm:$0xff] %v313
                  %v315 = vld [vmem:[%s275 + $0x218] sm:$0xff]
                  %316 = vst [vmem:[%s276 + $0x98] sm:$0xff] %v315
                  %v317 = vld [vmem:[%s275 + $0x220] sm:$0xff]
                  %318 = vst [vmem:[%s276 + $0xa0] sm:$0xff] %v317
                  %v319 = vld [vmem:[%s275 + $0x228] sm:$0xff]
                  %320 = vst [vmem:[%s276 + $0xa8] sm:$0xff] %v319
                  %v321 = vld [vmem:[%s275 + $0x230] sm:$0xff]
                  %322 = vst [vmem:[%s276 + $0xb0] sm:$0xff] %v321
                  %v323 = vld [vmem:[%s275 + $0x238] sm:$0xff]
                  %324 = vst [vmem:[%s276 + $0xb8] sm:$0xff] %v323
                $region60: #{tpu_custom_call.1} parent=54 // loop_footer
                  %s274 = sadd.s32 1, %s270
                $region61: #{tpu_custom_call.1} parent=54 // loop_footer_branch
                  %269 = sbr.rel target = $region57
                $region62: #{tpu_custom_call.1} parent=54 // loop_exit
                  _
              $region55: #{tpu_custom_call.1} parent=39 // pred_fallthru
                _
              // Predicated region
              $region63: #{tpu_custom_call.1} parent=39 // pred_check
                _
              $region64: #{tpu_custom_call.1} parent=39 // pred_check_branch
                %326 = sbr.rel target = $region66
              $region65: #{tpu_custom_call.1} parent=39 // pred_region
                _
              $region66: #{tpu_custom_call.1} parent=39 // pred_fallthru
                _
            $region40: #{tpu_custom_call.1} parent=35 // pred_fallthru
              _
            // Predicated region
            $region41: #{tpu_custom_call.1} parent=35 // pred_check
              _
            $region42: #{tpu_custom_call.1} parent=35 // pred_check_branch
              %208 = sbr.rel target = $region44
            $region43: #{tpu_custom_call.1} parent=35 // pred_region
              %s210 = ssub.s32 256, 1
              loop: start=0, step=1, limit=1
              $region45: #{tpu_custom_call.1} parent=43 // loop_pre_header
                _
              $region46: #{tpu_custom_call.1} parent=43 // loop_header
                %s212 = sphi 0, %s216
                %p213 = scmp.ge.s32.totalorder %s212, 1
                %s217 = sphi %s202, %s202
                %s218 = sphi %s198, %s198
              $region47: #{tpu_custom_call.1} parent=43 // loop_header_branch
                %215 = sbr.rel (%p213) target = $region51
              $region48: #{tpu_custom_call.1} parent=43 // loop_body
                %v219 = vld [vmem:[%s217] sm:%s210]
                %220 = vst [vmem:[%s218] sm:%s210] %v219
                %v221 = vld [vmem:[%s217 + $0x8] sm:%s210]
                %222 = vst [vmem:[%s218 + $0x8] sm:%s210] %v221
                %v223 = vld [vmem:[%s217 + $0x10] sm:%s210]
                %224 = vst [vmem:[%s218 + $0x10] sm:%s210] %v223
                %v225 = vld [vmem:[%s217 + $0x18] sm:%s210]
                %226 = vst [vmem:[%s218 + $0x18] sm:%s210] %v225
                %v227 = vld [vmem:[%s217 + $0x20] sm:%s210]
                %228 = vst [vmem:[%s218 + $0x20] sm:%s210] %v227
                %v229 = vld [vmem:[%s217 + $0x28] sm:%s210]
                %230 = vst [vmem:[%s218 + $0x28] sm:%s210] %v229
                %v231 = vld [vmem:[%s217 + $0x30] sm:%s210]
                %232 = vst [vmem:[%s218 + $0x30] sm:%s210] %v231
                %v233 = vld [vmem:[%s217 + $0x38] sm:%s210]
                %234 = vst [vmem:[%s218 + $0x38] sm:%s210] %v233
                %v235 = vld [vmem:[%s217 + $0x100] sm:%s210]
                %236 = vst [vmem:[%s218 + $0x40] sm:%s210] %v235
                %v237 = vld [vmem:[%s217 + $0x108] sm:%s210]
                %238 = vst [vmem:[%s218 + $0x48] sm:%s210] %v237
                %v239 = vld [vmem:[%s217 + $0x110] sm:%s210]
                %240 = vst [vmem:[%s218 + $0x50] sm:%s210] %v239
                %v241 = vld [vmem:[%s217 + $0x118] sm:%s210]
                %242 = vst [vmem:[%s218 + $0x58] sm:%s210] %v241
                %v243 = vld [vmem:[%s217 + $0x120] sm:%s210]
                %244 = vst [vmem:[%s218 + $0x60] sm:%s210] %v243
                %v245 = vld [vmem:[%s217 + $0x128] sm:%s210]
                %246 = vst [vmem:[%s218 + $0x68] sm:%s210] %v245
                %v247 = vld [vmem:[%s217 + $0x130] sm:%s210]
                %248 = vst [vmem:[%s218 + $0x70] sm:%s210] %v247
                %v249 = vld [vmem:[%s217 + $0x138] sm:%s210]
                %250 = vst [vmem:[%s218 + $0x78] sm:%s210] %v249
                %v251 = vld [vmem:[%s217 + $0x200] sm:%s210]
                %252 = vst [vmem:[%s218 + $0x80] sm:%s210] %v251
                %v253 = vld [vmem:[%s217 + $0x208] sm:%s210]
                %254 = vst [vmem:[%s218 + $0x88] sm:%s210] %v253
                %v255 = vld [vmem:[%s217 + $0x210] sm:%s210]
                %256 = vst [vmem:[%s218 + $0x90] sm:%s210] %v255
                %v257 = vld [vmem:[%s217 + $0x218] sm:%s210]
                %258 = vst [vmem:[%s218 + $0x98] sm:%s210] %v257
                %v259 = vld [vmem:[%s217 + $0x220] sm:%s210]
                %260 = vst [vmem:[%s218 + $0xa0] sm:%s210] %v259
                %v261 = vld [vmem:[%s217 + $0x228] sm:%s210]
                %262 = vst [vmem:[%s218 + $0xa8] sm:%s210] %v261
                %v263 = vld [vmem:[%s217 + $0x230] sm:%s210]
                %264 = vst [vmem:[%s218 + $0xb0] sm:%s210] %v263
                %v265 = vld [vmem:[%s217 + $0x238] sm:%s210]
                %266 = vst [vmem:[%s218 + $0xb8] sm:%s210] %v265
              $region49: #{tpu_custom_call.1} parent=43 // loop_footer
                %s216 = sadd.s32 1, %s212
              $region50: #{tpu_custom_call.1} parent=43 // loop_footer_branch
                %211 = sbr.rel target = $region46
              $region51: #{tpu_custom_call.1} parent=43 // loop_exit
                _
            $region44: #{tpu_custom_call.1} parent=35 // pred_fallthru
              _
          $region36: #{tpu_custom_call.1} parent=31 // pred_fallthru
            _
          %327 = vnop
        $region32: #{tpu_custom_call.1} parent=27 // pred_fallthru
          _
        // Predicated region
        $region67: #{tpu_custom_call.1} parent=27 // pred_check
          %p328 = pneg %p61
        $region68: #{tpu_custom_call.1} parent=27 // pred_check_branch
          %330 = sbr.rel (%p328) target = $region70
        $region69: #{tpu_custom_call.1} parent=27 // pred_region
          #allocation8 [shape = 'u32[6]{0}', space=smem, size = 0x18, scoped, tag = 'DMA stride descriptor']
          %s331 = sand.u32 %s51, 1
          %s332 = scalar_lea.sflag [#allocation4], %s331
          %s333 = sand.u32 %s51, 1
          %s334 = smul.addr %s333, 576
          %s335 = scalar_lea.vmem [#allocation3], %s334
          %s336 = smul.u32 8, %s15
          %s338 = ssub.s32 9216, 9216
          %339 = vsyncadd %s332, %s338
          %s340 = smul.addr %s336, 2
          %s341 = smul.addr %s340, 64
          %s342 = scalar_lea.hbm %s1, %s341
          %s344 = sshll.u32 1, 14
          %s345 = sxor.u32 4294967295, %s344
          %s347 = sld [smem:[#allocation0]]
          %s348 = sadd.s32 2, %s347
          %s350 = sshll.u32 7, 26
          %s351 = sxor.u32 4294967295, %s350
          %s352 = sand.u32 0, %s351
          %s353 = sshll.u32 %s348, 26
          %s354 = sor.u32 %s352, %s353
          %s355 = sshll.u32 %s335, 4
          %s356 = int_to_ptr.vmem [resolvable:$true] %s355
          %362 = sst [smem:[#allocation8]] 4096
          %s363 = scalar_lea.smem [#allocation8], 1
          %364 = sst [smem:[%s363]] 1024
          %s365 = scalar_lea.smem [#allocation8], 2
          %366 = sst [smem:[%s365]] 8
          %s367 = scalar_lea.smem [#allocation8], 3
          %368 = sst [smem:[%s367]] 128
          %s369 = scalar_lea.smem [#allocation8], 4
          %370 = sst [smem:[%s369]] 128
          %s371 = scalar_lea.smem [#allocation8], 5
          %372 = sst [smem:[%s371]] 8
          %374 = dma.general %s342, 9216, %s356, %s332, 131072, [#allocation8], %s354, 0
        $region70: #{tpu_custom_call.1} parent=27 // pred_fallthru
          _
      $region28: #{tpu_custom_call.1} parent=5 // pred_fallthru
        _
      %p375 = scmp.le.s32.totalorder 1, %s15
      %p376 = scmp.lt.s32.totalorder %s15, 5
      %p377 = pnand %p375, %p376
      %p378 = pneg %p377
      // Predicated region
      $region71: #{tpu_custom_call.1} parent=5 // pred_check
        _
      $region72: #{tpu_custom_call.1} parent=5 // pred_check_branch
        %380 = sbr.rel (%p377) target = $region74
      $region73: #{tpu_custom_call.1} parent=5 // pred_region
        %s381 = ssub.s32 %s15, 1
        %s382 = sand.u32 %s28, 1
        %s383 = sand.u32 %s28, 1
        %s384 = smul.addr %s383, 192
        %s385 = scalar_lea.vmem [#allocation2], %s384
        // Predicated region
        $region75: #{tpu_custom_call.1} parent=73 // pred_check
          %p386 = pneg %p41
        $region76: #{tpu_custom_call.1} parent=73 // pred_check_branch
          %388 = sbr.rel (%p386) target = $region78
        $region77: #{tpu_custom_call.1} parent=73 // pred_region
          _
        $region78: #{tpu_custom_call.1} parent=73 // pred_fallthru
          _
        %s389 = sand.u32 %s54, 1
        %s390 = scalar_lea.sflag [#allocation4], %s389
        %s391 = sand.u32 %s54, 1
        %s392 = smul.addr %s391, 576
        %s393 = scalar_lea.vmem [#allocation3], %s392
        // Predicated region
        $region79: #{tpu_custom_call.1} parent=73 // pred_check
          %p394 = pneg %p67
        $region80: #{tpu_custom_call.1} parent=73 // pred_check_branch
          %396 = sbr.rel (%p394) target = $region82
        $region81: #{tpu_custom_call.1} parent=73 // pred_region
          %397 = dma.done %s390, 9216
        $region82: #{tpu_custom_call.1} parent=73 // pred_fallthru
          _
        // Predicated region
        $region83: #{tpu_custom_call.1} parent=73 // pred_check
          %p398 = pneg %p130
        $region84: #{tpu_custom_call.1} parent=73 // pred_check_branch
          %400 = sbr.rel (%p398) target = $region86
        $region85: #{tpu_custom_call.1} parent=73 // pred_region
          %401 = dma.done [#allocation6], 16
        $region86: #{tpu_custom_call.1} parent=73 // pred_fallthru
          _
        %s402 = sand.u32 %s28, 1
        %s403 = sand.u32 %s28, 1
        %s404 = smul.addr %s403, 192
        %s405 = scalar_lea.vmem [#allocation2], %s404
        %p406 = pneg %p41
        %p407 = pneg %p38
        %s408 = sand.u32 %s54, 1
        %s409 = scalar_lea.sflag [#allocation4], %s408
        %s410 = sand.u32 %s54, 1
        %s411 = smul.addr %s410, 576
        %s412 = scalar_lea.vmem [#allocation3], %s411
        %p413 = pneg %p67
        %p414 = pneg %p64
        %p415 = pneg %p88
        %p416 = pneg %p85
        %p417 = pneg %p109
        %p418 = pneg %p106
        %p419 = pneg %p130
        %p420 = pneg %p127
        %p421 = pneg %p156
        %p422 = pneg %p153
        %s423 = smul.u32 8, %s20
        %p424 = scmp.lt.s32.totalorder %s423, 31
        %s425 = scalar_select %p424, %s423, 31
        %s426 = smul.addr %s425, 8
        %s427 = scalar_lea.vmem %s5, %s426
        %s428 = smul.u32 8, %s20
        %s429 = smul.u32 8, %s20
        %s430 = smul.u32 8, %s20
        %p431 = scmp.lt.s32.totalorder %s430, 31
        %s432 = scalar_select %p431, %s430, 31
        %s433 = smul.addr %s432, 8
        %s434 = scalar_lea.vmem %s5, %s433
        %s435 = smul.u32 8, %s20
        %v437 = vld [vmem:[%s385] sm:$0xff]
        %v438 = vld [vmem:[%s385 + $0x8] sm:$0xff]
        %v439 = vld [vmem:[%s385 + $0x10] sm:$0xff]
        %v440 = vld [vmem:[%s385 + $0x18] sm:$0xff]
        %v441 = vld [vmem:[%s385 + $0x20] sm:$0xff]
        %v442 = vld [vmem:[%s385 + $0x28] sm:$0xff]
        %v443 = vld [vmem:[%s385 + $0x30] sm:$0xff]
        %v444 = vld [vmem:[%s385 + $0x38] sm:$0xff]
        %v445 = vld [vmem:[%s2] sm:$0xf]
        %v446 = vld [vmem:[%s2 + $0x4] sm:$0xf]
        %v447 = vld [vmem:[%s2 + $0x8] sm:$0xf]
        %v448 = vld [vmem:[%s2 + $0xc] sm:$0xf]
        %v449 = vld [vmem:[%s2 + $0x10] sm:$0xf]
        %v450 = vld [vmem:[%s2 + $0x14] sm:$0xf]
        %v451 = vld [vmem:[%s2 + $0x18] sm:$0xf]
        %v452 = vld [vmem:[%s2 + $0x1c] sm:$0xf]
        %v453 = vld [vmem:[%s2 + $0x20] sm:$0xf]
        %v454 = vld [vmem:[%s2 + $0x24] sm:$0xf]
        %v455 = vld [vmem:[%s2 + $0x28] sm:$0xf]
        %v456 = vld [vmem:[%s2 + $0x2c] sm:$0xf]
        %v457 = vld [vmem:[%s2 + $0x30] sm:$0xf]
        %v458 = vld [vmem:[%s2 + $0x34] sm:$0xf]
        %v459 = vld [vmem:[%s2 + $0x38] sm:$0xf]
        %v460 = vld [vmem:[%s2 + $0x3c] sm:$0xf]
        %v461 = vld [vmem:[%s2 + $0x40] sm:$0xf]
        %v462 = vld [vmem:[%s2 + $0x44] sm:$0xf]
        %v463 = vld [vmem:[%s2 + $0x48] sm:$0xf]
        %v464 = vld [vmem:[%s2 + $0x4c] sm:$0xf]
        %v465 = vld [vmem:[%s2 + $0x50] sm:$0xf]
        %v466 = vld [vmem:[%s2 + $0x54] sm:$0xf]
        %v467 = vld [vmem:[%s2 + $0x58] sm:$0xf]
        %v468 = vld [vmem:[%s2 + $0x5c] sm:$0xf]
        %v469 = vld [vmem:[%s2 + $0x60] sm:$0xf]
        %v470 = vld [vmem:[%s2 + $0x64] sm:$0xf]
        %v471 = vld [vmem:[%s2 + $0x68] sm:$0xf]
        %v472 = vld [vmem:[%s2 + $0x6c] sm:$0xf]
        %v473 = vld [vmem:[%s2 + $0x70] sm:$0xf]
        %v474 = vld [vmem:[%s2 + $0x74] sm:$0xf]
        %v475 = vld [vmem:[%s2 + $0x78] sm:$0xf]
        %v476 = vld [vmem:[%s2 + $0x7c] sm:$0xf]
        %s477 = scalar_lea.vmem %s385, 64 [#allocation2]
        %v478 = vld [vmem:[%s477] sm:$0xff]
        %v479 = vld [vmem:[%s477 + $0x8] sm:$0xff]
        %v480 = vld [vmem:[%s477 + $0x10] sm:$0xff]
        %v481 = vld [vmem:[%s477 + $0x18] sm:$0xff]
        %v482 = vld [vmem:[%s477 + $0x20] sm:$0xff]
        %v483 = vld [vmem:[%s477 + $0x28] sm:$0xff]
        %v484 = vld [vmem:[%s477 + $0x30] sm:$0xff]
        %v485 = vld [vmem:[%s477 + $0x38] sm:$0xff]
        %s486 = scalar_lea.vmem %s2, 128
        %v487 = vld [vmem:[%s486] sm:$0xf]
        %v488 = vld [vmem:[%s486 + $0x4] sm:$0xf]
        %v489 = vld [vmem:[%s486 + $0x8] sm:$0xf]
        %v490 = vld [vmem:[%s486 + $0xc] sm:$0xf]
        %v491 = vld [vmem:[%s486 + $0x10] sm:$0xf]
        %v492 = vld [vmem:[%s486 + $0x14] sm:$0xf]
        %v493 = vld [vmem:[%s486 + $0x18] sm:$0xf]
        %v494 = vld [vmem:[%s486 + $0x1c] sm:$0xf]
        %v495 = vld [vmem:[%s486 + $0x20] sm:$0xf]
        %v496 = vld [vmem:[%s486 + $0x24] sm:$0xf]
        %v497 = vld [vmem:[%s486 + $0x28] sm:$0xf]
        %v498 = vld [vmem:[%s486 + $0x2c] sm:$0xf]
        %v499 = vld [vmem:[%s486 + $0x30] sm:$0xf]
        %v500 = vld [vmem:[%s486 + $0x34] sm:$0xf]
        %v501 = vld [vmem:[%s486 + $0x38] sm:$0xf]
        %v502 = vld [vmem:[%s486 + $0x3c] sm:$0xf]
        %v503 = vld [vmem:[%s486 + $0x40] sm:$0xf]
        %v504 = vld [vmem:[%s486 + $0x44] sm:$0xf]
        %v505 = vld [vmem:[%s486 + $0x48] sm:$0xf]
        %v506 = vld [vmem:[%s486 + $0x4c] sm:$0xf]
        %v507 = vld [vmem:[%s486 + $0x50] sm:$0xf]
        %v508 = vld [vmem:[%s486 + $0x54] sm:$0xf]
        %v509 = vld [vmem:[%s486 + $0x58] sm:$0xf]
        %v510 = vld [vmem:[%s486 + $0x5c] sm:$0xf]
        %v511 = vld [vmem:[%s486 + $0x60] sm:$0xf]
        %v512 = vld [vmem:[%s486 + $0x64] sm:$0xf]
        %v513 = vld [vmem:[%s486 + $0x68] sm:$0xf]
        %v514 = vld [vmem:[%s486 + $0x6c] sm:$0xf]
        %v515 = vld [vmem:[%s486 + $0x70] sm:$0xf]
        %v516 = vld [vmem:[%s486 + $0x74] sm:$0xf]
        %v517 = vld [vmem:[%s486 + $0x78] sm:$0xf]
        %v518 = vld [vmem:[%s486 + $0x7c] sm:$0xf]
        %v527 = vunpack.c.l.b16 %v478
        %v528 = vunpack.c.h.b16 %v478
        %v529 = vunpack.c.l.b16 %v479
        %v530 = vunpack.c.h.b16 %v479
        %v531 = vunpack.c.l.b16 %v480
        %v532 = vunpack.c.h.b16 %v480
        %v533 = vunpack.c.l.b16 %v481
        %v534 = vunpack.c.h.b16 %v481
        %v535 = vunpack.c.l.b16 %v482
        %v536 = vunpack.c.h.b16 %v482
        %v537 = vunpack.c.l.b16 %v483
        %v538 = vunpack.c.h.b16 %v483
        %v539 = vunpack.c.l.b16 %v484
        %v540 = vunpack.c.h.b16 %v484
        %v541 = vunpack.c.l.b16 %v485
        %v542 = vunpack.c.h.b16 %v485
        %v543 = vpack.c.b16 %v529, %v527
        %v544 = vpack.c.b16 %v530, %v528
        %v545 = vpack.c.b16 %v533, %v531
        %v546 = vpack.c.b16 %v534, %v532
        %v547 = vpack.c.b16 %v537, %v535
        %v548 = vpack.c.b16 %v538, %v536
        %v549 = vpack.c.b16 %v541, %v539
        %v550 = vpack.c.b16 %v542, %v540
        %v591 = vunpack.c.l.b16 %v487
        %v592 = vunpack.c.l.b16 %v488
        %v593 = vunpack.c.l.b16 %v489
        %v594 = vunpack.c.l.b16 %v490
        %v595 = vunpack.c.l.b16 %v491
        %v596 = vunpack.c.l.b16 %v492
        %v597 = vunpack.c.l.b16 %v493
        %v598 = vunpack.c.l.b16 %v494
        %v599 = vunpack.c.l.b16 %v495
        %v600 = vunpack.c.l.b16 %v496
        %v601 = vunpack.c.l.b16 %v497
        %v602 = vunpack.c.l.b16 %v498
        %v603 = vunpack.c.l.b16 %v499
        %v604 = vunpack.c.l.b16 %v500
        %v605 = vunpack.c.l.b16 %v501
        %v606 = vunpack.c.l.b16 %v502
        %v607 = vunpack.c.l.b16 %v503
        %v608 = vunpack.c.l.b16 %v504
        %v609 = vunpack.c.l.b16 %v505
        %v610 = vunpack.c.l.b16 %v506
        %v611 = vunpack.c.l.b16 %v507
        %v612 = vunpack.c.l.b16 %v508
        %v613 = vunpack.c.l.b16 %v509
        %v614 = vunpack.c.l.b16 %v510
        %v615 = vunpack.c.l.b16 %v511
        %v616 = vunpack.c.l.b16 %v512
        %v617 = vunpack.c.l.b16 %v513
        %v618 = vunpack.c.l.b16 %v514
        %v619 = vunpack.c.l.b16 %v515
        %v620 = vunpack.c.l.b16 %v516
        %v621 = vunpack.c.l.b16 %v517
        %v622 = vunpack.c.l.b16 %v518
        %v623 = vpack.c.b16 %v592, %v591
        %v624 = vpack.c.b16 %v594, %v593
        %v625 = vpack.c.b16 %v596, %v595
        %v626 = vpack.c.b16 %v598, %v597
        %v627 = vpack.c.b16 %v600, %v599
        %v628 = vpack.c.b16 %v602, %v601
        %v629 = vpack.c.b16 %v604, %v603
        %v630 = vpack.c.b16 %v606, %v605
        %v631 = vpack.c.b16 %v608, %v607
        %v632 = vpack.c.b16 %v610, %v609
        %v633 = vpack.c.b16 %v612, %v611
        %v634 = vpack.c.b16 %v614, %v613
        %v635 = vpack.c.b16 %v616, %v615
        %v636 = vpack.c.b16 %v618, %v617
        %v637 = vpack.c.b16 %v620, %v619
        %v638 = vpack.c.b16 %v622, %v621
        %655 = vmatprep.subr.bf16.mxu0 0
        %656 = vmatpush1.bf16.msra.mxu0 %v630
        %657 = vmatprep.subr.bf16.mxu0 0
        %658 = vmatpush1.bf16.msra.mxu0 %v629
        %659 = vmatprep.subr.bf16.mxu0 0
        %660 = vmatpush1.bf16.msra.mxu0 %v628
        %661 = vmatprep.subr.bf16.mxu0 0
        %662 = vmatpush1.bf16.msra.mxu0 %v627
        %663 = vmatprep.subr.bf16.mxu0 0
        %664 = vmatpush1.bf16.msra.mxu0 %v626
        %665 = vmatprep.subr.bf16.mxu0 0
        %666 = vmatpush1.bf16.msra.mxu0 %v625
        %667 = vmatprep.subr.bf16.mxu0 0
        %668 = vmatpush1.bf16.msra.mxu0 %v624
        %669 = vmatprep.subr.bf16.mxu0 0
        %670 = vmatpush1.bf16.msra.mxu0 %v623
        %671 = vmatprep.subr.bf16.mxu0 0
        %672 = vmatpush2.bf16.msra.mxu0 %v638
        %673 = vmatprep.subr.bf16.mxu0 0
        %674 = vmatpush2.bf16.msra.mxu0 %v637
        %675 = vmatprep.subr.bf16.mxu0 0
        %676 = vmatpush2.bf16.msra.mxu0 %v636
        %677 = vmatprep.subr.bf16.mxu0 0
        %678 = vmatpush2.bf16.msra.mxu0 %v635
        %679 = vmatprep.subr.bf16.mxu0 0
        %680 = vmatpush2.bf16.msra.mxu0 %v634
        %681 = vmatprep.subr.bf16.mxu0 0
        %682 = vmatpush2.bf16.msra.mxu0 %v633
        %683 = vmatprep.subr.bf16.mxu0 0
        %684 = vmatpush2.bf16.msra.mxu0 %v632
        %685 = vmatprep.subr.bf16.mxu0 0
        %686 = vmatpush2.bf16.msra.mxu0 %v631
        %687 = vmatprep.mubr.bf16.mxu0 %v544
        %688 = vmatmul.mubr.bf16.gmra.mxu0 %v543
        %v689 = vpop.f32.mrf.mxu0
        %v690 = vadd.f32 0.0, %v689
        %v691 = vpop.f32.mrf.mxu0
        %v692 = vpop.f32.mrf.mxu0
        %v693 = vadd.f32 0.0, %v692
        %v694 = vpop.f32.mrf.mxu0
        %695 = vmatprep.mubr.bf16.mxu0 %v546
        %696 = vmatmul.mubr.bf16.gmra.mxu0 %v545
        %v697 = vpop.f32.mrf.mxu0
        %v698 = vadd.f32 0.0, %v697
        %v699 = vpop.f32.mrf.mxu0
        %v700 = vpop.f32.mrf.mxu0
        %v701 = vadd.f32 0.0, %v700
        %v702 = vpop.f32.mrf.mxu0
        %703 = vmatprep.mubr.bf16.mxu0 %v548
        %704 = vmatmul.mubr.bf16.gmra.mxu0 %v547
        %v705 = vpop.f32.mrf.mxu0
        %v706 = vadd.f32 0.0, %v705
        %v707 = vpop.f32.mrf.mxu0
        %v708 = vpop.f32.mrf.mxu0
        %v709 = vadd.f32 0.0, %v708
        %v710 = vpop.f32.mrf.mxu0
        %711 = vmatprep.mubr.bf16.mxu0 %v550
        %712 = vmatmul.mubr.bf16.gmra.mxu0 %v549
        %v713 = vpop.f32.mrf.mxu0
        %v714 = vadd.f32 0.0, %v713
        %v715 = vpop.f32.mrf.mxu0
        %v716 = vpop.f32.mrf.mxu0
        %v717 = vadd.f32 0.0, %v716
        %v718 = vpop.f32.mrf.mxu0
        %719 = vdwg.mxu0
        %v728 = vunpack.c.l.b16 %v437
        %v729 = vunpack.c.h.b16 %v437
        %v730 = vunpack.c.l.b16 %v438
        %v731 = vunpack.c.h.b16 %v438
        %v732 = vunpack.c.l.b16 %v439
        %v733 = vunpack.c.h.b16 %v439
        %v734 = vunpack.c.l.b16 %v440
        %v735 = vunpack.c.h.b16 %v440
        %v736 = vunpack.c.l.b16 %v441
        %v737 = vunpack.c.h.b16 %v441
        %v738 = vunpack.c.l.b16 %v442
        %v739 = vunpack.c.h.b16 %v442
        %v740 = vunpack.c.l.b16 %v443
        %v741 = vunpack.c.h.b16 %v443
        %v742 = vunpack.c.l.b16 %v444
        %v743 = vunpack.c.h.b16 %v444
        %v744 = vpack.c.b16 %v730, %v728
        %v745 = vpack.c.b16 %v731, %v729
        %v746 = vpack.c.b16 %v734, %v732
        %v747 = vpack.c.b16 %v735, %v733
        %v748 = vpack.c.b16 %v738, %v736
        %v749 = vpack.c.b16 %v739, %v737
        %v750 = vpack.c.b16 %v742, %v740
        %v751 = vpack.c.b16 %v743, %v741
        %v792 = vunpack.c.l.b16 %v445
        %v793 = vunpack.c.l.b16 %v446
        %v794 = vunpack.c.l.b16 %v447
        %v795 = vunpack.c.l.b16 %v448
        %v796 = vunpack.c.l.b16 %v449
        %v797 = vunpack.c.l.b16 %v450
        %v798 = vunpack.c.l.b16 %v451
        %v799 = vunpack.c.l.b16 %v452
        %v800 = vunpack.c.l.b16 %v453
        %v801 = vunpack.c.l.b16 %v454
        %v802 = vunpack.c.l.b16 %v455
        %v803 = vunpack.c.l.b16 %v456
        %v804 = vunpack.c.l.b16 %v457
        %v805 = vunpack.c.l.b16 %v458
        %v806 = vunpack.c.l.b16 %v459
        %v807 = vunpack.c.l.b16 %v460
        %v808 = vunpack.c.l.b16 %v461
        %v809 = vunpack.c.l.b16 %v462
        %v810 = vunpack.c.l.b16 %v463
        %v811 = vunpack.c.l.b16 %v464
        %v812 = vunpack.c.l.b16 %v465
        %v813 = vunpack.c.l.b16 %v466
        %v814 = vunpack.c.l.b16 %v467
        %v815 = vunpack.c.l.b16 %v468
        %v816 = vunpack.c.l.b16 %v469
        %v817 = vunpack.c.l.b16 %v470
        %v818 = vunpack.c.l.b16 %v471
        %v819 = vunpack.c.l.b16 %v472
        %v820 = vunpack.c.l.b16 %v473
        %v821 = vunpack.c.l.b16 %v474
        %v822 = vunpack.c.l.b16 %v475
        %v823 = vunpack.c.l.b16 %v476
        %v824 = vpack.c.b16 %v793, %v792
        %v825 = vpack.c.b16 %v795, %v794
        %v826 = vpack.c.b16 %v797, %v796
        %v827 = vpack.c.b16 %v799, %v798
        %v828 = vpack.c.b16 %v801, %v800
        %v829 = vpack.c.b16 %v803, %v802
        %v830 = vpack.c.b16 %v805, %v804
        %v831 = vpack.c.b16 %v807, %v806
        %v832 = vpack.c.b16 %v809, %v808
        %v833 = vpack.c.b16 %v811, %v810
        %v834 = vpack.c.b16 %v813, %v812
        %v835 = vpack.c.b16 %v815, %v814
        %v836 = vpack.c.b16 %v817, %v816
        %v837 = vpack.c.b16 %v819, %v818
        %v838 = vpack.c.b16 %v821, %v820
        %v839 = vpack.c.b16 %v823, %v822
        %856 = vmatprep.subr.bf16.mxu0 0
        %857 = vmatpush1.bf16.msra.mxu0 %v831
        %858 = vmatprep.subr.bf16.mxu0 0
        %859 = vmatpush1.bf16.msra.mxu0 %v830
        %860 = vmatprep.subr.bf16.mxu0 0
        %861 = vmatpush1.bf16.msra.mxu0 %v829
        %862 = vmatprep.subr.bf16.mxu0 0
        %863 = vmatpush1.bf16.msra.mxu0 %v828
        %864 = vmatprep.subr.bf16.mxu0 0
        %865 = vmatpush1.bf16.msra.mxu0 %v827
        %866 = vmatprep.subr.bf16.mxu0 0
        %867 = vmatpush1.bf16.msra.mxu0 %v826
        %868 = vmatprep.subr.bf16.mxu0 0
        %869 = vmatpush1.bf16.msra.mxu0 %v825
        %870 = vmatprep.subr.bf16.mxu0 0
        %871 = vmatpush1.bf16.msra.mxu0 %v824
        %872 = vmatprep.subr.bf16.mxu0 0
        %873 = vmatpush2.bf16.msra.mxu0 %v839
        %874 = vmatprep.subr.bf16.mxu0 0
        %875 = vmatpush2.bf16.msra.mxu0 %v838
        %876 = vmatprep.subr.bf16.mxu0 0
        %877 = vmatpush2.bf16.msra.mxu0 %v837
        %878 = vmatprep.subr.bf16.mxu0 0
        %879 = vmatpush2.bf16.msra.mxu0 %v836
        %880 = vmatprep.subr.bf16.mxu0 0
        %881 = vmatpush2.bf16.msra.mxu0 %v835
        %882 = vmatprep.subr.bf16.mxu0 0
        %883 = vmatpush2.bf16.msra.mxu0 %v834
        %884 = vmatprep.subr.bf16.mxu0 0
        %885 = vmatpush2.bf16.msra.mxu0 %v833
        %886 = vmatprep.subr.bf16.mxu0 0
        %887 = vmatpush2.bf16.msra.mxu0 %v832
        %888 = vmatprep.mubr.bf16.mxu0 %v745
        %889 = vmatmul.mubr.bf16.gmra.mxu0 %v744
        %v890 = vpop.f32.mrf.mxu0
        %v891 = vadd.f32 %v690, %v890
        %v892 = vpop.f32.mrf.mxu0
        %v893 = vpop.f32.mrf.mxu0
        %v894 = vadd.f32 %v693, %v893
        %v895 = vpop.f32.mrf.mxu0
        %896 = vmatprep.mubr.bf16.mxu0 %v747
        %897 = vmatmul.mubr.bf16.gmra.mxu0 %v746
        %v898 = vpop.f32.mrf.mxu0
        %v899 = vadd.f32 %v698, %v898
        %v900 = vpop.f32.mrf.mxu0
        %v901 = vpop.f32.mrf.mxu0
        %v902 = vadd.f32 %v701, %v901
        %v903 = vpop.f32.mrf.mxu0
        %904 = vmatprep.mubr.bf16.mxu0 %v749
        %905 = vmatmul.mubr.bf16.gmra.mxu0 %v748
        %v906 = vpop.f32.mrf.mxu0
        %v907 = vadd.f32 %v706, %v906
        %v908 = vpop.f32.mrf.mxu0
        %v909 = vpop.f32.mrf.mxu0
        %v910 = vadd.f32 %v709, %v909
        %v911 = vpop.f32.mrf.mxu0
        %912 = vmatprep.mubr.bf16.mxu0 %v751
        %913 = vmatmul.mubr.bf16.gmra.mxu0 %v750
        %v914 = vpop.f32.mrf.mxu0
        %v915 = vadd.f32 %v714, %v914
        %v916 = vpop.f32.mrf.mxu0
        %v917 = vpop.f32.mrf.mxu0
        %v918 = vadd.f32 %v717, %v917
        %v919 = vpop.f32.mrf.mxu0
        %920 = vdwg.mxu0
        %s921 = scalar_lea.vmem %s385, 128 [#allocation2]
        %v922 = vld [vmem:[%s921] sm:$0xff]
        %v923 = vld [vmem:[%s921 + $0x8] sm:$0xff]
        %v924 = vld [vmem:[%s921 + $0x10] sm:$0xff]
        %v925 = vld [vmem:[%s921 + $0x18] sm:$0xff]
        %v926 = vld [vmem:[%s921 + $0x20] sm:$0xff]
        %v927 = vld [vmem:[%s921 + $0x28] sm:$0xff]
        %v928 = vld [vmem:[%s921 + $0x30] sm:$0xff]
        %v929 = vld [vmem:[%s921 + $0x38] sm:$0xff]
        %s930 = scalar_lea.vmem %s2, 256
        %v931 = vld [vmem:[%s930] sm:$0xf]
        %v932 = vld [vmem:[%s930 + $0x4] sm:$0xf]
        %v933 = vld [vmem:[%s930 + $0x8] sm:$0xf]
        %v934 = vld [vmem:[%s930 + $0xc] sm:$0xf]
        %v935 = vld [vmem:[%s930 + $0x10] sm:$0xf]
        %v936 = vld [vmem:[%s930 + $0x14] sm:$0xf]
        %v937 = vld [vmem:[%s930 + $0x18] sm:$0xf]
        %v938 = vld [vmem:[%s930 + $0x1c] sm:$0xf]
        %v939 = vld [vmem:[%s930 + $0x20] sm:$0xf]
        %v940 = vld [vmem:[%s930 + $0x24] sm:$0xf]
        %v941 = vld [vmem:[%s930 + $0x28] sm:$0xf]
        %v942 = vld [vmem:[%s930 + $0x2c] sm:$0xf]
        %v943 = vld [vmem:[%s930 + $0x30] sm:$0xf]
        %v944 = vld [vmem:[%s930 + $0x34] sm:$0xf]
        %v945 = vld [vmem:[%s930 + $0x38] sm:$0xf]
        %v946 = vld [vmem:[%s930 + $0x3c] sm:$0xf]
        %v947 = vld [vmem:[%s930 + $0x40] sm:$0xf]
        %v948 = vld [vmem:[%s930 + $0x44] sm:$0xf]
        %v949 = vld [vmem:[%s930 + $0x48] sm:$0xf]
        %v950 = vld [vmem:[%s930 + $0x4c] sm:$0xf]
        %v951 = vld [vmem:[%s930 + $0x50] sm:$0xf]
        %v952 = vld [vmem:[%s930 + $0x54] sm:$0xf]
        %v953 = vld [vmem:[%s930 + $0x58] sm:$0xf]
        %v954 = vld [vmem:[%s930 + $0x5c] sm:$0xf]
        %v955 = vld [vmem:[%s930 + $0x60] sm:$0xf]
        %v956 = vld [vmem:[%s930 + $0x64] sm:$0xf]
        %v957 = vld [vmem:[%s930 + $0x68] sm:$0xf]
        %v958 = vld [vmem:[%s930 + $0x6c] sm:$0xf]
        %v959 = vld [vmem:[%s930 + $0x70] sm:$0xf]
        %v960 = vld [vmem:[%s930 + $0x74] sm:$0xf]
        %v961 = vld [vmem:[%s930 + $0x78] sm:$0xf]
        %v962 = vld [vmem:[%s930 + $0x7c] sm:$0xf]
        %v971 = vunpack.c.l.b16 %v922
        %v972 = vunpack.c.h.b16 %v922
        %v973 = vunpack.c.l.b16 %v923
        %v974 = vunpack.c.h.b16 %v923
        %v975 = vunpack.c.l.b16 %v924
        %v976 = vunpack.c.h.b16 %v924
        %v977 = vunpack.c.l.b16 %v925
        %v978 = vunpack.c.h.b16 %v925
        %v979 = vunpack.c.l.b16 %v926
        %v980 = vunpack.c.h.b16 %v926
        %v981 = vunpack.c.l.b16 %v927
        %v982 = vunpack.c.h.b16 %v927
        %v983 = vunpack.c.l.b16 %v928
        %v984 = vunpack.c.h.b16 %v928
        %v985 = vunpack.c.l.b16 %v929
        %v986 = vunpack.c.h.b16 %v929
        %v987 = vpack.c.b16 %v973, %v971
        %v988 = vpack.c.b16 %v974, %v972
        %v989 = vpack.c.b16 %v977, %v975
        %v990 = vpack.c.b16 %v978, %v976
        %v991 = vpack.c.b16 %v981, %v979
        %v992 = vpack.c.b16 %v982, %v980
        %v993 = vpack.c.b16 %v985, %v983
        %v994 = vpack.c.b16 %v986, %v984
        %v1035 = vunpack.c.l.b16 %v931
        %v1036 = vunpack.c.l.b16 %v932
        %v1037 = vunpack.c.l.b16 %v933
        %v1038 = vunpack.c.l.b16 %v934
        %v1039 = vunpack.c.l.b16 %v935
        %v1040 = vunpack.c.l.b16 %v936
        %v1041 = vunpack.c.l.b16 %v937
        %v1042 = vunpack.c.l.b16 %v938
        %v1043 = vunpack.c.l.b16 %v939
        %v1044 = vunpack.c.l.b16 %v940
        %v1045 = vunpack.c.l.b16 %v941
        %v1046 = vunpack.c.l.b16 %v942
        %v1047 = vunpack.c.l.b16 %v943
        %v1048 = vunpack.c.l.b16 %v944
        %v1049 = vunpack.c.l.b16 %v945
        %v1050 = vunpack.c.l.b16 %v946
        %v1051 = vunpack.c.l.b16 %v947
        %v1052 = vunpack.c.l.b16 %v948
        %v1053 = vunpack.c.l.b16 %v949
        %v1054 = vunpack.c.l.b16 %v950
        %v1055 = vunpack.c.l.b16 %v951
        %v1056 = vunpack.c.l.b16 %v952
        %v1057 = vunpack.c.l.b16 %v953
        %v1058 = vunpack.c.l.b16 %v954
        %v1059 = vunpack.c.l.b16 %v955
        %v1060 = vunpack.c.l.b16 %v956
        %v1061 = vunpack.c.l.b16 %v957
        %v1062 = vunpack.c.l.b16 %v958
        %v1063 = vunpack.c.l.b16 %v959
        %v1064 = vunpack.c.l.b16 %v960
        %v1065 = vunpack.c.l.b16 %v961
        %v1066 = vunpack.c.l.b16 %v962
        %v1067 = vpack.c.b16 %v1036, %v1035
        %v1068 = vpack.c.b16 %v1038, %v1037
        %v1069 = vpack.c.b16 %v1040, %v1039
        %v1070 = vpack.c.b16 %v1042, %v1041
        %v1071 = vpack.c.b16 %v1044, %v1043
        %v1072 = vpack.c.b16 %v1046, %v1045
        %v1073 = vpack.c.b16 %v1048, %v1047
        %v1074 = vpack.c.b16 %v1050, %v1049
        %v1075 = vpack.c.b16 %v1052, %v1051
        %v1076 = vpack.c.b16 %v1054, %v1053
        %v1077 = vpack.c.b16 %v1056, %v1055
        %v1078 = vpack.c.b16 %v1058, %v1057
        %v1079 = vpack.c.b16 %v1060, %v1059
        %v1080 = vpack.c.b16 %v1062, %v1061
        %v1081 = vpack.c.b16 %v1064, %v1063
        %v1082 = vpack.c.b16 %v1066, %v1065
        %1099 = vmatprep.subr.bf16.mxu0 0
        %1100 = vmatpush1.bf16.msra.mxu0 %v1074
        %1101 = vmatprep.subr.bf16.mxu0 0
        %1102 = vmatpush1.bf16.msra.mxu0 %v1073
        %1103 = vmatprep.subr.bf16.mxu0 0
        %1104 = vmatpush1.bf16.msra.mxu0 %v1072
        %1105 = vmatprep.subr.bf16.mxu0 0
        %1106 = vmatpush1.bf16.msra.mxu0 %v1071
        %1107 = vmatprep.subr.bf16.mxu0 0
        %1108 = vmatpush1.bf16.msra.mxu0 %v1070
        %1109 = vmatprep.subr.bf16.mxu0 0
        %1110 = vmatpush1.bf16.msra.mxu0 %v1069
        %1111 = vmatprep.subr.bf16.mxu0 0
        %1112 = vmatpush1.bf16.msra.mxu0 %v1068
        %1113 = vmatprep.subr.bf16.mxu0 0
        %1114 = vmatpush1.bf16.msra.mxu0 %v1067
        %1115 = vmatprep.subr.bf16.mxu0 0
        %1116 = vmatpush2.bf16.msra.mxu0 %v1082
        %1117 = vmatprep.subr.bf16.mxu0 0
        %1118 = vmatpush2.bf16.msra.mxu0 %v1081
        %1119 = vmatprep.subr.bf16.mxu0 0
        %1120 = vmatpush2.bf16.msra.mxu0 %v1080
        %1121 = vmatprep.subr.bf16.mxu0 0
        %1122 = vmatpush2.bf16.msra.mxu0 %v1079
        %1123 = vmatprep.subr.bf16.mxu0 0
        %1124 = vmatpush2.bf16.msra.mxu0 %v1078
        %1125 = vmatprep.subr.bf16.mxu0 0
        %1126 = vmatpush2.bf16.msra.mxu0 %v1077
        %1127 = vmatprep.subr.bf16.mxu0 0
        %1128 = vmatpush2.bf16.msra.mxu0 %v1076
        %1129 = vmatprep.subr.bf16.mxu0 0
        %1130 = vmatpush2.bf16.msra.mxu0 %v1075
        %1131 = vmatprep.mubr.bf16.mxu0 %v988
        %1132 = vmatmul.mubr.bf16.gmra.mxu0 %v987
        %v1133 = vpop.f32.mrf.mxu0
        %v1134 = vadd.f32 0.0, %v1133
        %v1135 = vpop.f32.mrf.mxu0
        %v1136 = vpop.f32.mrf.mxu0
        %v1137 = vadd.f32 0.0, %v1136
        %v1138 = vpop.f32.mrf.mxu0
        %1139 = vmatprep.mubr.bf16.mxu0 %v990
        %1140 = vmatmul.mubr.bf16.gmra.mxu0 %v989
        %v1141 = vpop.f32.mrf.mxu0
        %v1142 = vadd.f32 0.0, %v1141
        %v1143 = vpop.f32.mrf.mxu0
        %v1144 = vpop.f32.mrf.mxu0
        %v1145 = vadd.f32 0.0, %v1144
        %v1146 = vpop.f32.mrf.mxu0
        %1147 = vmatprep.mubr.bf16.mxu0 %v992
        %1148 = vmatmul.mubr.bf16.gmra.mxu0 %v991
        %v1149 = vpop.f32.mrf.mxu0
        %v1150 = vadd.f32 0.0, %v1149
        %v1151 = vpop.f32.mrf.mxu0
        %v1152 = vpop.f32.mrf.mxu0
        %v1153 = vadd.f32 0.0, %v1152
        %v1154 = vpop.f32.mrf.mxu0
        %1155 = vmatprep.mubr.bf16.mxu0 %v994
        %1156 = vmatmul.mubr.bf16.gmra.mxu0 %v993
        %v1157 = vpop.f32.mrf.mxu0
        %v1158 = vadd.f32 0.0, %v1157
        %v1159 = vpop.f32.mrf.mxu0
        %v1160 = vpop.f32.mrf.mxu0
        %v1161 = vadd.f32 0.0, %v1160
        %v1162 = vpop.f32.mrf.mxu0
        %1163 = vdwg.mxu0
        %v1164 = vadd.f32 %v891, %v1134
        %v1165 = vadd.f32 %v894, %v1137
        %v1166 = vadd.f32 %v899, %v1142
        %v1167 = vadd.f32 %v902, %v1145
        %v1168 = vadd.f32 %v907, %v1150
        %v1169 = vadd.f32 %v910, %v1153
        %v1170 = vadd.f32 %v915, %v1158
        %v1171 = vadd.f32 %v918, %v1161
        %v1172 = vld [vmem:[%s393] sm:$0xff]
        %v1173 = vld [vmem:[%s393 + $0x8] sm:$0xff]
        %v1174 = vld [vmem:[%s393 + $0x10] sm:$0xff]
        %v1175 = vld [vmem:[%s393 + $0x18] sm:$0xff]
        %v1176 = vld [vmem:[%s393 + $0x20] sm:$0xff]
        %v1177 = vld [vmem:[%s393 + $0x28] sm:$0xff]
        %v1178 = vld [vmem:[%s393 + $0x30] sm:$0xff]
        %v1179 = vld [vmem:[%s393 + $0x38] sm:$0xff]
        %v1180 = vld [vmem:[%s3] sm:$0xf]
        %v1181 = vld [vmem:[%s3 + $0x4] sm:$0xf]
        %v1182 = vld [vmem:[%s3 + $0x8] sm:$0xf]
        %v1183 = vld [vmem:[%s3 + $0xc] sm:$0xf]
        %v1184 = vld [vmem:[%s3 + $0x10] sm:$0xf]
        %v1185 = vld [vmem:[%s3 + $0x14] sm:$0xf]
        %v1186 = vld [vmem:[%s3 + $0x18] sm:$0xf]
        %v1187 = vld [vmem:[%s3 + $0x1c] sm:$0xf]
        %v1188 = vld [vmem:[%s3 + $0x20] sm:$0xf]
        %v1189 = vld [vmem:[%s3 + $0x24] sm:$0xf]
        %v1190 = vld [vmem:[%s3 + $0x28] sm:$0xf]
        %v1191 = vld [vmem:[%s3 + $0x2c] sm:$0xf]
        %v1192 = vld [vmem:[%s3 + $0x30] sm:$0xf]
        %v1193 = vld [vmem:[%s3 + $0x34] sm:$0xf]
        %v1194 = vld [vmem:[%s3 + $0x38] sm:$0xf]
        %v1195 = vld [vmem:[%s3 + $0x3c] sm:$0xf]
        %v1196 = vld [vmem:[%s3 + $0x40] sm:$0xf]
        %v1197 = vld [vmem:[%s3 + $0x44] sm:$0xf]
        %v1198 = vld [vmem:[%s3 + $0x48] sm:$0xf]
        %v1199 = vld [vmem:[%s3 + $0x4c] sm:$0xf]
        %v1200 = vld [vmem:[%s3 + $0x50] sm:$0xf]
        %v1201 = vld [vmem:[%s3 + $0x54] sm:$0xf]
        %v1202 = vld [vmem:[%s3 + $0x58] sm:$0xf]
        %v1203 = vld [vmem:[%s3 + $0x5c] sm:$0xf]
        %v1204 = vld [vmem:[%s3 + $0x60] sm:$0xf]
        %v1205 = vld [vmem:[%s3 + $0x64] sm:$0xf]
        %v1206 = vld [vmem:[%s3 + $0x68] sm:$0xf]
        %v1207 = vld [vmem:[%s3 + $0x6c] sm:$0xf]
        %v1208 = vld [vmem:[%s3 + $0x70] sm:$0xf]
        %v1209 = vld [vmem:[%s3 + $0x74] sm:$0xf]
        %v1210 = vld [vmem:[%s3 + $0x78] sm:$0xf]
        %v1211 = vld [vmem:[%s3 + $0x7c] sm:$0xf]
        %v1220 = vunpack.c.l.b16 %v1172
        %v1221 = vunpack.c.h.b16 %v1172
        %v1222 = vunpack.c.l.b16 %v1173
        %v1223 = vunpack.c.h.b16 %v1173
        %v1224 = vunpack.c.l.b16 %v1174
        %v1225 = vunpack.c.h.b16 %v1174
        %v1226 = vunpack.c.l.b16 %v1175
        %v1227 = vunpack.c.h.b16 %v1175
        %v1228 = vunpack.c.l.b16 %v1176
        %v1229 = vunpack.c.h.b16 %v1176
        %v1230 = vunpack.c.l.b16 %v1177
        %v1231 = vunpack.c.h.b16 %v1177
        %v1232 = vunpack.c.l.b16 %v1178
        %v1233 = vunpack.c.h.b16 %v1178
        %v1234 = vunpack.c.l.b16 %v1179
        %v1235 = vunpack.c.h.b16 %v1179
        %v1236 = vpack.c.b16 %v1222, %v1220
        %v1237 = vpack.c.b16 %v1223, %v1221
        %v1238 = vpack.c.b16 %v1226, %v1224
        %v1239 = vpack.c.b16 %v1227, %v1225
        %v1240 = vpack.c.b16 %v1230, %v1228
        %v1241 = vpack.c.b16 %v1231, %v1229
        %v1242 = vpack.c.b16 %v1234, %v1232
        %v1243 = vpack.c.b16 %v1235, %v1233
        %v1284 = vunpack.c.l.b16 %v1180
        %v1285 = vunpack.c.l.b16 %v1181
        %v1286 = vunpack.c.l.b16 %v1182
        %v1287 = vunpack.c.l.b16 %v1183
        %v1288 = vunpack.c.l.b16 %v1184
        %v1289 = vunpack.c.l.b16 %v1185
        %v1290 = vunpack.c.l.b16 %v1186
        %v1291 = vunpack.c.l.b16 %v1187
        %v1292 = vunpack.c.l.b16 %v1188
        %v1293 = vunpack.c.l.b16 %v1189
        %v1294 = vunpack.c.l.b16 %v1190
        %v1295 = vunpack.c.l.b16 %v1191
        %v1296 = vunpack.c.l.b16 %v1192
        %v1297 = vunpack.c.l.b16 %v1193
        %v1298 = vunpack.c.l.b16 %v1194
        %v1299 = vunpack.c.l.b16 %v1195
        %v1300 = vunpack.c.l.b16 %v1196
        %v1301 = vunpack.c.l.b16 %v1197
        %v1302 = vunpack.c.l.b16 %v1198
        %v1303 = vunpack.c.l.b16 %v1199
        %v1304 = vunpack.c.l.b16 %v1200
        %v1305 = vunpack.c.l.b16 %v1201
        %v1306 = vunpack.c.l.b16 %v1202
        %v1307 = vunpack.c.l.b16 %v1203
        %v1308 = vunpack.c.l.b16 %v1204
        %v1309 = vunpack.c.l.b16 %v1205
        %v1310 = vunpack.c.l.b16 %v1206
        %v1311 = vunpack.c.l.b16 %v1207
        %v1312 = vunpack.c.l.b16 %v1208
        %v1313 = vunpack.c.l.b16 %v1209
        %v1314 = vunpack.c.l.b16 %v1210
        %v1315 = vunpack.c.l.b16 %v1211
        %v1316 = vpack.c.b16 %v1285, %v1284
        %v1317 = vpack.c.b16 %v1287, %v1286
        %v1318 = vpack.c.b16 %v1289, %v1288
        %v1319 = vpack.c.b16 %v1291, %v1290
        %v1320 = vpack.c.b16 %v1293, %v1292
        %v1321 = vpack.c.b16 %v1295, %v1294
        %v1322 = vpack.c.b16 %v1297, %v1296
        %v1323 = vpack.c.b16 %v1299, %v1298
        %v1324 = vpack.c.b16 %v1301, %v1300
        %v1325 = vpack.c.b16 %v1303, %v1302
        %v1326 = vpack.c.b16 %v1305, %v1304
        %v1327 = vpack.c.b16 %v1307, %v1306
        %v1328 = vpack.c.b16 %v1309, %v1308
        %v1329 = vpack.c.b16 %v1311, %v1310
        %v1330 = vpack.c.b16 %v1313, %v1312
        %v1331 = vpack.c.b16 %v1315, %v1314
        %1348 = vmatprep.subr.bf16.mxu0 0
        %1349 = vmatpush1.bf16.msra.mxu0 %v1323
        %1350 = vmatprep.subr.bf16.mxu0 0
        %1351 = vmatpush1.bf16.msra.mxu0 %v1322
        %1352 = vmatprep.subr.bf16.mxu0 0
        %1353 = vmatpush1.bf16.msra.mxu0 %v1321
        %1354 = vmatprep.subr.bf16.mxu0 0
        %1355 = vmatpush1.bf16.msra.mxu0 %v1320
        %1356 = vmatprep.subr.bf16.mxu0 0
        %1357 = vmatpush1.bf16.msra.mxu0 %v1319
        %1358 = vmatprep.subr.bf16.mxu0 0
        %1359 = vmatpush1.bf16.msra.mxu0 %v1318
        %1360 = vmatprep.subr.bf16.mxu0 0
        %1361 = vmatpush1.bf16.msra.mxu0 %v1317
        %1362 = vmatprep.subr.bf16.mxu0 0
        %1363 = vmatpush1.bf16.msra.mxu0 %v1316
        %1364 = vmatprep.subr.bf16.mxu0 0
        %1365 = vmatpush2.bf16.msra.mxu0 %v1331
        %1366 = vmatprep.subr.bf16.mxu0 0
        %1367 = vmatpush2.bf16.msra.mxu0 %v1330
        %1368 = vmatprep.subr.bf16.mxu0 0
        %1369 = vmatpush2.bf16.msra.mxu0 %v1329
        %1370 = vmatprep.subr.bf16.mxu0 0
        %1371 = vmatpush2.bf16.msra.mxu0 %v1328
        %1372 = vmatprep.subr.bf16.mxu0 0
        %1373 = vmatpush2.bf16.msra.mxu0 %v1327
        %1374 = vmatprep.subr.bf16.mxu0 0
        %1375 = vmatpush2.bf16.msra.mxu0 %v1326
        %1376 = vmatprep.subr.bf16.mxu0 0
        %1377 = vmatpush2.bf16.msra.mxu0 %v1325
        %1378 = vmatprep.subr.bf16.mxu0 0
        %1379 = vmatpush2.bf16.msra.mxu0 %v1324
        %1380 = vmatprep.mubr.bf16.mxu0 %v1237
        %1381 = vmatmul.mubr.bf16.gmra.mxu0 %v1236
        %v1382 = vpop.f32.mrf.mxu0
        %v1383 = vadd.f32 0.0, %v1382
        %v1384 = vpop.f32.mrf.mxu0
        %v1385 = vpop.f32.mrf.mxu0
        %v1386 = vadd.f32 0.0, %v1385
        %v1387 = vpop.f32.mrf.mxu0
        %1388 = vmatprep.mubr.bf16.mxu0 %v1239
        %1389 = vmatmul.mubr.bf16.gmra.mxu0 %v1238
        %v1390 = vpop.f32.mrf.mxu0
        %v1391 = vadd.f32 0.0, %v1390
        %v1392 = vpop.f32.mrf.mxu0
        %v1393 = vpop.f32.mrf.mxu0
        %v1394 = vadd.f32 0.0, %v1393
        %v1395 = vpop.f32.mrf.mxu0
        %1396 = vmatprep.mubr.bf16.mxu0 %v1241
        %1397 = vmatmul.mubr.bf16.gmra.mxu0 %v1240
        %v1398 = vpop.f32.mrf.mxu0
        %v1399 = vadd.f32 0.0, %v1398
        %v1400 = vpop.f32.mrf.mxu0
        %v1401 = vpop.f32.mrf.mxu0
        %v1402 = vadd.f32 0.0, %v1401
        %v1403 = vpop.f32.mrf.mxu0
        %1404 = vmatprep.mubr.bf16.mxu0 %v1243
        %1405 = vmatmul.mubr.bf16.gmra.mxu0 %v1242
        %v1406 = vpop.f32.mrf.mxu0
        %v1407 = vadd.f32 0.0, %v1406
        %v1408 = vpop.f32.mrf.mxu0
        %v1409 = vpop.f32.mrf.mxu0
        %v1410 = vadd.f32 0.0, %v1409
        %v1411 = vpop.f32.mrf.mxu0
        %1412 = vdwg.mxu0
        %v1413 = vadd.f32 %v1164, %v1383
        %v1414 = vadd.f32 %v1165, %v1386
        %v1415 = vadd.f32 %v1166, %v1391
        %v1416 = vadd.f32 %v1167, %v1394
        %v1417 = vadd.f32 %v1168, %v1399
        %v1418 = vadd.f32 %v1169, %v1402
        %v1419 = vadd.f32 %v1170, %v1407
        %v1420 = vadd.f32 %v1171, %v1410
        %s1421 = scalar_lea.vmem %s393, 64 [#allocation3]
        %v1422 = vld [vmem:[%s1421] sm:$0xff]
        %v1423 = vld [vmem:[%s1421 + $0x8] sm:$0xff]
        %v1424 = vld [vmem:[%s1421 + $0x10] sm:$0xff]
        %v1425 = vld [vmem:[%s1421 + $0x18] sm:$0xff]
        %v1426 = vld [vmem:[%s1421 + $0x20] sm:$0xff]
        %v1427 = vld [vmem:[%s1421 + $0x28] sm:$0xff]
        %v1428 = vld [vmem:[%s1421 + $0x30] sm:$0xff]
        %v1429 = vld [vmem:[%s1421 + $0x38] sm:$0xff]
        %s1430 = scalar_lea.vmem %s3, 128
        %v1431 = vld [vmem:[%s1430] sm:$0xf]
        %v1432 = vld [vmem:[%s1430 + $0x4] sm:$0xf]
        %v1433 = vld [vmem:[%s1430 + $0x8] sm:$0xf]
        %v1434 = vld [vmem:[%s1430 + $0xc] sm:$0xf]
        %v1435 = vld [vmem:[%s1430 + $0x10] sm:$0xf]
        %v1436 = vld [vmem:[%s1430 + $0x14] sm:$0xf]
        %v1437 = vld [vmem:[%s1430 + $0x18] sm:$0xf]
        %v1438 = vld [vmem:[%s1430 + $0x1c] sm:$0xf]
        %v1439 = vld [vmem:[%s1430 + $0x20] sm:$0xf]
        %v1440 = vld [vmem:[%s1430 + $0x24] sm:$0xf]
        %v1441 = vld [vmem:[%s1430 + $0x28] sm:$0xf]
        %v1442 = vld [vmem:[%s1430 + $0x2c] sm:$0xf]
        %v1443 = vld [vmem:[%s1430 + $0x30] sm:$0xf]
        %v1444 = vld [vmem:[%s1430 + $0x34] sm:$0xf]
        %v1445 = vld [vmem:[%s1430 + $0x38] sm:$0xf]
        %v1446 = vld [vmem:[%s1430 + $0x3c] sm:$0xf]
        %v1447 = vld [vmem:[%s1430 + $0x40] sm:$0xf]
        %v1448 = vld [vmem:[%s1430 + $0x44] sm:$0xf]
        %v1449 = vld [vmem:[%s1430 + $0x48] sm:$0xf]
        %v1450 = vld [vmem:[%s1430 + $0x4c] sm:$0xf]
        %v1451 = vld [vmem:[%s1430 + $0x50] sm:$0xf]
        %v1452 = vld [vmem:[%s1430 + $0x54] sm:$0xf]
        %v1453 = vld [vmem:[%s1430 + $0x58] sm:$0xf]
        %v1454 = vld [vmem:[%s1430 + $0x5c] sm:$0xf]
        %v1455 = vld [vmem:[%s1430 + $0x60] sm:$0xf]
        %v1456 = vld [vmem:[%s1430 + $0x64] sm:$0xf]
        %v1457 = vld [vmem:[%s1430 + $0x68] sm:$0xf]
        %v1458 = vld [vmem:[%s1430 + $0x6c] sm:$0xf]
        %v1459 = vld [vmem:[%s1430 + $0x70] sm:$0xf]
        %v1460 = vld [vmem:[%s1430 + $0x74] sm:$0xf]
        %v1461 = vld [vmem:[%s1430 + $0x78] sm:$0xf]
        %v1462 = vld [vmem:[%s1430 + $0x7c] sm:$0xf]
        %v1471 = vunpack.c.l.b16 %v1422
        %v1472 = vunpack.c.h.b16 %v1422
        %v1473 = vunpack.c.l.b16 %v1423
        %v1474 = vunpack.c.h.b16 %v1423
        %v1475 = vunpack.c.l.b16 %v1424
        %v1476 = vunpack.c.h.b16 %v1424
        %v1477 = vunpack.c.l.b16 %v1425
        %v1478 = vunpack.c.h.b16 %v1425
        %v1479 = vunpack.c.l.b16 %v1426
        %v1480 = vunpack.c.h.b16 %v1426
        %v1481 = vunpack.c.l.b16 %v1427
        %v1482 = vunpack.c.h.b16 %v1427
        %v1483 = vunpack.c.l.b16 %v1428
        %v1484 = vunpack.c.h.b16 %v1428
        %v1485 = vunpack.c.l.b16 %v1429
        %v1486 = vunpack.c.h.b16 %v1429
        %v1487 = vpack.c.b16 %v1473, %v1471
        %v1488 = vpack.c.b16 %v1474, %v1472
        %v1489 = vpack.c.b16 %v1477, %v1475
        %v1490 = vpack.c.b16 %v1478, %v1476
        %v1491 = vpack.c.b16 %v1481, %v1479
        %v1492 = vpack.c.b16 %v1482, %v1480
        %v1493 = vpack.c.b16 %v1485, %v1483
        %v1494 = vpack.c.b16 %v1486, %v1484
        %v1535 = vunpack.c.l.b16 %v1431
        %v1536 = vunpack.c.l.b16 %v1432
        %v1537 = vunpack.c.l.b16 %v1433
        %v1538 = vunpack.c.l.b16 %v1434
        %v1539 = vunpack.c.l.b16 %v1435
        %v1540 = vunpack.c.l.b16 %v1436
        %v1541 = vunpack.c.l.b16 %v1437
        %v1542 = vunpack.c.l.b16 %v1438
        %v1543 = vunpack.c.l.b16 %v1439
        %v1544 = vunpack.c.l.b16 %v1440
        %v1545 = vunpack.c.l.b16 %v1441
        %v1546 = vunpack.c.l.b16 %v1442
        %v1547 = vunpack.c.l.b16 %v1443
        %v1548 = vunpack.c.l.b16 %v1444
        %v1549 = vunpack.c.l.b16 %v1445
        %v1550 = vunpack.c.l.b16 %v1446
        %v1551 = vunpack.c.l.b16 %v1447
        %v1552 = vunpack.c.l.b16 %v1448
        %v1553 = vunpack.c.l.b16 %v1449
        %v1554 = vunpack.c.l.b16 %v1450
        %v1555 = vunpack.c.l.b16 %v1451
        %v1556 = vunpack.c.l.b16 %v1452
        %v1557 = vunpack.c.l.b16 %v1453
        %v1558 = vunpack.c.l.b16 %v1454
        %v1559 = vunpack.c.l.b16 %v1455
        %v1560 = vunpack.c.l.b16 %v1456
        %v1561 = vunpack.c.l.b16 %v1457
        %v1562 = vunpack.c.l.b16 %v1458
        %v1563 = vunpack.c.l.b16 %v1459
        %v1564 = vunpack.c.l.b16 %v1460
        %v1565 = vunpack.c.l.b16 %v1461
        %v1566 = vunpack.c.l.b16 %v1462
        %v1567 = vpack.c.b16 %v1536, %v1535
        %v1568 = vpack.c.b16 %v1538, %v1537
        %v1569 = vpack.c.b16 %v1540, %v1539
        %v1570 = vpack.c.b16 %v1542, %v1541
        %v1571 = vpack.c.b16 %v1544, %v1543
        %v1572 = vpack.c.b16 %v1546, %v1545
        %v1573 = vpack.c.b16 %v1548, %v1547
        %v1574 = vpack.c.b16 %v1550, %v1549
        %v1575 = vpack.c.b16 %v1552, %v1551
        %v1576 = vpack.c.b16 %v1554, %v1553
        %v1577 = vpack.c.b16 %v1556, %v1555
        %v1578 = vpack.c.b16 %v1558, %v1557
        %v1579 = vpack.c.b16 %v1560, %v1559
        %v1580 = vpack.c.b16 %v1562, %v1561
        %v1581 = vpack.c.b16 %v1564, %v1563
        %v1582 = vpack.c.b16 %v1566, %v1565
        %1599 = vmatprep.subr.bf16.mxu0 0
        %1600 = vmatpush1.bf16.msra.mxu0 %v1574
        %1601 = vmatprep.subr.bf16.mxu0 0
        %1602 = vmatpush1.bf16.msra.mxu0 %v1573
        %1603 = vmatprep.subr.bf16.mxu0 0
        %1604 = vmatpush1.bf16.msra.mxu0 %v1572
        %1605 = vmatprep.subr.bf16.mxu0 0
        %1606 = vmatpush1.bf16.msra.mxu0 %v1571
        %1607 = vmatprep.subr.bf16.mxu0 0
        %1608 = vmatpush1.bf16.msra.mxu0 %v1570
        %1609 = vmatprep.subr.bf16.mxu0 0
        %1610 = vmatpush1.bf16.msra.mxu0 %v1569
        %1611 = vmatprep.subr.bf16.mxu0 0
        %1612 = vmatpush1.bf16.msra.mxu0 %v1568
        %1613 = vmatprep.subr.bf16.mxu0 0
        %1614 = vmatpush1.bf16.msra.mxu0 %v1567
        %1615 = vmatprep.subr.bf16.mxu0 0
        %1616 = vmatpush2.bf16.msra.mxu0 %v1582
        %1617 = vmatprep.subr.bf16.mxu0 0
        %1618 = vmatpush2.bf16.msra.mxu0 %v1581
        %1619 = vmatprep.subr.bf16.mxu0 0
        %1620 = vmatpush2.bf16.msra.mxu0 %v1580
        %1621 = vmatprep.subr.bf16.mxu0 0
        %1622 = vmatpush2.bf16.msra.mxu0 %v1579
        %1623 = vmatprep.subr.bf16.mxu0 0
        %1624 = vmatpush2.bf16.msra.mxu0 %v1578
        %1625 = vmatprep.subr.bf16.mxu0 0
        %1626 = vmatpush2.bf16.msra.mxu0 %v1577
        %1627 = vmatprep.subr.bf16.mxu0 0
        %1628 = vmatpush2.bf16.msra.mxu0 %v1576
        %1629 = vmatprep.subr.bf16.mxu0 0
        %1630 = vmatpush2.bf16.msra.mxu0 %v1575
        %1631 = vmatprep.mubr.bf16.mxu0 %v1488
        %1632 = vmatmul.mubr.bf16.gmra.mxu0 %v1487
        %v1633 = vpop.f32.mrf.mxu0
        %v1634 = vadd.f32 0.0, %v1633
        %v1635 = vpop.f32.mrf.mxu0
        %v1636 = vpop.f32.mrf.mxu0
        %v1637 = vadd.f32 0.0, %v1636
        %v1638 = vpop.f32.mrf.mxu0
        %1639 = vmatprep.mubr.bf16.mxu0 %v1490
        %1640 = vmatmul.mubr.bf16.gmra.mxu0 %v1489
        %v1641 = vpop.f32.mrf.mxu0
        %v1642 = vadd.f32 0.0, %v1641
        %v1643 = vpop.f32.mrf.mxu0
        %v1644 = vpop.f32.mrf.mxu0
        %v1645 = vadd.f32 0.0, %v1644
        %v1646 = vpop.f32.mrf.mxu0
        %1647 = vmatprep.mubr.bf16.mxu0 %v1492
        %1648 = vmatmul.mubr.bf16.gmra.mxu0 %v1491
        %v1649 = vpop.f32.mrf.mxu0
        %v1650 = vadd.f32 0.0, %v1649
        %v1651 = vpop.f32.mrf.mxu0
        %v1652 = vpop.f32.mrf.mxu0
        %v1653 = vadd.f32 0.0, %v1652
        %v1654 = vpop.f32.mrf.mxu0
        %1655 = vmatprep.mubr.bf16.mxu0 %v1494
        %1656 = vmatmul.mubr.bf16.gmra.mxu0 %v1493
        %v1657 = vpop.f32.mrf.mxu0
        %v1658 = vadd.f32 0.0, %v1657
        %v1659 = vpop.f32.mrf.mxu0
        %v1660 = vpop.f32.mrf.mxu0
        %v1661 = vadd.f32 0.0, %v1660
        %v1662 = vpop.f32.mrf.mxu0
        %1663 = vdwg.mxu0
        %v1664 = vadd.f32 %v1413, %v1634
        %v1665 = vadd.f32 %v1414, %v1637
        %v1666 = vadd.f32 %v1415, %v1642
        %v1667 = vadd.f32 %v1416, %v1645
        %v1668 = vadd.f32 %v1417, %v1650
        %v1669 = vadd.f32 %v1418, %v1653
        %v1670 = vadd.f32 %v1419, %v1658
        %v1671 = vadd.f32 %v1420, %v1661
        %s1672 = scalar_lea.vmem %s393, 128 [#allocation3]
        %v1673 = vld [vmem:[%s1672] sm:$0xff]
        %v1674 = vld [vmem:[%s1672 + $0x8] sm:$0xff]
        %v1675 = vld [vmem:[%s1672 + $0x10] sm:$0xff]
        %v1676 = vld [vmem:[%s1672 + $0x18] sm:$0xff]
        %v1677 = vld [vmem:[%s1672 + $0x20] sm:$0xff]
        %v1678 = vld [vmem:[%s1672 + $0x28] sm:$0xff]
        %v1679 = vld [vmem:[%s1672 + $0x30] sm:$0xff]
        %v1680 = vld [vmem:[%s1672 + $0x38] sm:$0xff]
        %s1681 = scalar_lea.vmem %s3, 256
        %v1682 = vld [vmem:[%s1681] sm:$0xf]
        %v1683 = vld [vmem:[%s1681 + $0x4] sm:$0xf]
        %v1684 = vld [vmem:[%s1681 + $0x8] sm:$0xf]
        %v1685 = vld [vmem:[%s1681 + $0xc] sm:$0xf]
        %v1686 = vld [vmem:[%s1681 + $0x10] sm:$0xf]
        %v1687 = vld [vmem:[%s1681 + $0x14] sm:$0xf]
        %v1688 = vld [vmem:[%s1681 + $0x18] sm:$0xf]
        %v1689 = vld [vmem:[%s1681 + $0x1c] sm:$0xf]
        %v1690 = vld [vmem:[%s1681 + $0x20] sm:$0xf]
        %v1691 = vld [vmem:[%s1681 + $0x24] sm:$0xf]
        %v1692 = vld [vmem:[%s1681 + $0x28] sm:$0xf]
        %v1693 = vld [vmem:[%s1681 + $0x2c] sm:$0xf]
        %v1694 = vld [vmem:[%s1681 + $0x30] sm:$0xf]
        %v1695 = vld [vmem:[%s1681 + $0x34] sm:$0xf]
        %v1696 = vld [vmem:[%s1681 + $0x38] sm:$0xf]
        %v1697 = vld [vmem:[%s1681 + $0x3c] sm:$0xf]
        %v1698 = vld [vmem:[%s1681 + $0x40] sm:$0xf]
        %v1699 = vld [vmem:[%s1681 + $0x44] sm:$0xf]
        %v1700 = vld [vmem:[%s1681 + $0x48] sm:$0xf]
        %v1701 = vld [vmem:[%s1681 + $0x4c] sm:$0xf]
        %v1702 = vld [vmem:[%s1681 + $0x50] sm:$0xf]
        %v1703 = vld [vmem:[%s1681 + $0x54] sm:$0xf]
        %v1704 = vld [vmem:[%s1681 + $0x58] sm:$0xf]
        %v1705 = vld [vmem:[%s1681 + $0x5c] sm:$0xf]
        %v1706 = vld [vmem:[%s1681 + $0x60] sm:$0xf]
        %v1707 = vld [vmem:[%s1681 + $0x64] sm:$0xf]
        %v1708 = vld [vmem:[%s1681 + $0x68] sm:$0xf]
        %v1709 = vld [vmem:[%s1681 + $0x6c] sm:$0xf]
        %v1710 = vld [vmem:[%s1681 + $0x70] sm:$0xf]
        %v1711 = vld [vmem:[%s1681 + $0x74] sm:$0xf]
        %v1712 = vld [vmem:[%s1681 + $0x78] sm:$0xf]
        %v1713 = vld [vmem:[%s1681 + $0x7c] sm:$0xf]
        %v1722 = vunpack.c.l.b16 %v1673
        %v1723 = vunpack.c.h.b16 %v1673
        %v1724 = vunpack.c.l.b16 %v1674
        %v1725 = vunpack.c.h.b16 %v1674
        %v1726 = vunpack.c.l.b16 %v1675
        %v1727 = vunpack.c.h.b16 %v1675
        %v1728 = vunpack.c.l.b16 %v1676
        %v1729 = vunpack.c.h.b16 %v1676
        %v1730 = vunpack.c.l.b16 %v1677
        %v1731 = vunpack.c.h.b16 %v1677
        %v1732 = vunpack.c.l.b16 %v1678
        %v1733 = vunpack.c.h.b16 %v1678
        %v1734 = vunpack.c.l.b16 %v1679
        %v1735 = vunpack.c.h.b16 %v1679
        %v1736 = vunpack.c.l.b16 %v1680
        %v1737 = vunpack.c.h.b16 %v1680
        %v1738 = vpack.c.b16 %v1724, %v1722
        %v1739 = vpack.c.b16 %v1725, %v1723
        %v1740 = vpack.c.b16 %v1728, %v1726
        %v1741 = vpack.c.b16 %v1729, %v1727
        %v1742 = vpack.c.b16 %v1732, %v1730
        %v1743 = vpack.c.b16 %v1733, %v1731
        %v1744 = vpack.c.b16 %v1736, %v1734
        %v1745 = vpack.c.b16 %v1737, %v1735
        %v1786 = vunpack.c.l.b16 %v1682
        %v1787 = vunpack.c.l.b16 %v1683
        %v1788 = vunpack.c.l.b16 %v1684
        %v1789 = vunpack.c.l.b16 %v1685
        %v1790 = vunpack.c.l.b16 %v1686
        %v1791 = vunpack.c.l.b16 %v1687
        %v1792 = vunpack.c.l.b16 %v1688
        %v1793 = vunpack.c.l.b16 %v1689
        %v1794 = vunpack.c.l.b16 %v1690
        %v1795 = vunpack.c.l.b16 %v1691
        %v1796 = vunpack.c.l.b16 %v1692
        %v1797 = vunpack.c.l.b16 %v1693
        %v1798 = vunpack.c.l.b16 %v1694
        %v1799 = vunpack.c.l.b16 %v1695
        %v1800 = vunpack.c.l.b16 %v1696
        %v1801 = vunpack.c.l.b16 %v1697
        %v1802 = vunpack.c.l.b16 %v1698
        %v1803 = vunpack.c.l.b16 %v1699
        %v1804 = vunpack.c.l.b16 %v1700
        %v1805 = vunpack.c.l.b16 %v1701
        %v1806 = vunpack.c.l.b16 %v1702
        %v1807 = vunpack.c.l.b16 %v1703
        %v1808 = vunpack.c.l.b16 %v1704
        %v1809 = vunpack.c.l.b16 %v1705
        %v1810 = vunpack.c.l.b16 %v1706
        %v1811 = vunpack.c.l.b16 %v1707
        %v1812 = vunpack.c.l.b16 %v1708
        %v1813 = vunpack.c.l.b16 %v1709
        %v1814 = vunpack.c.l.b16 %v1710
        %v1815 = vunpack.c.l.b16 %v1711
        %v1816 = vunpack.c.l.b16 %v1712
        %v1817 = vunpack.c.l.b16 %v1713
        %v1818 = vpack.c.b16 %v1787, %v1786
        %v1819 = vpack.c.b16 %v1789, %v1788
        %v1820 = vpack.c.b16 %v1791, %v1790
        %v1821 = vpack.c.b16 %v1793, %v1792
        %v1822 = vpack.c.b16 %v1795, %v1794
        %v1823 = vpack.c.b16 %v1797, %v1796
        %v1824 = vpack.c.b16 %v1799, %v1798
        %v1825 = vpack.c.b16 %v1801, %v1800
        %v1826 = vpack.c.b16 %v1803, %v1802
        %v1827 = vpack.c.b16 %v1805, %v1804
        %v1828 = vpack.c.b16 %v1807, %v1806
        %v1829 = vpack.c.b16 %v1809, %v1808
        %v1830 = vpack.c.b16 %v1811, %v1810
        %v1831 = vpack.c.b16 %v1813, %v1812
        %v1832 = vpack.c.b16 %v1815, %v1814
        %v1833 = vpack.c.b16 %v1817, %v1816
        %1850 = vmatprep.subr.bf16.mxu0 0
        %1851 = vmatpush1.bf16.msra.mxu0 %v1825
        %1852 = vmatprep.subr.bf16.mxu0 0
        %1853 = vmatpush1.bf16.msra.mxu0 %v1824
        %1854 = vmatprep.subr.bf16.mxu0 0
        %1855 = vmatpush1.bf16.msra.mxu0 %v1823
        %1856 = vmatprep.subr.bf16.mxu0 0
        %1857 = vmatpush1.bf16.msra.mxu0 %v1822
        %1858 = vmatprep.subr.bf16.mxu0 0
        %1859 = vmatpush1.bf16.msra.mxu0 %v1821
        %1860 = vmatprep.subr.bf16.mxu0 0
        %1861 = vmatpush1.bf16.msra.mxu0 %v1820
        %1862 = vmatprep.subr.bf16.mxu0 0
        %1863 = vmatpush1.bf16.msra.mxu0 %v1819
        %1864 = vmatprep.subr.bf16.mxu0 0
        %1865 = vmatpush1.bf16.msra.mxu0 %v1818
        %1866 = vmatprep.subr.bf16.mxu0 0
        %1867 = vmatpush2.bf16.msra.mxu0 %v1833
        %1868 = vmatprep.subr.bf16.mxu0 0
        %1869 = vmatpush2.bf16.msra.mxu0 %v1832
        %1870 = vmatprep.subr.bf16.mxu0 0
        %1871 = vmatpush2.bf16.msra.mxu0 %v1831
        %1872 = vmatprep.subr.bf16.mxu0 0
        %1873 = vmatpush2.bf16.msra.mxu0 %v1830
        %1874 = vmatprep.subr.bf16.mxu0 0
        %1875 = vmatpush2.bf16.msra.mxu0 %v1829
        %1876 = vmatprep.subr.bf16.mxu0 0
        %1877 = vmatpush2.bf16.msra.mxu0 %v1828
        %1878 = vmatprep.subr.bf16.mxu0 0
        %1879 = vmatpush2.bf16.msra.mxu0 %v1827
        %1880 = vmatprep.subr.bf16.mxu0 0
        %1881 = vmatpush2.bf16.msra.mxu0 %v1826
        %1882 = vmatprep.mubr.bf16.mxu0 %v1739
        %1883 = vmatmul.mubr.bf16.gmra.mxu0 %v1738
        %v1884 = vpop.f32.mrf.mxu0
        %v1885 = vadd.f32 0.0, %v1884
        %v1886 = vpop.f32.mrf.mxu0
        %v1887 = vpop.f32.mrf.mxu0
        %v1888 = vadd.f32 0.0, %v1887
        %v1889 = vpop.f32.mrf.mxu0
        %1890 = vmatprep.mubr.bf16.mxu0 %v1741
        %1891 = vmatmul.mubr.bf16.gmra.mxu0 %v1740
        %v1892 = vpop.f32.mrf.mxu0
        %v1893 = vadd.f32 0.0, %v1892
        %v1894 = vpop.f32.mrf.mxu0
        %v1895 = vpop.f32.mrf.mxu0
        %v1896 = vadd.f32 0.0, %v1895
        %v1897 = vpop.f32.mrf.mxu0
        %1898 = vmatprep.mubr.bf16.mxu0 %v1743
        %1899 = vmatmul.mubr.bf16.gmra.mxu0 %v1742
        %v1900 = vpop.f32.mrf.mxu0
        %v1901 = vadd.f32 0.0, %v1900
        %v1902 = vpop.f32.mrf.mxu0
        %v1903 = vpop.f32.mrf.mxu0
        %v1904 = vadd.f32 0.0, %v1903
        %v1905 = vpop.f32.mrf.mxu0
        %1906 = vmatprep.mubr.bf16.mxu0 %v1745
        %1907 = vmatmul.mubr.bf16.gmra.mxu0 %v1744
        %v1908 = vpop.f32.mrf.mxu0
        %v1909 = vadd.f32 0.0, %v1908
        %v1910 = vpop.f32.mrf.mxu0
        %v1911 = vpop.f32.mrf.mxu0
        %v1912 = vadd.f32 0.0, %v1911
        %v1913 = vpop.f32.mrf.mxu0
        %1914 = vdwg.mxu0
        %v1915 = vadd.f32 %v1664, %v1885
        %v1916 = vadd.f32 %v1665, %v1888
        %v1917 = vadd.f32 %v1666, %v1893
        %v1918 = vadd.f32 %v1667, %v1896
        %v1919 = vadd.f32 %v1668, %v1901
        %v1920 = vadd.f32 %v1669, %v1904
        %v1921 = vadd.f32 %v1670, %v1909
        %v1922 = vadd.f32 %v1671, %v1912
        %s1923 = scalar_lea.vmem %s393, 192 [#allocation3]
        %v1924 = vld [vmem:[%s1923] sm:$0xff]
        %v1925 = vld [vmem:[%s1923 + $0x8] sm:$0xff]
        %v1926 = vld [vmem:[%s1923 + $0x10] sm:$0xff]
        %v1927 = vld [vmem:[%s1923 + $0x18] sm:$0xff]
        %v1928 = vld [vmem:[%s1923 + $0x20] sm:$0xff]
        %v1929 = vld [vmem:[%s1923 + $0x28] sm:$0xff]
        %v1930 = vld [vmem:[%s1923 + $0x30] sm:$0xff]
        %v1931 = vld [vmem:[%s1923 + $0x38] sm:$0xff]
        %s1932 = scalar_lea.vmem %s3, 384
        %v1933 = vld [vmem:[%s1932] sm:$0xf]
        %v1934 = vld [vmem:[%s1932 + $0x4] sm:$0xf]
        %v1935 = vld [vmem:[%s1932 + $0x8] sm:$0xf]
        %v1936 = vld [vmem:[%s1932 + $0xc] sm:$0xf]
        %v1937 = vld [vmem:[%s1932 + $0x10] sm:$0xf]
        %v1938 = vld [vmem:[%s1932 + $0x14] sm:$0xf]
        %v1939 = vld [vmem:[%s1932 + $0x18] sm:$0xf]
        %v1940 = vld [vmem:[%s1932 + $0x1c] sm:$0xf]
        %v1941 = vld [vmem:[%s1932 + $0x20] sm:$0xf]
        %v1942 = vld [vmem:[%s1932 + $0x24] sm:$0xf]
        %v1943 = vld [vmem:[%s1932 + $0x28] sm:$0xf]
        %v1944 = vld [vmem:[%s1932 + $0x2c] sm:$0xf]
        %v1945 = vld [vmem:[%s1932 + $0x30] sm:$0xf]
        %v1946 = vld [vmem:[%s1932 + $0x34] sm:$0xf]
        %v1947 = vld [vmem:[%s1932 + $0x38] sm:$0xf]
        %v1948 = vld [vmem:[%s1932 + $0x3c] sm:$0xf]
        %v1949 = vld [vmem:[%s1932 + $0x40] sm:$0xf]
        %v1950 = vld [vmem:[%s1932 + $0x44] sm:$0xf]
        %v1951 = vld [vmem:[%s1932 + $0x48] sm:$0xf]
        %v1952 = vld [vmem:[%s1932 + $0x4c] sm:$0xf]
        %v1953 = vld [vmem:[%s1932 + $0x50] sm:$0xf]
        %v1954 = vld [vmem:[%s1932 + $0x54] sm:$0xf]
        %v1955 = vld [vmem:[%s1932 + $0x58] sm:$0xf]
        %v1956 = vld [vmem:[%s1932 + $0x5c] sm:$0xf]
        %v1957 = vld [vmem:[%s1932 + $0x60] sm:$0xf]
        %v1958 = vld [vmem:[%s1932 + $0x64] sm:$0xf]
        %v1959 = vld [vmem:[%s1932 + $0x68] sm:$0xf]
        %v1960 = vld [vmem:[%s1932 + $0x6c] sm:$0xf]
        %v1961 = vld [vmem:[%s1932 + $0x70] sm:$0xf]
        %v1962 = vld [vmem:[%s1932 + $0x74] sm:$0xf]
        %v1963 = vld [vmem:[%s1932 + $0x78] sm:$0xf]
        %v1964 = vld [vmem:[%s1932 + $0x7c] sm:$0xf]
        %v1973 = vunpack.c.l.b16 %v1924
        %v1974 = vunpack.c.h.b16 %v1924
        %v1975 = vunpack.c.l.b16 %v1925
        %v1976 = vunpack.c.h.b16 %v1925
        %v1977 = vunpack.c.l.b16 %v1926
        %v1978 = vunpack.c.h.b16 %v1926
        %v1979 = vunpack.c.l.b16 %v1927
        %v1980 = vunpack.c.h.b16 %v1927
        %v1981 = vunpack.c.l.b16 %v1928
        %v1982 = vunpack.c.h.b16 %v1928
        %v1983 = vunpack.c.l.b16 %v1929
        %v1984 = vunpack.c.h.b16 %v1929
        %v1985 = vunpack.c.l.b16 %v1930
        %v1986 = vunpack.c.h.b16 %v1930
        %v1987 = vunpack.c.l.b16 %v1931
        %v1988 = vunpack.c.h.b16 %v1931
        %v1989 = vpack.c.b16 %v1975, %v1973
        %v1990 = vpack.c.b16 %v1976, %v1974
        %v1991 = vpack.c.b16 %v1979, %v1977
        %v1992 = vpack.c.b16 %v1980, %v1978
        %v1993 = vpack.c.b16 %v1983, %v1981
        %v1994 = vpack.c.b16 %v1984, %v1982
        %v1995 = vpack.c.b16 %v1987, %v1985
        %v1996 = vpack.c.b16 %v1988, %v1986
        %v2037 = vunpack.c.l.b16 %v1933
        %v2038 = vunpack.c.l.b16 %v1934
        %v2039 = vunpack.c.l.b16 %v1935
        %v2040 = vunpack.c.l.b16 %v1936
        %v2041 = vunpack.c.l.b16 %v1937
        %v2042 = vunpack.c.l.b16 %v1938
        %v2043 = vunpack.c.l.b16 %v1939
        %v2044 = vunpack.c.l.b16 %v1940
        %v2045 = vunpack.c.l.b16 %v1941
        %v2046 = vunpack.c.l.b16 %v1942
        %v2047 = vunpack.c.l.b16 %v1943
        %v2048 = vunpack.c.l.b16 %v1944
        %v2049 = vunpack.c.l.b16 %v1945
        %v2050 = vunpack.c.l.b16 %v1946
        %v2051 = vunpack.c.l.b16 %v1947
        %v2052 = vunpack.c.l.b16 %v1948
        %v2053 = vunpack.c.l.b16 %v1949
        %v2054 = vunpack.c.l.b16 %v1950
        %v2055 = vunpack.c.l.b16 %v1951
        %v2056 = vunpack.c.l.b16 %v1952
        %v2057 = vunpack.c.l.b16 %v1953
        %v2058 = vunpack.c.l.b16 %v1954
        %v2059 = vunpack.c.l.b16 %v1955
        %v2060 = vunpack.c.l.b16 %v1956
        %v2061 = vunpack.c.l.b16 %v1957
        %v2062 = vunpack.c.l.b16 %v1958
        %v2063 = vunpack.c.l.b16 %v1959
        %v2064 = vunpack.c.l.b16 %v1960
        %v2065 = vunpack.c.l.b16 %v1961
        %v2066 = vunpack.c.l.b16 %v1962
        %v2067 = vunpack.c.l.b16 %v1963
        %v2068 = vunpack.c.l.b16 %v1964
        %v2069 = vpack.c.b16 %v2038, %v2037
        %v2070 = vpack.c.b16 %v2040, %v2039
        %v2071 = vpack.c.b16 %v2042, %v2041
        %v2072 = vpack.c.b16 %v2044, %v2043
        %v2073 = vpack.c.b16 %v2046, %v2045
        %v2074 = vpack.c.b16 %v2048, %v2047
        %v2075 = vpack.c.b16 %v2050, %v2049
        %v2076 = vpack.c.b16 %v2052, %v2051
        %v2077 = vpack.c.b16 %v2054, %v2053
        %v2078 = vpack.c.b16 %v2056, %v2055
        %v2079 = vpack.c.b16 %v2058, %v2057
        %v2080 = vpack.c.b16 %v2060, %v2059
        %v2081 = vpack.c.b16 %v2062, %v2061
        %v2082 = vpack.c.b16 %v2064, %v2063
        %v2083 = vpack.c.b16 %v2066, %v2065
        %v2084 = vpack.c.b16 %v2068, %v2067
        %2101 = vmatprep.subr.bf16.mxu0 0
        %2102 = vmatpush1.bf16.msra.mxu0 %v2076
        %2103 = vmatprep.subr.bf16.mxu0 0
        %2104 = vmatpush1.bf16.msra.mxu0 %v2075
        %2105 = vmatprep.subr.bf16.mxu0 0
        %2106 = vmatpush1.bf16.msra.mxu0 %v2074
        %2107 = vmatprep.subr.bf16.mxu0 0
        %2108 = vmatpush1.bf16.msra.mxu0 %v2073
        %2109 = vmatprep.subr.bf16.mxu0 0
        %2110 = vmatpush1.bf16.msra.mxu0 %v2072
        %2111 = vmatprep.subr.bf16.mxu0 0
        %2112 = vmatpush1.bf16.msra.mxu0 %v2071
        %2113 = vmatprep.subr.bf16.mxu0 0
        %2114 = vmatpush1.bf16.msra.mxu0 %v2070
        %2115 = vmatprep.subr.bf16.mxu0 0
        %2116 = vmatpush1.bf16.msra.mxu0 %v2069
        %2117 = vmatprep.subr.bf16.mxu0 0
        %2118 = vmatpush2.bf16.msra.mxu0 %v2084
        %2119 = vmatprep.subr.bf16.mxu0 0
        %2120 = vmatpush2.bf16.msra.mxu0 %v2083
        %2121 = vmatprep.subr.bf16.mxu0 0
        %2122 = vmatpush2.bf16.msra.mxu0 %v2082
        %2123 = vmatprep.subr.bf16.mxu0 0
        %2124 = vmatpush2.bf16.msra.mxu0 %v2081
        %2125 = vmatprep.subr.bf16.mxu0 0
        %2126 = vmatpush2.bf16.msra.mxu0 %v2080
        %2127 = vmatprep.subr.bf16.mxu0 0
        %2128 = vmatpush2.bf16.msra.mxu0 %v2079
        %2129 = vmatprep.subr.bf16.mxu0 0
        %2130 = vmatpush2.bf16.msra.mxu0 %v2078
        %2131 = vmatprep.subr.bf16.mxu0 0
        %2132 = vmatpush2.bf16.msra.mxu0 %v2077
        %2133 = vmatprep.mubr.bf16.mxu0 %v1990
        %2134 = vmatmul.mubr.bf16.gmra.mxu0 %v1989
        %v2135 = vpop.f32.mrf.mxu0
        %v2136 = vadd.f32 0.0, %v2135
        %v2137 = vpop.f32.mrf.mxu0
        %v2138 = vpop.f32.mrf.mxu0
        %v2139 = vadd.f32 0.0, %v2138
        %v2140 = vpop.f32.mrf.mxu0
        %2141 = vmatprep.mubr.bf16.mxu0 %v1992
        %2142 = vmatmul.mubr.bf16.gmra.mxu0 %v1991
        %v2143 = vpop.f32.mrf.mxu0
        %v2144 = vadd.f32 0.0, %v2143
        %v2145 = vpop.f32.mrf.mxu0
        %v2146 = vpop.f32.mrf.mxu0
        %v2147 = vadd.f32 0.0, %v2146
        %v2148 = vpop.f32.mrf.mxu0
        %2149 = vmatprep.mubr.bf16.mxu0 %v1994
        %2150 = vmatmul.mubr.bf16.gmra.mxu0 %v1993
        %v2151 = vpop.f32.mrf.mxu0
        %v2152 = vadd.f32 0.0, %v2151
        %v2153 = vpop.f32.mrf.mxu0
        %v2154 = vpop.f32.mrf.mxu0
        %v2155 = vadd.f32 0.0, %v2154
        %v2156 = vpop.f32.mrf.mxu0
        %2157 = vmatprep.mubr.bf16.mxu0 %v1996
        %2158 = vmatmul.mubr.bf16.gmra.mxu0 %v1995
        %v2159 = vpop.f32.mrf.mxu0
        %v2160 = vadd.f32 0.0, %v2159
        %v2161 = vpop.f32.mrf.mxu0
        %v2162 = vpop.f32.mrf.mxu0
        %v2163 = vadd.f32 0.0, %v2162
        %v2164 = vpop.f32.mrf.mxu0
        %2165 = vdwg.mxu0
        %v2166 = vadd.f32 %v1915, %v2136
        %v2167 = vadd.f32 %v1916, %v2139
        %v2168 = vadd.f32 %v1917, %v2144
        %v2169 = vadd.f32 %v1918, %v2147
        %v2170 = vadd.f32 %v1919, %v2152
        %v2171 = vadd.f32 %v1920, %v2155
        %v2172 = vadd.f32 %v1921, %v2160
        %v2173 = vadd.f32 %v1922, %v2163
        %s2174 = scalar_lea.vmem %s393, 256 [#allocation3]
        %v2175 = vld [vmem:[%s2174] sm:$0xff]
        %v2176 = vld [vmem:[%s2174 + $0x8] sm:$0xff]
        %v2177 = vld [vmem:[%s2174 + $0x10] sm:$0xff]
        %v2178 = vld [vmem:[%s2174 + $0x18] sm:$0xff]
        %v2179 = vld [vmem:[%s2174 + $0x20] sm:$0xff]
        %v2180 = vld [vmem:[%s2174 + $0x28] sm:$0xff]
        %v2181 = vld [vmem:[%s2174 + $0x30] sm:$0xff]
        %v2182 = vld [vmem:[%s2174 + $0x38] sm:$0xff]
        %s2183 = scalar_lea.vmem %s3, 512
        %v2184 = vld [vmem:[%s2183] sm:$0xf]
        %v2185 = vld [vmem:[%s2183 + $0x4] sm:$0xf]
        %v2186 = vld [vmem:[%s2183 + $0x8] sm:$0xf]
        %v2187 = vld [vmem:[%s2183 + $0xc] sm:$0xf]
        %v2188 = vld [vmem:[%s2183 + $0x10] sm:$0xf]
        %v2189 = vld [vmem:[%s2183 + $0x14] sm:$0xf]
        %v2190 = vld [vmem:[%s2183 + $0x18] sm:$0xf]
        %v2191 = vld [vmem:[%s2183 + $0x1c] sm:$0xf]
        %v2192 = vld [vmem:[%s2183 + $0x20] sm:$0xf]
        %v2193 = vld [vmem:[%s2183 + $0x24] sm:$0xf]
        %v2194 = vld [vmem:[%s2183 + $0x28] sm:$0xf]
        %v2195 = vld [vmem:[%s2183 + $0x2c] sm:$0xf]
        %v2196 = vld [vmem:[%s2183 + $0x30] sm:$0xf]
        %v2197 = vld [vmem:[%s2183 + $0x34] sm:$0xf]
        %v2198 = vld [vmem:[%s2183 + $0x38] sm:$0xf]
        %v2199 = vld [vmem:[%s2183 + $0x3c] sm:$0xf]
        %v2200 = vld [vmem:[%s2183 + $0x40] sm:$0xf]
        %v2201 = vld [vmem:[%s2183 + $0x44] sm:$0xf]
        %v2202 = vld [vmem:[%s2183 + $0x48] sm:$0xf]
        %v2203 = vld [vmem:[%s2183 + $0x4c] sm:$0xf]
        %v2204 = vld [vmem:[%s2183 + $0x50] sm:$0xf]
        %v2205 = vld [vmem:[%s2183 + $0x54] sm:$0xf]
        %v2206 = vld [vmem:[%s2183 + $0x58] sm:$0xf]
        %v2207 = vld [vmem:[%s2183 + $0x5c] sm:$0xf]
        %v2208 = vld [vmem:[%s2183 + $0x60] sm:$0xf]
        %v2209 = vld [vmem:[%s2183 + $0x64] sm:$0xf]
        %v2210 = vld [vmem:[%s2183 + $0x68] sm:$0xf]
        %v2211 = vld [vmem:[%s2183 + $0x6c] sm:$0xf]
        %v2212 = vld [vmem:[%s2183 + $0x70] sm:$0xf]
        %v2213 = vld [vmem:[%s2183 + $0x74] sm:$0xf]
        %v2214 = vld [vmem:[%s2183 + $0x78] sm:$0xf]
        %v2215 = vld [vmem:[%s2183 + $0x7c] sm:$0xf]
        %v2224 = vunpack.c.l.b16 %v2175
        %v2225 = vunpack.c.h.b16 %v2175
        %v2226 = vunpack.c.l.b16 %v2176
        %v2227 = vunpack.c.h.b16 %v2176
        %v2228 = vunpack.c.l.b16 %v2177
        %v2229 = vunpack.c.h.b16 %v2177
        %v2230 = vunpack.c.l.b16 %v2178
        %v2231 = vunpack.c.h.b16 %v2178
        %v2232 = vunpack.c.l.b16 %v2179
        %v2233 = vunpack.c.h.b16 %v2179
        %v2234 = vunpack.c.l.b16 %v2180
        %v2235 = vunpack.c.h.b16 %v2180
        %v2236 = vunpack.c.l.b16 %v2181
        %v2237 = vunpack.c.h.b16 %v2181
        %v2238 = vunpack.c.l.b16 %v2182
        %v2239 = vunpack.c.h.b16 %v2182
        %v2240 = vpack.c.b16 %v2226, %v2224
        %v2241 = vpack.c.b16 %v2227, %v2225
        %v2242 = vpack.c.b16 %v2230, %v2228
        %v2243 = vpack.c.b16 %v2231, %v2229
        %v2244 = vpack.c.b16 %v2234, %v2232
        %v2245 = vpack.c.b16 %v2235, %v2233
        %v2246 = vpack.c.b16 %v2238, %v2236
        %v2247 = vpack.c.b16 %v2239, %v2237
        %v2288 = vunpack.c.l.b16 %v2184
        %v2289 = vunpack.c.l.b16 %v2185
        %v2290 = vunpack.c.l.b16 %v2186
        %v2291 = vunpack.c.l.b16 %v2187
        %v2292 = vunpack.c.l.b16 %v2188
        %v2293 = vunpack.c.l.b16 %v2189
        %v2294 = vunpack.c.l.b16 %v2190
        %v2295 = vunpack.c.l.b16 %v2191
        %v2296 = vunpack.c.l.b16 %v2192
        %v2297 = vunpack.c.l.b16 %v2193
        %v2298 = vunpack.c.l.b16 %v2194
        %v2299 = vunpack.c.l.b16 %v2195
        %v2300 = vunpack.c.l.b16 %v2196
        %v2301 = vunpack.c.l.b16 %v2197
        %v2302 = vunpack.c.l.b16 %v2198
        %v2303 = vunpack.c.l.b16 %v2199
        %v2304 = vunpack.c.l.b16 %v2200
        %v2305 = vunpack.c.l.b16 %v2201
        %v2306 = vunpack.c.l.b16 %v2202
        %v2307 = vunpack.c.l.b16 %v2203
        %v2308 = vunpack.c.l.b16 %v2204
        %v2309 = vunpack.c.l.b16 %v2205
        %v2310 = vunpack.c.l.b16 %v2206
        %v2311 = vunpack.c.l.b16 %v2207
        %v2312 = vunpack.c.l.b16 %v2208
        %v2313 = vunpack.c.l.b16 %v2209
        %v2314 = vunpack.c.l.b16 %v2210
        %v2315 = vunpack.c.l.b16 %v2211
        %v2316 = vunpack.c.l.b16 %v2212
        %v2317 = vunpack.c.l.b16 %v2213
        %v2318 = vunpack.c.l.b16 %v2214
        %v2319 = vunpack.c.l.b16 %v2215
        %v2320 = vpack.c.b16 %v2289, %v2288
        %v2321 = vpack.c.b16 %v2291, %v2290
        %v2322 = vpack.c.b16 %v2293, %v2292
        %v2323 = vpack.c.b16 %v2295, %v2294
        %v2324 = vpack.c.b16 %v2297, %v2296
        %v2325 = vpack.c.b16 %v2299, %v2298
        %v2326 = vpack.c.b16 %v2301, %v2300
        %v2327 = vpack.c.b16 %v2303, %v2302
        %v2328 = vpack.c.b16 %v2305, %v2304
        %v2329 = vpack.c.b16 %v2307, %v2306
        %v2330 = vpack.c.b16 %v2309, %v2308
        %v2331 = vpack.c.b16 %v2311, %v2310
        %v2332 = vpack.c.b16 %v2313, %v2312
        %v2333 = vpack.c.b16 %v2315, %v2314
        %v2334 = vpack.c.b16 %v2317, %v2316
        %v2335 = vpack.c.b16 %v2319, %v2318
        %2352 = vmatprep.subr.bf16.mxu0 0
        %2353 = vmatpush1.bf16.msra.mxu0 %v2327
        %2354 = vmatprep.subr.bf16.mxu0 0
        %2355 = vmatpush1.bf16.msra.mxu0 %v2326
        %2356 = vmatprep.subr.bf16.mxu0 0
        %2357 = vmatpush1.bf16.msra.mxu0 %v2325
        %2358 = vmatprep.subr.bf16.mxu0 0
        %2359 = vmatpush1.bf16.msra.mxu0 %v2324
        %2360 = vmatprep.subr.bf16.mxu0 0
        %2361 = vmatpush1.bf16.msra.mxu0 %v2323
        %2362 = vmatprep.subr.bf16.mxu0 0
        %2363 = vmatpush1.bf16.msra.mxu0 %v2322
        %2364 = vmatprep.subr.bf16.mxu0 0
        %2365 = vmatpush1.bf16.msra.mxu0 %v2321
        %2366 = vmatprep.subr.bf16.mxu0 0
        %2367 = vmatpush1.bf16.msra.mxu0 %v2320
        %2368 = vmatprep.subr.bf16.mxu0 0
        %2369 = vmatpush2.bf16.msra.mxu0 %v2335
        %2370 = vmatprep.subr.bf16.mxu0 0
        %2371 = vmatpush2.bf16.msra.mxu0 %v2334
        %2372 = vmatprep.subr.bf16.mxu0 0
        %2373 = vmatpush2.bf16.msra.mxu0 %v2333
        %2374 = vmatprep.subr.bf16.mxu0 0
        %2375 = vmatpush2.bf16.msra.mxu0 %v2332
        %2376 = vmatprep.subr.bf16.mxu0 0
        %2377 = vmatpush2.bf16.msra.mxu0 %v2331
        %2378 = vmatprep.subr.bf16.mxu0 0
        %2379 = vmatpush2.bf16.msra.mxu0 %v2330
        %2380 = vmatprep.subr.bf16.mxu0 0
        %2381 = vmatpush2.bf16.msra.mxu0 %v2329
        %2382 = vmatprep.subr.bf16.mxu0 0
        %2383 = vmatpush2.bf16.msra.mxu0 %v2328
        %2384 = vmatprep.mubr.bf16.mxu0 %v2241
        %2385 = vmatmul.mubr.bf16.gmra.mxu0 %v2240
        %v2386 = vpop.f32.mrf.mxu0
        %v2387 = vadd.f32 0.0, %v2386
        %v2388 = vpop.f32.mrf.mxu0
        %v2389 = vpop.f32.mrf.mxu0
        %v2390 = vadd.f32 0.0, %v2389
        %v2391 = vpop.f32.mrf.mxu0
        %2392 = vmatprep.mubr.bf16.mxu0 %v2243
        %2393 = vmatmul.mubr.bf16.gmra.mxu0 %v2242
        %v2394 = vpop.f32.mrf.mxu0
        %v2395 = vadd.f32 0.0, %v2394
        %v2396 = vpop.f32.mrf.mxu0
        %v2397 = vpop.f32.mrf.mxu0
        %v2398 = vadd.f32 0.0, %v2397
        %v2399 = vpop.f32.mrf.mxu0
        %2400 = vmatprep.mubr.bf16.mxu0 %v2245
        %2401 = vmatmul.mubr.bf16.gmra.mxu0 %v2244
        %v2402 = vpop.f32.mrf.mxu0
        %v2403 = vadd.f32 0.0, %v2402
        %v2404 = vpop.f32.mrf.mxu0
        %v2405 = vpop.f32.mrf.mxu0
        %v2406 = vadd.f32 0.0, %v2405
        %v2407 = vpop.f32.mrf.mxu0
        %2408 = vmatprep.mubr.bf16.mxu0 %v2247
        %2409 = vmatmul.mubr.bf16.gmra.mxu0 %v2246
        %v2410 = vpop.f32.mrf.mxu0
        %v2411 = vadd.f32 0.0, %v2410
        %v2412 = vpop.f32.mrf.mxu0
        %v2413 = vpop.f32.mrf.mxu0
        %v2414 = vadd.f32 0.0, %v2413
        %v2415 = vpop.f32.mrf.mxu0
        %2416 = vdwg.mxu0
        %v2417 = vadd.f32 %v2166, %v2387
        %v2418 = vadd.f32 %v2167, %v2390
        %v2419 = vadd.f32 %v2168, %v2395
        %v2420 = vadd.f32 %v2169, %v2398
        %v2421 = vadd.f32 %v2170, %v2403
        %v2422 = vadd.f32 %v2171, %v2406
        %v2423 = vadd.f32 %v2172, %v2411
        %v2424 = vadd.f32 %v2173, %v2414
        %s2425 = scalar_lea.vmem %s393, 320 [#allocation3]
        %v2426 = vld [vmem:[%s2425] sm:$0xff]
        %v2427 = vld [vmem:[%s2425 + $0x8] sm:$0xff]
        %v2428 = vld [vmem:[%s2425 + $0x10] sm:$0xff]
        %v2429 = vld [vmem:[%s2425 + $0x18] sm:$0xff]
        %v2430 = vld [vmem:[%s2425 + $0x20] sm:$0xff]
        %v2431 = vld [vmem:[%s2425 + $0x28] sm:$0xff]
        %v2432 = vld [vmem:[%s2425 + $0x30] sm:$0xff]
        %v2433 = vld [vmem:[%s2425 + $0x38] sm:$0xff]
        %s2434 = scalar_lea.vmem %s3, 640
        %v2435 = vld [vmem:[%s2434] sm:$0xf]
        %v2436 = vld [vmem:[%s2434 + $0x4] sm:$0xf]
        %v2437 = vld [vmem:[%s2434 + $0x8] sm:$0xf]
        %v2438 = vld [vmem:[%s2434 + $0xc] sm:$0xf]
        %v2439 = vld [vmem:[%s2434 + $0x10] sm:$0xf]
        %v2440 = vld [vmem:[%s2434 + $0x14] sm:$0xf]
        %v2441 = vld [vmem:[%s2434 + $0x18] sm:$0xf]
        %v2442 = vld [vmem:[%s2434 + $0x1c] sm:$0xf]
        %v2443 = vld [vmem:[%s2434 + $0x20] sm:$0xf]
        %v2444 = vld [vmem:[%s2434 + $0x24] sm:$0xf]
        %v2445 = vld [vmem:[%s2434 + $0x28] sm:$0xf]
        %v2446 = vld [vmem:[%s2434 + $0x2c] sm:$0xf]
        %v2447 = vld [vmem:[%s2434 + $0x30] sm:$0xf]
        %v2448 = vld [vmem:[%s2434 + $0x34] sm:$0xf]
        %v2449 = vld [vmem:[%s2434 + $0x38] sm:$0xf]
        %v2450 = vld [vmem:[%s2434 + $0x3c] sm:$0xf]
        %v2451 = vld [vmem:[%s2434 + $0x40] sm:$0xf]
        %v2452 = vld [vmem:[%s2434 + $0x44] sm:$0xf]
        %v2453 = vld [vmem:[%s2434 + $0x48] sm:$0xf]
        %v2454 = vld [vmem:[%s2434 + $0x4c] sm:$0xf]
        %v2455 = vld [vmem:[%s2434 + $0x50] sm:$0xf]
        %v2456 = vld [vmem:[%s2434 + $0x54] sm:$0xf]
        %v2457 = vld [vmem:[%s2434 + $0x58] sm:$0xf]
        %v2458 = vld [vmem:[%s2434 + $0x5c] sm:$0xf]
        %v2459 = vld [vmem:[%s2434 + $0x60] sm:$0xf]
        %v2460 = vld [vmem:[%s2434 + $0x64] sm:$0xf]
        %v2461 = vld [vmem:[%s2434 + $0x68] sm:$0xf]
        %v2462 = vld [vmem:[%s2434 + $0x6c] sm:$0xf]
        %v2463 = vld [vmem:[%s2434 + $0x70] sm:$0xf]
        %v2464 = vld [vmem:[%s2434 + $0x74] sm:$0xf]
        %v2465 = vld [vmem:[%s2434 + $0x78] sm:$0xf]
        %v2466 = vld [vmem:[%s2434 + $0x7c] sm:$0xf]
        %v2475 = vunpack.c.l.b16 %v2426
        %v2476 = vunpack.c.h.b16 %v2426
        %v2477 = vunpack.c.l.b16 %v2427
        %v2478 = vunpack.c.h.b16 %v2427
        %v2479 = vunpack.c.l.b16 %v2428
        %v2480 = vunpack.c.h.b16 %v2428
        %v2481 = vunpack.c.l.b16 %v2429
        %v2482 = vunpack.c.h.b16 %v2429
        %v2483 = vunpack.c.l.b16 %v2430
        %v2484 = vunpack.c.h.b16 %v2430
        %v2485 = vunpack.c.l.b16 %v2431
        %v2486 = vunpack.c.h.b16 %v2431
        %v2487 = vunpack.c.l.b16 %v2432
        %v2488 = vunpack.c.h.b16 %v2432
        %v2489 = vunpack.c.l.b16 %v2433
        %v2490 = vunpack.c.h.b16 %v2433
        %v2491 = vpack.c.b16 %v2477, %v2475
        %v2492 = vpack.c.b16 %v2478, %v2476
        %v2493 = vpack.c.b16 %v2481, %v2479
        %v2494 = vpack.c.b16 %v2482, %v2480
        %v2495 = vpack.c.b16 %v2485, %v2483
        %v2496 = vpack.c.b16 %v2486, %v2484
        %v2497 = vpack.c.b16 %v2489, %v2487
        %v2498 = vpack.c.b16 %v2490, %v2488
        %v2539 = vunpack.c.l.b16 %v2435
        %v2540 = vunpack.c.l.b16 %v2436
        %v2541 = vunpack.c.l.b16 %v2437
        %v2542 = vunpack.c.l.b16 %v2438
        %v2543 = vunpack.c.l.b16 %v2439
        %v2544 = vunpack.c.l.b16 %v2440
        %v2545 = vunpack.c.l.b16 %v2441
        %v2546 = vunpack.c.l.b16 %v2442
        %v2547 = vunpack.c.l.b16 %v2443
        %v2548 = vunpack.c.l.b16 %v2444
        %v2549 = vunpack.c.l.b16 %v2445
        %v2550 = vunpack.c.l.b16 %v2446
        %v2551 = vunpack.c.l.b16 %v2447
        %v2552 = vunpack.c.l.b16 %v2448
        %v2553 = vunpack.c.l.b16 %v2449
        %v2554 = vunpack.c.l.b16 %v2450
        %v2555 = vunpack.c.l.b16 %v2451
        %v2556 = vunpack.c.l.b16 %v2452
        %v2557 = vunpack.c.l.b16 %v2453
        %v2558 = vunpack.c.l.b16 %v2454
        %v2559 = vunpack.c.l.b16 %v2455
        %v2560 = vunpack.c.l.b16 %v2456
        %v2561 = vunpack.c.l.b16 %v2457
        %v2562 = vunpack.c.l.b16 %v2458
        %v2563 = vunpack.c.l.b16 %v2459
        %v2564 = vunpack.c.l.b16 %v2460
        %v2565 = vunpack.c.l.b16 %v2461
        %v2566 = vunpack.c.l.b16 %v2462
        %v2567 = vunpack.c.l.b16 %v2463
        %v2568 = vunpack.c.l.b16 %v2464
        %v2569 = vunpack.c.l.b16 %v2465
        %v2570 = vunpack.c.l.b16 %v2466
        %v2571 = vpack.c.b16 %v2540, %v2539
        %v2572 = vpack.c.b16 %v2542, %v2541
        %v2573 = vpack.c.b16 %v2544, %v2543
        %v2574 = vpack.c.b16 %v2546, %v2545
        %v2575 = vpack.c.b16 %v2548, %v2547
        %v2576 = vpack.c.b16 %v2550, %v2549
        %v2577 = vpack.c.b16 %v2552, %v2551
        %v2578 = vpack.c.b16 %v2554, %v2553
        %v2579 = vpack.c.b16 %v2556, %v2555
        %v2580 = vpack.c.b16 %v2558, %v2557
        %v2581 = vpack.c.b16 %v2560, %v2559
        %v2582 = vpack.c.b16 %v2562, %v2561
        %v2583 = vpack.c.b16 %v2564, %v2563
        %v2584 = vpack.c.b16 %v2566, %v2565
        %v2585 = vpack.c.b16 %v2568, %v2567
        %v2586 = vpack.c.b16 %v2570, %v2569
        %2603 = vmatprep.subr.bf16.mxu0 0
        %2604 = vmatpush1.bf16.msra.mxu0 %v2578
        %2605 = vmatprep.subr.bf16.mxu0 0
        %2606 = vmatpush1.bf16.msra.mxu0 %v2577
        %2607 = vmatprep.subr.bf16.mxu0 0
        %2608 = vmatpush1.bf16.msra.mxu0 %v2576
        %2609 = vmatprep.subr.bf16.mxu0 0
        %2610 = vmatpush1.bf16.msra.mxu0 %v2575
        %2611 = vmatprep.subr.bf16.mxu0 0
        %2612 = vmatpush1.bf16.msra.mxu0 %v2574
        %2613 = vmatprep.subr.bf16.mxu0 0
        %2614 = vmatpush1.bf16.msra.mxu0 %v2573
        %2615 = vmatprep.subr.bf16.mxu0 0
        %2616 = vmatpush1.bf16.msra.mxu0 %v2572
        %2617 = vmatprep.subr.bf16.mxu0 0
        %2618 = vmatpush1.bf16.msra.mxu0 %v2571
        %2619 = vmatprep.subr.bf16.mxu0 0
        %2620 = vmatpush2.bf16.msra.mxu0 %v2586
        %2621 = vmatprep.subr.bf16.mxu0 0
        %2622 = vmatpush2.bf16.msra.mxu0 %v2585
        %2623 = vmatprep.subr.bf16.mxu0 0
        %2624 = vmatpush2.bf16.msra.mxu0 %v2584
        %2625 = vmatprep.subr.bf16.mxu0 0
        %2626 = vmatpush2.bf16.msra.mxu0 %v2583
        %2627 = vmatprep.subr.bf16.mxu0 0
        %2628 = vmatpush2.bf16.msra.mxu0 %v2582
        %2629 = vmatprep.subr.bf16.mxu0 0
        %2630 = vmatpush2.bf16.msra.mxu0 %v2581
        %2631 = vmatprep.subr.bf16.mxu0 0
        %2632 = vmatpush2.bf16.msra.mxu0 %v2580
        %2633 = vmatprep.subr.bf16.mxu0 0
        %2634 = vmatpush2.bf16.msra.mxu0 %v2579
        %2635 = vmatprep.mubr.bf16.mxu0 %v2492
        %2636 = vmatmul.mubr.bf16.gmra.mxu0 %v2491
        %v2637 = vpop.f32.mrf.mxu0
        %v2638 = vadd.f32 0.0, %v2637
        %v2639 = vpop.f32.mrf.mxu0
        %v2640 = vpop.f32.mrf.mxu0
        %v2641 = vadd.f32 0.0, %v2640
        %v2642 = vpop.f32.mrf.mxu0
        %2643 = vmatprep.mubr.bf16.mxu0 %v2494
        %2644 = vmatmul.mubr.bf16.gmra.mxu0 %v2493
        %v2645 = vpop.f32.mrf.mxu0
        %v2646 = vadd.f32 0.0, %v2645
        %v2647 = vpop.f32.mrf.mxu0
        %v2648 = vpop.f32.mrf.mxu0
        %v2649 = vadd.f32 0.0, %v2648
        %v2650 = vpop.f32.mrf.mxu0
        %2651 = vmatprep.mubr.bf16.mxu0 %v2496
        %2652 = vmatmul.mubr.bf16.gmra.mxu0 %v2495
        %v2653 = vpop.f32.mrf.mxu0
        %v2654 = vadd.f32 0.0, %v2653
        %v2655 = vpop.f32.mrf.mxu0
        %v2656 = vpop.f32.mrf.mxu0
        %v2657 = vadd.f32 0.0, %v2656
        %v2658 = vpop.f32.mrf.mxu0
        %2659 = vmatprep.mubr.bf16.mxu0 %v2498
        %2660 = vmatmul.mubr.bf16.gmra.mxu0 %v2497
        %v2661 = vpop.f32.mrf.mxu0
        %v2662 = vadd.f32 0.0, %v2661
        %v2663 = vpop.f32.mrf.mxu0
        %v2664 = vpop.f32.mrf.mxu0
        %v2665 = vadd.f32 0.0, %v2664
        %v2666 = vpop.f32.mrf.mxu0
        %2667 = vdwg.mxu0
        %v2668 = vadd.f32 %v2417, %v2638
        %v2669 = vadd.f32 %v2418, %v2641
        %v2670 = vadd.f32 %v2419, %v2646
        %v2671 = vadd.f32 %v2420, %v2649
        %v2672 = vadd.f32 %v2421, %v2654
        %v2673 = vadd.f32 %v2422, %v2657
        %v2674 = vadd.f32 %v2423, %v2662
        %v2675 = vadd.f32 %v2424, %v2665
        %s2676 = scalar_lea.vmem %s393, 384 [#allocation3]
        %v2677 = vld [vmem:[%s2676] sm:$0xff]
        %v2678 = vld [vmem:[%s2676 + $0x8] sm:$0xff]
        %v2679 = vld [vmem:[%s2676 + $0x10] sm:$0xff]
        %v2680 = vld [vmem:[%s2676 + $0x18] sm:$0xff]
        %v2681 = vld [vmem:[%s2676 + $0x20] sm:$0xff]
        %v2682 = vld [vmem:[%s2676 + $0x28] sm:$0xff]
        %v2683 = vld [vmem:[%s2676 + $0x30] sm:$0xff]
        %v2684 = vld [vmem:[%s2676 + $0x38] sm:$0xff]
        %s2685 = scalar_lea.vmem %s3, 768
        %v2686 = vld [vmem:[%s2685] sm:$0xf]
        %v2687 = vld [vmem:[%s2685 + $0x4] sm:$0xf]
        %v2688 = vld [vmem:[%s2685 + $0x8] sm:$0xf]
        %v2689 = vld [vmem:[%s2685 + $0xc] sm:$0xf]
        %v2690 = vld [vmem:[%s2685 + $0x10] sm:$0xf]
        %v2691 = vld [vmem:[%s2685 + $0x14] sm:$0xf]
        %v2692 = vld [vmem:[%s2685 + $0x18] sm:$0xf]
        %v2693 = vld [vmem:[%s2685 + $0x1c] sm:$0xf]
        %v2694 = vld [vmem:[%s2685 + $0x20] sm:$0xf]
        %v2695 = vld [vmem:[%s2685 + $0x24] sm:$0xf]
        %v2696 = vld [vmem:[%s2685 + $0x28] sm:$0xf]
        %v2697 = vld [vmem:[%s2685 + $0x2c] sm:$0xf]
        %v2698 = vld [vmem:[%s2685 + $0x30] sm:$0xf]
        %v2699 = vld [vmem:[%s2685 + $0x34] sm:$0xf]
        %v2700 = vld [vmem:[%s2685 + $0x38] sm:$0xf]
        %v2701 = vld [vmem:[%s2685 + $0x3c] sm:$0xf]
        %v2702 = vld [vmem:[%s2685 + $0x40] sm:$0xf]
        %v2703 = vld [vmem:[%s2685 + $0x44] sm:$0xf]
        %v2704 = vld [vmem:[%s2685 + $0x48] sm:$0xf]
        %v2705 = vld [vmem:[%s2685 + $0x4c] sm:$0xf]
        %v2706 = vld [vmem:[%s2685 + $0x50] sm:$0xf]
        %v2707 = vld [vmem:[%s2685 + $0x54] sm:$0xf]
        %v2708 = vld [vmem:[%s2685 + $0x58] sm:$0xf]
        %v2709 = vld [vmem:[%s2685 + $0x5c] sm:$0xf]
        %v2710 = vld [vmem:[%s2685 + $0x60] sm:$0xf]
        %v2711 = vld [vmem:[%s2685 + $0x64] sm:$0xf]
        %v2712 = vld [vmem:[%s2685 + $0x68] sm:$0xf]
        %v2713 = vld [vmem:[%s2685 + $0x6c] sm:$0xf]
        %v2714 = vld [vmem:[%s2685 + $0x70] sm:$0xf]
        %v2715 = vld [vmem:[%s2685 + $0x74] sm:$0xf]
        %v2716 = vld [vmem:[%s2685 + $0x78] sm:$0xf]
        %v2717 = vld [vmem:[%s2685 + $0x7c] sm:$0xf]
        %v2726 = vunpack.c.l.b16 %v2677
        %v2727 = vunpack.c.h.b16 %v2677
        %v2728 = vunpack.c.l.b16 %v2678
        %v2729 = vunpack.c.h.b16 %v2678
        %v2730 = vunpack.c.l.b16 %v2679
        %v2731 = vunpack.c.h.b16 %v2679
        %v2732 = vunpack.c.l.b16 %v2680
        %v2733 = vunpack.c.h.b16 %v2680
        %v2734 = vunpack.c.l.b16 %v2681
        %v2735 = vunpack.c.h.b16 %v2681
        %v2736 = vunpack.c.l.b16 %v2682
        %v2737 = vunpack.c.h.b16 %v2682
        %v2738 = vunpack.c.l.b16 %v2683
        %v2739 = vunpack.c.h.b16 %v2683
        %v2740 = vunpack.c.l.b16 %v2684
        %v2741 = vunpack.c.h.b16 %v2684
        %v2742 = vpack.c.b16 %v2728, %v2726
        %v2743 = vpack.c.b16 %v2729, %v2727
        %v2744 = vpack.c.b16 %v2732, %v2730
        %v2745 = vpack.c.b16 %v2733, %v2731
        %v2746 = vpack.c.b16 %v2736, %v2734
        %v2747 = vpack.c.b16 %v2737, %v2735
        %v2748 = vpack.c.b16 %v2740, %v2738
        %v2749 = vpack.c.b16 %v2741, %v2739
        %v2790 = vunpack.c.l.b16 %v2686
        %v2791 = vunpack.c.l.b16 %v2687
        %v2792 = vunpack.c.l.b16 %v2688
        %v2793 = vunpack.c.l.b16 %v2689
        %v2794 = vunpack.c.l.b16 %v2690
        %v2795 = vunpack.c.l.b16 %v2691
        %v2796 = vunpack.c.l.b16 %v2692
        %v2797 = vunpack.c.l.b16 %v2693
        %v2798 = vunpack.c.l.b16 %v2694
        %v2799 = vunpack.c.l.b16 %v2695
        %v2800 = vunpack.c.l.b16 %v2696
        %v2801 = vunpack.c.l.b16 %v2697
        %v2802 = vunpack.c.l.b16 %v2698
        %v2803 = vunpack.c.l.b16 %v2699
        %v2804 = vunpack.c.l.b16 %v2700
        %v2805 = vunpack.c.l.b16 %v2701
        %v2806 = vunpack.c.l.b16 %v2702
        %v2807 = vunpack.c.l.b16 %v2703
        %v2808 = vunpack.c.l.b16 %v2704
        %v2809 = vunpack.c.l.b16 %v2705
        %v2810 = vunpack.c.l.b16 %v2706
        %v2811 = vunpack.c.l.b16 %v2707
        %v2812 = vunpack.c.l.b16 %v2708
        %v2813 = vunpack.c.l.b16 %v2709
        %v2814 = vunpack.c.l.b16 %v2710
        %v2815 = vunpack.c.l.b16 %v2711
        %v2816 = vunpack.c.l.b16 %v2712
        %v2817 = vunpack.c.l.b16 %v2713
        %v2818 = vunpack.c.l.b16 %v2714
        %v2819 = vunpack.c.l.b16 %v2715
        %v2820 = vunpack.c.l.b16 %v2716
        %v2821 = vunpack.c.l.b16 %v2717
        %v2822 = vpack.c.b16 %v2791, %v2790
        %v2823 = vpack.c.b16 %v2793, %v2792
        %v2824 = vpack.c.b16 %v2795, %v2794
        %v2825 = vpack.c.b16 %v2797, %v2796
        %v2826 = vpack.c.b16 %v2799, %v2798
        %v2827 = vpack.c.b16 %v2801, %v2800
        %v2828 = vpack.c.b16 %v2803, %v2802
        %v2829 = vpack.c.b16 %v2805, %v2804
        %v2830 = vpack.c.b16 %v2807, %v2806
        %v2831 = vpack.c.b16 %v2809, %v2808
        %v2832 = vpack.c.b16 %v2811, %v2810
        %v2833 = vpack.c.b16 %v2813, %v2812
        %v2834 = vpack.c.b16 %v2815, %v2814
        %v2835 = vpack.c.b16 %v2817, %v2816
        %v2836 = vpack.c.b16 %v2819, %v2818
        %v2837 = vpack.c.b16 %v2821, %v2820
        %2854 = vmatprep.subr.bf16.mxu0 0
        %2855 = vmatpush1.bf16.msra.mxu0 %v2829
        %2856 = vmatprep.subr.bf16.mxu0 0
        %2857 = vmatpush1.bf16.msra.mxu0 %v2828
        %2858 = vmatprep.subr.bf16.mxu0 0
        %2859 = vmatpush1.bf16.msra.mxu0 %v2827
        %2860 = vmatprep.subr.bf16.mxu0 0
        %2861 = vmatpush1.bf16.msra.mxu0 %v2826
        %2862 = vmatprep.subr.bf16.mxu0 0
        %2863 = vmatpush1.bf16.msra.mxu0 %v2825
        %2864 = vmatprep.subr.bf16.mxu0 0
        %2865 = vmatpush1.bf16.msra.mxu0 %v2824
        %2866 = vmatprep.subr.bf16.mxu0 0
        %2867 = vmatpush1.bf16.msra.mxu0 %v2823
        %2868 = vmatprep.subr.bf16.mxu0 0
        %2869 = vmatpush1.bf16.msra.mxu0 %v2822
        %2870 = vmatprep.subr.bf16.mxu0 0
        %2871 = vmatpush2.bf16.msra.mxu0 %v2837
        %2872 = vmatprep.subr.bf16.mxu0 0
        %2873 = vmatpush2.bf16.msra.mxu0 %v2836
        %2874 = vmatprep.subr.bf16.mxu0 0
        %2875 = vmatpush2.bf16.msra.mxu0 %v2835
        %2876 = vmatprep.subr.bf16.mxu0 0
        %2877 = vmatpush2.bf16.msra.mxu0 %v2834
        %2878 = vmatprep.subr.bf16.mxu0 0
        %2879 = vmatpush2.bf16.msra.mxu0 %v2833
        %2880 = vmatprep.subr.bf16.mxu0 0
        %2881 = vmatpush2.bf16.msra.mxu0 %v2832
        %2882 = vmatprep.subr.bf16.mxu0 0
        %2883 = vmatpush2.bf16.msra.mxu0 %v2831
        %2884 = vmatprep.subr.bf16.mxu0 0
        %2885 = vmatpush2.bf16.msra.mxu0 %v2830
        %2886 = vmatprep.mubr.bf16.mxu0 %v2743
        %2887 = vmatmul.mubr.bf16.gmra.mxu0 %v2742
        %v2888 = vpop.f32.mrf.mxu0
        %v2889 = vadd.f32 0.0, %v2888
        %v2890 = vpop.f32.mrf.mxu0
        %v2891 = vpop.f32.mrf.mxu0
        %v2892 = vadd.f32 0.0, %v2891
        %v2893 = vpop.f32.mrf.mxu0
        %2894 = vmatprep.mubr.bf16.mxu0 %v2745
        %2895 = vmatmul.mubr.bf16.gmra.mxu0 %v2744
        %v2896 = vpop.f32.mrf.mxu0
        %v2897 = vadd.f32 0.0, %v2896
        %v2898 = vpop.f32.mrf.mxu0
        %v2899 = vpop.f32.mrf.mxu0
        %v2900 = vadd.f32 0.0, %v2899
        %v2901 = vpop.f32.mrf.mxu0
        %2902 = vmatprep.mubr.bf16.mxu0 %v2747
        %2903 = vmatmul.mubr.bf16.gmra.mxu0 %v2746
        %v2904 = vpop.f32.mrf.mxu0
        %v2905 = vadd.f32 0.0, %v2904
        %v2906 = vpop.f32.mrf.mxu0
        %v2907 = vpop.f32.mrf.mxu0
        %v2908 = vadd.f32 0.0, %v2907
        %v2909 = vpop.f32.mrf.mxu0
        %2910 = vmatprep.mubr.bf16.mxu0 %v2749
        %2911 = vmatmul.mubr.bf16.gmra.mxu0 %v2748
        %v2912 = vpop.f32.mrf.mxu0
        %v2913 = vadd.f32 0.0, %v2912
        %v2914 = vpop.f32.mrf.mxu0
        %v2915 = vpop.f32.mrf.mxu0
        %v2916 = vadd.f32 0.0, %v2915
        %v2917 = vpop.f32.mrf.mxu0
        %2918 = vdwg.mxu0
        %v2919 = vadd.f32 %v2668, %v2889
        %v2920 = vadd.f32 %v2669, %v2892
        %v2921 = vadd.f32 %v2670, %v2897
        %v2922 = vadd.f32 %v2671, %v2900
        %v2923 = vadd.f32 %v2672, %v2905
        %v2924 = vadd.f32 %v2673, %v2908
        %v2925 = vadd.f32 %v2674, %v2913
        %v2926 = vadd.f32 %v2675, %v2916
        %s2927 = scalar_lea.vmem %s393, 448 [#allocation3]
        %v2928 = vld [vmem:[%s2927] sm:$0xff]
        %v2929 = vld [vmem:[%s2927 + $0x8] sm:$0xff]
        %v2930 = vld [vmem:[%s2927 + $0x10] sm:$0xff]
        %v2931 = vld [vmem:[%s2927 + $0x18] sm:$0xff]
        %v2932 = vld [vmem:[%s2927 + $0x20] sm:$0xff]
        %v2933 = vld [vmem:[%s2927 + $0x28] sm:$0xff]
        %v2934 = vld [vmem:[%s2927 + $0x30] sm:$0xff]
        %v2935 = vld [vmem:[%s2927 + $0x38] sm:$0xff]
        %s2936 = scalar_lea.vmem %s3, 896
        %v2937 = vld [vmem:[%s2936] sm:$0xf]
        %v2938 = vld [vmem:[%s2936 + $0x4] sm:$0xf]
        %v2939 = vld [vmem:[%s2936 + $0x8] sm:$0xf]
        %v2940 = vld [vmem:[%s2936 + $0xc] sm:$0xf]
        %v2941 = vld [vmem:[%s2936 + $0x10] sm:$0xf]
        %v2942 = vld [vmem:[%s2936 + $0x14] sm:$0xf]
        %v2943 = vld [vmem:[%s2936 + $0x18] sm:$0xf]
        %v2944 = vld [vmem:[%s2936 + $0x1c] sm:$0xf]
        %v2945 = vld [vmem:[%s2936 + $0x20] sm:$0xf]
        %v2946 = vld [vmem:[%s2936 + $0x24] sm:$0xf]
        %v2947 = vld [vmem:[%s2936 + $0x28] sm:$0xf]
        %v2948 = vld [vmem:[%s2936 + $0x2c] sm:$0xf]
        %v2949 = vld [vmem:[%s2936 + $0x30] sm:$0xf]
        %v2950 = vld [vmem:[%s2936 + $0x34] sm:$0xf]
        %v2951 = vld [vmem:[%s2936 + $0x38] sm:$0xf]
        %v2952 = vld [vmem:[%s2936 + $0x3c] sm:$0xf]
        %v2953 = vld [vmem:[%s2936 + $0x40] sm:$0xf]
        %v2954 = vld [vmem:[%s2936 + $0x44] sm:$0xf]
        %v2955 = vld [vmem:[%s2936 + $0x48] sm:$0xf]
        %v2956 = vld [vmem:[%s2936 + $0x4c] sm:$0xf]
        %v2957 = vld [vmem:[%s2936 + $0x50] sm:$0xf]
        %v2958 = vld [vmem:[%s2936 + $0x54] sm:$0xf]
        %v2959 = vld [vmem:[%s2936 + $0x58] sm:$0xf]
        %v2960 = vld [vmem:[%s2936 + $0x5c] sm:$0xf]
        %v2961 = vld [vmem:[%s2936 + $0x60] sm:$0xf]
        %v2962 = vld [vmem:[%s2936 + $0x64] sm:$0xf]
        %v2963 = vld [vmem:[%s2936 + $0x68] sm:$0xf]
        %v2964 = vld [vmem:[%s2936 + $0x6c] sm:$0xf]
        %v2965 = vld [vmem:[%s2936 + $0x70] sm:$0xf]
        %v2966 = vld [vmem:[%s2936 + $0x74] sm:$0xf]
        %v2967 = vld [vmem:[%s2936 + $0x78] sm:$0xf]
        %v2968 = vld [vmem:[%s2936 + $0x7c] sm:$0xf]
        %v2977 = vunpack.c.l.b16 %v2928
        %v2978 = vunpack.c.h.b16 %v2928
        %v2979 = vunpack.c.l.b16 %v2929
        %v2980 = vunpack.c.h.b16 %v2929
        %v2981 = vunpack.c.l.b16 %v2930
        %v2982 = vunpack.c.h.b16 %v2930
        %v2983 = vunpack.c.l.b16 %v2931
        %v2984 = vunpack.c.h.b16 %v2931
        %v2985 = vunpack.c.l.b16 %v2932
        %v2986 = vunpack.c.h.b16 %v2932
        %v2987 = vunpack.c.l.b16 %v2933
        %v2988 = vunpack.c.h.b16 %v2933
        %v2989 = vunpack.c.l.b16 %v2934
        %v2990 = vunpack.c.h.b16 %v2934
        %v2991 = vunpack.c.l.b16 %v2935
        %v2992 = vunpack.c.h.b16 %v2935
        %v2993 = vpack.c.b16 %v2979, %v2977
        %v2994 = vpack.c.b16 %v2980, %v2978
        %v2995 = vpack.c.b16 %v2983, %v2981
        %v2996 = vpack.c.b16 %v2984, %v2982
        %v2997 = vpack.c.b16 %v2987, %v2985
        %v2998 = vpack.c.b16 %v2988, %v2986
        %v2999 = vpack.c.b16 %v2991, %v2989
        %v3000 = vpack.c.b16 %v2992, %v2990
        %v3041 = vunpack.c.l.b16 %v2937
        %v3042 = vunpack.c.l.b16 %v2938
        %v3043 = vunpack.c.l.b16 %v2939
        %v3044 = vunpack.c.l.b16 %v2940
        %v3045 = vunpack.c.l.b16 %v2941
        %v3046 = vunpack.c.l.b16 %v2942
        %v3047 = vunpack.c.l.b16 %v2943
        %v3048 = vunpack.c.l.b16 %v2944
        %v3049 = vunpack.c.l.b16 %v2945
        %v3050 = vunpack.c.l.b16 %v2946
        %v3051 = vunpack.c.l.b16 %v2947
        %v3052 = vunpack.c.l.b16 %v2948
        %v3053 = vunpack.c.l.b16 %v2949
        %v3054 = vunpack.c.l.b16 %v2950
        %v3055 = vunpack.c.l.b16 %v2951
        %v3056 = vunpack.c.l.b16 %v2952
        %v3057 = vunpack.c.l.b16 %v2953
        %v3058 = vunpack.c.l.b16 %v2954
        %v3059 = vunpack.c.l.b16 %v2955
        %v3060 = vunpack.c.l.b16 %v2956
        %v3061 = vunpack.c.l.b16 %v2957
        %v3062 = vunpack.c.l.b16 %v2958
        %v3063 = vunpack.c.l.b16 %v2959
        %v3064 = vunpack.c.l.b16 %v2960
        %v3065 = vunpack.c.l.b16 %v2961
        %v3066 = vunpack.c.l.b16 %v2962
        %v3067 = vunpack.c.l.b16 %v2963
        %v3068 = vunpack.c.l.b16 %v2964
        %v3069 = vunpack.c.l.b16 %v2965
        %v3070 = vunpack.c.l.b16 %v2966
        %v3071 = vunpack.c.l.b16 %v2967
        %v3072 = vunpack.c.l.b16 %v2968
        %v3073 = vpack.c.b16 %v3042, %v3041
        %v3074 = vpack.c.b16 %v3044, %v3043
        %v3075 = vpack.c.b16 %v3046, %v3045
        %v3076 = vpack.c.b16 %v3048, %v3047
        %v3077 = vpack.c.b16 %v3050, %v3049
        %v3078 = vpack.c.b16 %v3052, %v3051
        %v3079 = vpack.c.b16 %v3054, %v3053
        %v3080 = vpack.c.b16 %v3056, %v3055
        %v3081 = vpack.c.b16 %v3058, %v3057
        %v3082 = vpack.c.b16 %v3060, %v3059
        %v3083 = vpack.c.b16 %v3062, %v3061
        %v3084 = vpack.c.b16 %v3064, %v3063
        %v3085 = vpack.c.b16 %v3066, %v3065
        %v3086 = vpack.c.b16 %v3068, %v3067
        %v3087 = vpack.c.b16 %v3070, %v3069
        %v3088 = vpack.c.b16 %v3072, %v3071
        %3105 = vmatprep.subr.bf16.mxu0 0
        %3106 = vmatpush1.bf16.msra.mxu0 %v3080
        %3107 = vmatprep.subr.bf16.mxu0 0
        %3108 = vmatpush1.bf16.msra.mxu0 %v3079
        %3109 = vmatprep.subr.bf16.mxu0 0
        %3110 = vmatpush1.bf16.msra.mxu0 %v3078
        %3111 = vmatprep.subr.bf16.mxu0 0
        %3112 = vmatpush1.bf16.msra.mxu0 %v3077
        %3113 = vmatprep.subr.bf16.mxu0 0
        %3114 = vmatpush1.bf16.msra.mxu0 %v3076
        %3115 = vmatprep.subr.bf16.mxu0 0
        %3116 = vmatpush1.bf16.msra.mxu0 %v3075
        %3117 = vmatprep.subr.bf16.mxu0 0
        %3118 = vmatpush1.bf16.msra.mxu0 %v3074
        %3119 = vmatprep.subr.bf16.mxu0 0
        %3120 = vmatpush1.bf16.msra.mxu0 %v3073
        %3121 = vmatprep.subr.bf16.mxu0 0
        %3122 = vmatpush2.bf16.msra.mxu0 %v3088
        %3123 = vmatprep.subr.bf16.mxu0 0
        %3124 = vmatpush2.bf16.msra.mxu0 %v3087
        %3125 = vmatprep.subr.bf16.mxu0 0
        %3126 = vmatpush2.bf16.msra.mxu0 %v3086
        %3127 = vmatprep.subr.bf16.mxu0 0
        %3128 = vmatpush2.bf16.msra.mxu0 %v3085
        %3129 = vmatprep.subr.bf16.mxu0 0
        %3130 = vmatpush2.bf16.msra.mxu0 %v3084
        %3131 = vmatprep.subr.bf16.mxu0 0
        %3132 = vmatpush2.bf16.msra.mxu0 %v3083
        %3133 = vmatprep.subr.bf16.mxu0 0
        %3134 = vmatpush2.bf16.msra.mxu0 %v3082
        %3135 = vmatprep.subr.bf16.mxu0 0
        %3136 = vmatpush2.bf16.msra.mxu0 %v3081
        %3137 = vmatprep.mubr.bf16.mxu0 %v2994
        %3138 = vmatmul.mubr.bf16.gmra.mxu0 %v2993
        %v3139 = vpop.f32.mrf.mxu0
        %v3140 = vadd.f32 0.0, %v3139
        %v3141 = vpop.f32.mrf.mxu0
        %v3142 = vpop.f32.mrf.mxu0
        %v3143 = vadd.f32 0.0, %v3142
        %v3144 = vpop.f32.mrf.mxu0
        %3145 = vmatprep.mubr.bf16.mxu0 %v2996
        %3146 = vmatmul.mubr.bf16.gmra.mxu0 %v2995
        %v3147 = vpop.f32.mrf.mxu0
        %v3148 = vadd.f32 0.0, %v3147
        %v3149 = vpop.f32.mrf.mxu0
        %v3150 = vpop.f32.mrf.mxu0
        %v3151 = vadd.f32 0.0, %v3150
        %v3152 = vpop.f32.mrf.mxu0
        %3153 = vmatprep.mubr.bf16.mxu0 %v2998
        %3154 = vmatmul.mubr.bf16.gmra.mxu0 %v2997
        %v3155 = vpop.f32.mrf.mxu0
        %v3156 = vadd.f32 0.0, %v3155
        %v3157 = vpop.f32.mrf.mxu0
        %v3158 = vpop.f32.mrf.mxu0
        %v3159 = vadd.f32 0.0, %v3158
        %v3160 = vpop.f32.mrf.mxu0
        %3161 = vmatprep.mubr.bf16.mxu0 %v3000
        %3162 = vmatmul.mubr.bf16.gmra.mxu0 %v2999
        %v3163 = vpop.f32.mrf.mxu0
        %v3164 = vadd.f32 0.0, %v3163
        %v3165 = vpop.f32.mrf.mxu0
        %v3166 = vpop.f32.mrf.mxu0
        %v3167 = vadd.f32 0.0, %v3166
        %v3168 = vpop.f32.mrf.mxu0
        %3169 = vdwg.mxu0
        %v3170 = vadd.f32 %v2919, %v3140
        %v3171 = vadd.f32 %v2920, %v3143
        %v3172 = vadd.f32 %v2921, %v3148
        %v3173 = vadd.f32 %v2922, %v3151
        %v3174 = vadd.f32 %v2923, %v3156
        %v3175 = vadd.f32 %v2924, %v3159
        %v3176 = vadd.f32 %v2925, %v3164
        %v3177 = vadd.f32 %v2926, %v3167
        %s3178 = scalar_lea.vmem %s393, 512 [#allocation3]
        %v3179 = vld [vmem:[%s3178] sm:$0xff]
        %v3180 = vld [vmem:[%s3178 + $0x8] sm:$0xff]
        %v3181 = vld [vmem:[%s3178 + $0x10] sm:$0xff]
        %v3182 = vld [vmem:[%s3178 + $0x18] sm:$0xff]
        %v3183 = vld [vmem:[%s3178 + $0x20] sm:$0xff]
        %v3184 = vld [vmem:[%s3178 + $0x28] sm:$0xff]
        %v3185 = vld [vmem:[%s3178 + $0x30] sm:$0xff]
        %v3186 = vld [vmem:[%s3178 + $0x38] sm:$0xff]
        %s3187 = scalar_lea.vmem %s3, 1024
        %v3188 = vld [vmem:[%s3187] sm:$0xf]
        %v3189 = vld [vmem:[%s3187 + $0x4] sm:$0xf]
        %v3190 = vld [vmem:[%s3187 + $0x8] sm:$0xf]
        %v3191 = vld [vmem:[%s3187 + $0xc] sm:$0xf]
        %v3192 = vld [vmem:[%s3187 + $0x10] sm:$0xf]
        %v3193 = vld [vmem:[%s3187 + $0x14] sm:$0xf]
        %v3194 = vld [vmem:[%s3187 + $0x18] sm:$0xf]
        %v3195 = vld [vmem:[%s3187 + $0x1c] sm:$0xf]
        %v3196 = vld [vmem:[%s3187 + $0x20] sm:$0xf]
        %v3197 = vld [vmem:[%s3187 + $0x24] sm:$0xf]
        %v3198 = vld [vmem:[%s3187 + $0x28] sm:$0xf]
        %v3199 = vld [vmem:[%s3187 + $0x2c] sm:$0xf]
        %v3200 = vld [vmem:[%s3187 + $0x30] sm:$0xf]
        %v3201 = vld [vmem:[%s3187 + $0x34] sm:$0xf]
        %v3202 = vld [vmem:[%s3187 + $0x38] sm:$0xf]
        %v3203 = vld [vmem:[%s3187 + $0x3c] sm:$0xf]
        %v3204 = vld [vmem:[%s3187 + $0x40] sm:$0xf]
        %v3205 = vld [vmem:[%s3187 + $0x44] sm:$0xf]
        %v3206 = vld [vmem:[%s3187 + $0x48] sm:$0xf]
        %v3207 = vld [vmem:[%s3187 + $0x4c] sm:$0xf]
        %v3208 = vld [vmem:[%s3187 + $0x50] sm:$0xf]
        %v3209 = vld [vmem:[%s3187 + $0x54] sm:$0xf]
        %v3210 = vld [vmem:[%s3187 + $0x58] sm:$0xf]
        %v3211 = vld [vmem:[%s3187 + $0x5c] sm:$0xf]
        %v3212 = vld [vmem:[%s3187 + $0x60] sm:$0xf]
        %v3213 = vld [vmem:[%s3187 + $0x64] sm:$0xf]
        %v3214 = vld [vmem:[%s3187 + $0x68] sm:$0xf]
        %v3215 = vld [vmem:[%s3187 + $0x6c] sm:$0xf]
        %v3216 = vld [vmem:[%s3187 + $0x70] sm:$0xf]
        %v3217 = vld [vmem:[%s3187 + $0x74] sm:$0xf]
        %v3218 = vld [vmem:[%s3187 + $0x78] sm:$0xf]
        %v3219 = vld [vmem:[%s3187 + $0x7c] sm:$0xf]
        %v3228 = vunpack.c.l.b16 %v3179
        %v3229 = vunpack.c.h.b16 %v3179
        %v3230 = vunpack.c.l.b16 %v3180
        %v3231 = vunpack.c.h.b16 %v3180
        %v3232 = vunpack.c.l.b16 %v3181
        %v3233 = vunpack.c.h.b16 %v3181
        %v3234 = vunpack.c.l.b16 %v3182
        %v3235 = vunpack.c.h.b16 %v3182
        %v3236 = vunpack.c.l.b16 %v3183
        %v3237 = vunpack.c.h.b16 %v3183
        %v3238 = vunpack.c.l.b16 %v3184
        %v3239 = vunpack.c.h.b16 %v3184
        %v3240 = vunpack.c.l.b16 %v3185
        %v3241 = vunpack.c.h.b16 %v3185
        %v3242 = vunpack.c.l.b16 %v3186
        %v3243 = vunpack.c.h.b16 %v3186
        %v3244 = vpack.c.b16 %v3230, %v3228
        %v3245 = vpack.c.b16 %v3231, %v3229
        %v3246 = vpack.c.b16 %v3234, %v3232
        %v3247 = vpack.c.b16 %v3235, %v3233
        %v3248 = vpack.c.b16 %v3238, %v3236
        %v3249 = vpack.c.b16 %v3239, %v3237
        %v3250 = vpack.c.b16 %v3242, %v3240
        %v3251 = vpack.c.b16 %v3243, %v3241
        %v3292 = vunpack.c.l.b16 %v3188
        %v3293 = vunpack.c.l.b16 %v3189
        %v3294 = vunpack.c.l.b16 %v3190
        %v3295 = vunpack.c.l.b16 %v3191
        %v3296 = vunpack.c.l.b16 %v3192
        %v3297 = vunpack.c.l.b16 %v3193
        %v3298 = vunpack.c.l.b16 %v3194
        %v3299 = vunpack.c.l.b16 %v3195
        %v3300 = vunpack.c.l.b16 %v3196
        %v3301 = vunpack.c.l.b16 %v3197
        %v3302 = vunpack.c.l.b16 %v3198
        %v3303 = vunpack.c.l.b16 %v3199
        %v3304 = vunpack.c.l.b16 %v3200
        %v3305 = vunpack.c.l.b16 %v3201
        %v3306 = vunpack.c.l.b16 %v3202
        %v3307 = vunpack.c.l.b16 %v3203
        %v3308 = vunpack.c.l.b16 %v3204
        %v3309 = vunpack.c.l.b16 %v3205
        %v3310 = vunpack.c.l.b16 %v3206
        %v3311 = vunpack.c.l.b16 %v3207
        %v3312 = vunpack.c.l.b16 %v3208
        %v3313 = vunpack.c.l.b16 %v3209
        %v3314 = vunpack.c.l.b16 %v3210
        %v3315 = vunpack.c.l.b16 %v3211
        %v3316 = vunpack.c.l.b16 %v3212
        %v3317 = vunpack.c.l.b16 %v3213
        %v3318 = vunpack.c.l.b16 %v3214
        %v3319 = vunpack.c.l.b16 %v3215
        %v3320 = vunpack.c.l.b16 %v3216
        %v3321 = vunpack.c.l.b16 %v3217
        %v3322 = vunpack.c.l.b16 %v3218
        %v3323 = vunpack.c.l.b16 %v3219
        %v3324 = vpack.c.b16 %v3293, %v3292
        %v3325 = vpack.c.b16 %v3295, %v3294
        %v3326 = vpack.c.b16 %v3297, %v3296
        %v3327 = vpack.c.b16 %v3299, %v3298
        %v3328 = vpack.c.b16 %v3301, %v3300
        %v3329 = vpack.c.b16 %v3303, %v3302
        %v3330 = vpack.c.b16 %v3305, %v3304
        %v3331 = vpack.c.b16 %v3307, %v3306
        %v3332 = vpack.c.b16 %v3309, %v3308
        %v3333 = vpack.c.b16 %v3311, %v3310
        %v3334 = vpack.c.b16 %v3313, %v3312
        %v3335 = vpack.c.b16 %v3315, %v3314
        %v3336 = vpack.c.b16 %v3317, %v3316
        %v3337 = vpack.c.b16 %v3319, %v3318
        %v3338 = vpack.c.b16 %v3321, %v3320
        %v3339 = vpack.c.b16 %v3323, %v3322
        %3356 = vmatprep.subr.bf16.mxu0 0
        %3357 = vmatpush1.bf16.msra.mxu0 %v3331
        %3358 = vmatprep.subr.bf16.mxu0 0
        %3359 = vmatpush1.bf16.msra.mxu0 %v3330
        %3360 = vmatprep.subr.bf16.mxu0 0
        %3361 = vmatpush1.bf16.msra.mxu0 %v3329
        %3362 = vmatprep.subr.bf16.mxu0 0
        %3363 = vmatpush1.bf16.msra.mxu0 %v3328
        %3364 = vmatprep.subr.bf16.mxu0 0
        %3365 = vmatpush1.bf16.msra.mxu0 %v3327
        %3366 = vmatprep.subr.bf16.mxu0 0
        %3367 = vmatpush1.bf16.msra.mxu0 %v3326
        %3368 = vmatprep.subr.bf16.mxu0 0
        %3369 = vmatpush1.bf16.msra.mxu0 %v3325
        %3370 = vmatprep.subr.bf16.mxu0 0
        %3371 = vmatpush1.bf16.msra.mxu0 %v3324
        %3372 = vmatprep.subr.bf16.mxu0 0
        %3373 = vmatpush2.bf16.msra.mxu0 %v3339
        %3374 = vmatprep.subr.bf16.mxu0 0
        %3375 = vmatpush2.bf16.msra.mxu0 %v3338
        %3376 = vmatprep.subr.bf16.mxu0 0
        %3377 = vmatpush2.bf16.msra.mxu0 %v3337
        %3378 = vmatprep.subr.bf16.mxu0 0
        %3379 = vmatpush2.bf16.msra.mxu0 %v3336
        %3380 = vmatprep.subr.bf16.mxu0 0
        %3381 = vmatpush2.bf16.msra.mxu0 %v3335
        %3382 = vmatprep.subr.bf16.mxu0 0
        %3383 = vmatpush2.bf16.msra.mxu0 %v3334
        %3384 = vmatprep.subr.bf16.mxu0 0
        %3385 = vmatpush2.bf16.msra.mxu0 %v3333
        %3386 = vmatprep.subr.bf16.mxu0 0
        %3387 = vmatpush2.bf16.msra.mxu0 %v3332
        %3388 = vmatprep.mubr.bf16.mxu0 %v3245
        %3389 = vmatmul.mubr.bf16.gmra.mxu0 %v3244
        %v3390 = vpop.f32.mrf.mxu0
        %v3391 = vadd.f32 0.0, %v3390
        %v3392 = vpop.f32.mrf.mxu0
        %v3393 = vpop.f32.mrf.mxu0
        %v3394 = vadd.f32 0.0, %v3393
        %v3395 = vpop.f32.mrf.mxu0
        %3396 = vmatprep.mubr.bf16.mxu0 %v3247
        %3397 = vmatmul.mubr.bf16.gmra.mxu0 %v3246
        %v3398 = vpop.f32.mrf.mxu0
        %v3399 = vadd.f32 0.0, %v3398
        %v3400 = vpop.f32.mrf.mxu0
        %v3401 = vpop.f32.mrf.mxu0
        %v3402 = vadd.f32 0.0, %v3401
        %v3403 = vpop.f32.mrf.mxu0
        %3404 = vmatprep.mubr.bf16.mxu0 %v3249
        %3405 = vmatmul.mubr.bf16.gmra.mxu0 %v3248
        %v3406 = vpop.f32.mrf.mxu0
        %v3407 = vadd.f32 0.0, %v3406
        %v3408 = vpop.f32.mrf.mxu0
        %v3409 = vpop.f32.mrf.mxu0
        %v3410 = vadd.f32 0.0, %v3409
        %v3411 = vpop.f32.mrf.mxu0
        %3412 = vmatprep.mubr.bf16.mxu0 %v3251
        %3413 = vmatmul.mubr.bf16.gmra.mxu0 %v3250
        %v3414 = vpop.f32.mrf.mxu0
        %v3415 = vadd.f32 0.0, %v3414
        %v3416 = vpop.f32.mrf.mxu0
        %v3417 = vpop.f32.mrf.mxu0
        %v3418 = vadd.f32 0.0, %v3417
        %v3419 = vpop.f32.mrf.mxu0
        %3420 = vdwg.mxu0
        %v3421 = vadd.f32 %v3170, %v3391
        %v3422 = vadd.f32 %v3171, %v3394
        %v3423 = vadd.f32 %v3172, %v3399
        %v3424 = vadd.f32 %v3173, %v3402
        %v3425 = vadd.f32 %v3174, %v3407
        %v3426 = vadd.f32 %v3175, %v3410
        %v3427 = vadd.f32 %v3176, %v3415
        %v3428 = vadd.f32 %v3177, %v3418
        %v3429 = vld [vmem:[#allocation5] sm:$0x1]
        %v3431 = vlaneseq
        %v3432 = vshrl.u32 %v3431, 7
        %v3433 = vsub.s32 0, %v3432
        %v3434 = vrot.slane %v3429, %v3433
        %v3436 = vadd.f32 %v3421, %v3434
        %v3437 = vadd.f32 %v3422, %v3434
        %v3438 = vadd.f32 %v3423, %v3434
        %v3439 = vadd.f32 %v3424, %v3434
        %v3440 = vadd.f32 %v3425, %v3434
        %v3441 = vadd.f32 %v3426, %v3434
        %v3442 = vadd.f32 %v3427, %v3434
        %v3443 = vadd.f32 %v3428, %v3434
        %vm3444 = vcmask 130048
        %3445 = vst.msk [vmem:[%s434] sm:$0xff] %vm3444, %v3436
        %3446 = vst.msk [vmem:[%s434 + $0x8] sm:$0xff] %vm3444, %v3437
        %3447 = vst.msk [vmem:[%s434 + $0x10] sm:$0xff] %vm3444, %v3438
        %3448 = vst.msk [vmem:[%s434 + $0x18] sm:$0xff] %vm3444, %v3439
        %3449 = vst.msk [vmem:[%s434 + $0x20] sm:$0xff] %vm3444, %v3440
        %3450 = vst.msk [vmem:[%s434 + $0x28] sm:$0xff] %vm3444, %v3441
        %3451 = vst.msk [vmem:[%s434 + $0x30] sm:$0xff] %vm3444, %v3442
        %3452 = vst.msk [vmem:[%s434 + $0x38] sm:$0xff] %vm3444, %v3443
        %s3453 = smul.u32 8, %s20
        %p3454 = scmp.lt.s32.totalorder %s3453, 31
        %s3455 = scalar_select %p3454, %s3453, 31
        %s3456 = smul.addr %s3455, 8
        %s3457 = scalar_lea.vmem %s5, %s3456
        // Predicated region
        $region87: #{tpu_custom_call.1} parent=73 // pred_check
          %p3458 = pneg %p153
        $region88: #{tpu_custom_call.1} parent=73 // pred_check_branch
          %3460 = sbr.rel (%p3458) target = $region90
        $region89: #{tpu_custom_call.1} parent=73 // pred_region
          %s3461 = smul.u32 8, %s20
        $region90: #{tpu_custom_call.1} parent=73 // pred_fallthru
          _
      $region74: #{tpu_custom_call.1} parent=5 // pred_fallthru
        _
      %p3462 = scmp.le.s32.totalorder 2, %s15
      // Predicated region
      $region91: #{tpu_custom_call.1} parent=5 // pred_check
        %p3463 = pneg %p3462
      $region92: #{tpu_custom_call.1} parent=5 // pred_check_branch
        %3465 = sbr.rel (%p3463) target = $region94
      $region93: #{tpu_custom_call.1} parent=5 // pred_region
        %s3466 = ssub.s32 %s15, 2
        // Predicated region
        $region95: #{tpu_custom_call.1} parent=93 // pred_check
          %p3467 = pneg %p159
        $region96: #{tpu_custom_call.1} parent=93 // pred_check_branch
          %3469 = sbr.rel (%p3467) target = $region98
        $region97: #{tpu_custom_call.1} parent=93 // pred_region
          %s3470 = smul.u32 8, %s21
          %p3471 = scmp.lt.s32.totalorder %s3470, 31
          %s3472 = scalar_select %p3471, %s3470, 31
          %s3473 = smul.addr %s3472, 8
          %s3474 = scalar_lea.vmem %s5, %s3473
        $region98: #{tpu_custom_call.1} parent=93 // pred_fallthru
          _
      $region94: #{tpu_custom_call.1} parent=5 // pred_fallthru
        _
    $region6: #{tpu_custom_call.1} parent=1 // loop_footer
      %s19 = sadd.s32 1, %s15
    $region7: #{tpu_custom_call.1} parent=1 // loop_footer_branch
      %14 = sbr.rel target = $region3
    $region8: #{tpu_custom_call.1} parent=1 // loop_exit
      _
    %3475 = vsyncpa [#allocation4], 1
    %s3476 = scalar_lea.sflag [#allocation4], 1
    %3477 = vsyncpa %s3476, 1
    %3478 = vsyncpa [#allocation6], 1

</llo_original>
